<compile_context>
chip_gen: v5e
topology: v5e:2x2
jax: 0.10.0
libtpu: 0.0.40
codegen_flags: <defaults>
</compile_context>

<pallas_src>
import functools

import jax
import jax.numpy as jnp
import numpy as np
from jax import lax
from jax.experimental import pallas as pl
from jax.experimental.pallas import tpu as pltpu

VMEM_SPEC = pl.BlockSpec(memory_space=pltpu.MemorySpace.VMEM)


def _vmem_specs(n):
    return [pl.BlockSpec(memory_space=pltpu.MemorySpace.VMEM) for _ in range(n)]


def _leaky_relu(x, slope=0.01):
    return jnp.where(x >= 0, x, slope * x)


def _softplus_nonneg(x):
    # numerically stable softplus; only ever applied to abs(.) >= 0 here.
    return x + jnp.log(1.0 + jnp.exp(-x))


# ----------------------------------------------------------------------------
# Fused kernel
# ----------------------------------------------------------------------------
def _make_fused_kernel(cfg, T, N):
    num_layers = cfg["num_layers"]
    H = cfg["embedding_dim"]

    def kernel(*refs):
        it = iter(refs)
        nxt = lambda: next(it)[...]

        x = nxt()                                   # (T*N, F) time-major
        wproj = nxt(); bproj = nxt()
        gru = [tuple(nxt() for _ in range(4)) for _ in range(num_layers)]
        y = nxt()                                   # (N, 1)
        wk = nxt(); bk = nxt(); wv = nxt(); bv = nxt()
        qt = nxt(); selA = nxt(); selV = nxt()
        w_pri_mu = nxt(); b_pri_mu = nxt(); w_pri_std = nxt(); b_pri_std = nxt()
        wport = nxt(); bport = nxt()
        w_pos_mu = nxt(); b_pos_mu = nxt(); w_pos_std = nxt(); b_pos_std = nxt()
        wb = nxt(); bb = nxt()
        wa = nxt(); ba = nxt()
        wam = nxt(); bam = nxt()
        was = nxt(); bas = nxt()
        z_out_ref = next(it)                        # (4, Z) output ref
        y_out_ref = next(it)                        # (N, 3) output ref

        dotf = lambda a, b: jnp.dot(a, b, preferred_element_type=jnp.float32)

        # ---- FeatureExtractor: Linear + LeakyReLU + multi-layer GRU ----
        seq = _leaky_relu(dotf(x, wproj) + bproj)               # (T*N, P)
        h = jnp.zeros((N, H), jnp.float32)
        for l in range(num_layers):
            wih, bih, whh, bhh = gru[l]
            # Hoisted input projection for all timesteps at once (MXU-friendly).
            xw = dotf(seq, wih) + bih                           # (T*N, 3H)
            h = jnp.zeros((N, H), jnp.float32)
            last = (l == num_layers - 1)
            outs = []
            for t in range(T):                                  # static unroll (T small)
                xw_t = xw[t * N:(t + 1) * N, :]                 # (N, 3H) static slice
                hw = dotf(h, whh) + bhh                         # one h-matmul per step
                r = jax.nn.sigmoid(xw_t[:, 0:H] + hw[:, 0:H])
                zg = jax.nn.sigmoid(xw_t[:, H:2 * H] + hw[:, H:2 * H])
                n = jnp.tanh(xw_t[:, 2 * H:3 * H] + r * hw[:, 2 * H:3 * H])
                h = (1.0 - zg) * n + zg * h
                if not last:
                    outs.append(h)
            if not last:
                seq = jnp.concatenate(outs, axis=0)             # (T*N, H), stays in VMEM
        e = h                                                   # (N, H) == h_n[-1]

        # ---- Prior encoder (multi-head attention against learned q) ----
        k = dotf(e, wk) + bk                                    # (N, nh*A)
        v = dotf(e, wv) + bv                                    # (N, nh*V)
        q_sum = jnp.sum(qt, axis=0, keepdims=True)              # (1, nh)
        q_norm2 = jnp.sum(qt * qt, axis=0, keepdims=True)       # (1, nh) = ||q||^2
        k_sum = dotf(k, selA)                                   # (N, nh)
        k_norm = jnp.sqrt(dotf(k * k, selA))                    # (N, nh)
        score = (jnp.maximum(k_sum * q_sum, 1e-6)
                 / jnp.maximum(k_norm * q_norm2, 1e-6))         # (N, nh)
        hcat = jnp.sum(dotf(score, selV) * v, axis=0, keepdims=True)   # (1, nh*V)
        mu_prior = dotf(hcat, w_pri_mu) + b_pri_mu
        std_prior = _softplus_nonneg(jnp.abs(dotf(hcat, w_pri_std) + b_pri_std))

        # ---- Posterior encoder (portfolio softmax over stocks, dim 0) ----
        logits = dotf(e, wport) + bport                         # (N, Pc)
        m = jnp.max(logits, axis=0, keepdims=True)
        ex = jnp.exp(logits - m)
        wgt = ex / jnp.sum(ex, axis=0, keepdims=True)
        yp = jnp.sum(wgt * y, axis=0, keepdims=True)            # (1, Pc) = (w.T @ y).T
        mu_post = dotf(yp, w_pos_mu) + b_pos_mu
        std_post = _softplus_nonneg(jnp.abs(dotf(yp, w_pos_std) + b_pos_std))

        # ---- Decoder (e-only pieces computed ONCE, shared by both heads) ----
        beta = dotf(e, wb) + bb                                 # (N, Z)
        hid = _leaky_relu(dotf(e, wa) + ba)                     # (N, Hd)
        mu_alpha = dotf(hid, wam) + bam                         # (N, 1)
        std_alpha = _softplus_nonneg(jnp.abs(dotf(hid, was) + bas))

        y_pred = mu_alpha + jnp.sum(beta * mu_prior, axis=1, keepdims=True)
        mu_y_rec = mu_alpha + jnp.sum(beta * mu_post, axis=1, keepdims=True)
        bs = jnp.sum(beta * std_post, axis=1, keepdims=True)
        std_y_rec = jnp.sqrt(std_alpha * std_alpha + bs * bs)

        # ---- Packed outputs (two full-buffer stores) ----
        Z = mu_post.shape[1]
        row = lax.broadcasted_iota(jnp.int32, (4, Z), 0)
        z_out_ref[...] = jnp.where(row == 0, mu_post,
                          jnp.where(row == 1, std_post,
                           jnp.where(row == 2, mu_prior, std_prior)))
        col = lax.broadcasted_iota(jnp.int32, (N, 3), 1)
        y_out_ref[...] = jnp.where(col == 0, y_pred,
                          jnp.where(col == 1, mu_y_rec, std_y_rec))

    return kernel


# ----------------------------------------------------------------------------
# Forward wrapper (single pallas_call)
# ----------------------------------------------------------------------------
def factor_vae_forward(params, x, y, *, cfg, training=True):
    N, T, F = x.shape
    Z = cfg["z_dim"]

    # time-major flatten (glue): row t*N + n  ==  x[n, t, :]
    x_flat = jnp.transpose(x, (1, 0, 2)).reshape(T * N, F)

    args = [x_flat, params["fe_proj"]["w_t"], params["fe_proj"]["b"]]
    for l in range(cfg["num_layers"]):
        g = params["gru"][l]
        args += [g["wih_t"], g["b_ih"], g["whh_t"], g["b_hh"]]
    args += [y,
             params["prior_k"]["w_t"], params["prior_k"]["b"],
             params["prior_v"]["w_t"], params["prior_v"]["b"],
             params["prior_q_t"], params["selA"], params["selV"],
             params["prior_mu"]["w_t"], params["prior_mu"]["b"],
             params["prior_std"]["w_t"], params["prior_std"]["b"],
             params["post_portfolio"]["w_t"], params["post_portfolio"]["b"],
             params["post_mu"]["w_t"], params["post_mu"]["b"],
             params["post_std"]["w_t"], params["post_std"]["b"],
             params["dec_beta"]["w_t"], params["dec_beta"]["b"],
             params["dec_alpha_proj"]["w_t"], params["dec_alpha_proj"]["b"],
             params["dec_alpha_mu"]["w_t"], params["dec_alpha_mu"]["b"],
             params["dec_alpha_std"]["w_t"], params["dec_alpha_std"]["b"]]

    kernel = _make_fused_kernel(cfg, T, N)
    z_out, y_out = pl.pallas_call(
        kernel,
        out_shape=(jax.ShapeDtypeStruct((4, Z), jnp.float32),
                   jax.ShapeDtypeStruct((N, 3), jnp.float32)),
        in_specs=_vmem_specs(len(args)),
        out_specs=(VMEM_SPEC, VMEM_SPEC),
    )(*args)

    y_pred = y_out[:, 0:1]
    if not training:
        return y_pred
    mu_post, std_post = z_out[0:1], z_out[1:2]
    mu_prior, std_prior = z_out[2:3], z_out[3:4]
    y_rec = (y_out[:, 1:2], y_out[:, 2:3])
    return (mu_post, std_post), (mu_prior, std_prior), y_rec, y_pred


# ----------------------------------------------------------------------------
# Deterministic parameter construction (PyTorch Linear/GRU shapes)
# ----------------------------------------------------------------------------
def _linear_params(key, in_dim, out_dim, scale=0.1):
    kw, kb = jax.random.split(key)
    w = jax.random.normal(kw, (out_dim, in_dim), jnp.float32) * scale   # torch (out, in)
    b = jax.random.normal(kb, (out_dim,), jnp.float32) * scale
    return {"w_t": w.T, "b": b.reshape(1, out_dim)}


def _gru_params(key, in_dim, hid, scale=0.1):
    k1, k2, k3, k4 = jax.random.split(key, 4)
    # torch layout: rows [r; z; n]
    w_ih = jax.random.normal(k1, (3 * hid, in_dim), jnp.float32) * scale
    w_hh = jax.random.normal(k2, (3 * hid, hid), jnp.float32) * scale
    b_ih = jax.random.normal(k3, (3 * hid,), jnp.float32) * scale
    b_hh = jax.random.normal(k4, (3 * hid,), jnp.float32) * scale
    return {"wih_t": w_ih.T, "whh_t": w_hh.T,                 # (in,3H) / (H,3H), cols [r|z|n]
            "b_ih": b_ih.reshape(1, 3 * hid),
            "b_hh": b_hh.reshape(1, 3 * hid)}


def init_factor_vae_params(key, cfg):
    nh, A, V = cfg["nheads"], cfg["attention_dim"], cfg["value_dim"]
    ks = jax.random.split(key, 20)
    p = {}
    p["fe_proj"] = _linear_params(ks[0], cfg["input_dim"], cfg["proj_dim"])
    p["gru"] = []
    for l in range(cfg["num_layers"]):
        in_dim = cfg["proj_dim"] if l == 0 else cfg["embedding_dim"]
        p["gru"].append(_gru_params(ks[1 + l], in_dim, cfg["embedding_dim"]))
    p["post_portfolio"] = _linear_params(ks[6], cfg["embedding_dim"], cfg["portfolio_cnt"])
    p["post_mu"] = _linear_params(ks[7], cfg["portfolio_cnt"], cfg["z_dim"])
    p["post_std"] = _linear_params(ks[8], cfg["portfolio_cnt"], cfg["z_dim"])
    p["prior_k"] = _linear_params(ks[9], cfg["embedding_dim"], A * nh)
    p["prior_v"] = _linear_params(ks[10], cfg["embedding_dim"], V * nh)
    p["prior_q"] = jnp.ones((nh, A), jnp.float32)             # torch init = ones
    p["prior_q_t"] = jnp.ones((A, nh), jnp.float32)
    # head-selection matrices hoisted to init (no per-forward glue / DMA consts)
    p["selA"] = jnp.repeat(jnp.eye(nh, dtype=jnp.float32), A, axis=0)   # (nh*A, nh)
    p["selV"] = jnp.repeat(jnp.eye(nh, dtype=jnp.float32), V, axis=1)   # (nh, nh*V)
    p["prior_mu"] = _linear_params(ks[11], nh * V, cfg["z_dim"])
    p["prior_std"] = _linear_params(ks[12], nh * V, cfg["z_dim"])
    p["dec_alpha_proj"] = _linear_params(ks[13], cfg["embedding_dim"], cfg["hidden_dim"])
    p["dec_alpha_mu"] = _linear_params(ks[14], cfg["hidden_dim"], 1)
    p["dec_alpha_std"] = _linear_params(ks[15], cfg["hidden_dim"], 1)
    p["dec_beta"] = _linear_params(ks[16], cfg["embedding_dim"], cfg["z_dim"])
    return p


# ----------------------------------------------------------------------------
# Pure-JAX reference (mirrors the PyTorch forward) for a sanity check
# ----------------------------------------------------------------------------
def _ref_forward(params, cfg, x, y):
    H = cfg["embedding_dim"]

    def lin(p, v):
        return v @ p["w_t"] + p["b"]

    def leaky(v):
        return jnp.where(v >= 0, v, 0.01 * v)

    def softplus(v):
        return jnp.logaddexp(v, 0.0)

    N, T, _ = x.shape
    seq = leaky(lin(params["fe_proj"], x))                         # (N, T, P)
    h = None
    for l in range(cfg["num_layers"]):
        g = params["gru"][l]
        h = jnp.zeros((N, H), jnp.float32)
        outs = []
        for t in range(T):
            xt = seq[:, t, :]
            xw = xt @ g["wih_t"] + g["b_ih"]
            hw = h @ g["whh_t"] + g["b_hh"]
            r = jax.nn.sigmoid(xw[:, :H] + hw[:, :H])
            zt = jax.nn.sigmoid(xw[:, H:2 * H] + hw[:, H:2 * H])
            n = jnp.tanh(xw[:, 2 * H:] + r * hw[:, 2 * H:])
            h = (1.0 - zt) * n + zt * h
            outs.append(h)
        seq = jnp.stack(outs, axis=1)
    e = h

    nh, A, V = cfg["nheads"], cfg["attention_dim"], cfg["value_dim"]
    k = lin(params["prior_k"], e).reshape(N, nh, A)
    v = lin(params["prior_v"], e).reshape(N, nh, V)
    q = params["prior_q"]
    num = jnp.maximum(jnp.einsum("abc,bd->ab", k, q), 1e-6)
    norm_k = jnp.linalg.norm(k, axis=2) * jnp.linalg.norm(q, axis=1)
    norm_q = jnp.linalg.norm(q, axis=1)
    den = jnp.maximum(norm_k * norm_q, 1e-6)
    score = num / den
    h_att = jnp.einsum("ab,abc->bc", score, v).reshape(1, -1)
    mu_prior = lin(params["prior_mu"], h_att)
    std_prior = softplus(jnp.abs(lin(params["prior_std"], h_att)))

    def decoder(mu_z, std_z):
        beta = lin(params["dec_beta"], e)
        hid = leaky(lin(params["dec_alpha_proj"], e))
        mu_a = lin(params["dec_alpha_mu"], hid)
        std_a = softplus(jnp.abs(lin(params["dec_alpha_std"], hid)))
        mu_y = mu_a + beta @ mu_z.T
        std_y = jnp.sqrt(std_a ** 2 + (beta @ std_z.T) ** 2)
        return mu_y, std_y

    y_pred = decoder(mu_prior, std_prior)[0]
    w = jax.nn.softmax(lin(params["post_portfolio"], e), axis=0)
    yp = (w.T @ y).T
    mu_post = lin(params["post_mu"], yp)
    std_post = softplus(jnp.abs(lin(params["post_std"], yp)))
    y_rec = decoder(mu_post, std_post)
    return (mu_post, std_post), (mu_prior, std_prior), y_rec, y_pred


# ----------------------------------------------------------------------------
if __name__ == "__main__":
    cfg = dict(input_dim=16, proj_dim=16, embedding_dim=32, num_layers=2,
               portfolio_cnt=8, z_dim=4, attention_dim=8, value_dim=8,
               nheads=4, hidden_dim=32)
    N, T = 8, 8

    key = jax.random.PRNGKey(0)
    kp, kx, ky = jax.random.split(key, 3)
    params = init_factor_vae_params(kp, cfg)
    x = jax.random.normal(kx, (N, T, cfg["input_dim"]), jnp.float32)
    y = jax.random.normal(ky, (N, 1), jnp.float32)

    fwd = jax.jit(functools.partial(factor_vae_forward, cfg=cfg, training=True))
    out = jax.block_until_ready(fwd(params, x, y))

    ref = _ref_forward(params, cfg, x, y)
    for a, b in zip(jax.tree_util.tree_leaves(out), jax.tree_util.tree_leaves(ref)):
        np.testing.assert_allclose(np.asarray(a), np.asarray(b), rtol=2e-2, atol=2e-2)

    print("KERNEL_OK")
</pallas_src>

<mosaic_0001>
module attributes {stable_mosaic.version = 11 : i64} {
  func.func @kernel(%arg0: memref<64x16xf32, #tpu.memory_space<vmem>>, %arg1: memref<16x16xf32, #tpu.memory_space<vmem>>, %arg2: memref<1x16xf32, #tpu.memory_space<vmem>>, %arg3: memref<16x96xf32, #tpu.memory_space<vmem>>, %arg4: memref<1x96xf32, #tpu.memory_space<vmem>>, %arg5: memref<32x96xf32, #tpu.memory_space<vmem>>, %arg6: memref<1x96xf32, #tpu.memory_space<vmem>>, %arg7: memref<32x96xf32, #tpu.memory_space<vmem>>, %arg8: memref<1x96xf32, #tpu.memory_space<vmem>>, %arg9: memref<32x96xf32, #tpu.memory_space<vmem>>, %arg10: memref<1x96xf32, #tpu.memory_space<vmem>>, %arg11: memref<8x1xf32, #tpu.memory_space<vmem>>, %arg12: memref<32x32xf32, #tpu.memory_space<vmem>>, %arg13: memref<1x32xf32, #tpu.memory_space<vmem>>, %arg14: memref<32x32xf32, #tpu.memory_space<vmem>>, %arg15: memref<1x32xf32, #tpu.memory_space<vmem>>, %arg16: memref<8x4xf32, #tpu.memory_space<vmem>>, %arg17: memref<32x4xf32, #tpu.memory_space<vmem>>, %arg18: memref<4x32xf32, #tpu.memory_space<vmem>>, %arg19: memref<32x4xf32, #tpu.memory_space<vmem>>, %arg20: memref<1x4xf32, #tpu.memory_space<vmem>>, %arg21: memref<32x4xf32, #tpu.memory_space<vmem>>, %arg22: memref<1x4xf32, #tpu.memory_space<vmem>>, %arg23: memref<32x8xf32, #tpu.memory_space<vmem>>, %arg24: memref<1x8xf32, #tpu.memory_space<vmem>>, %arg25: memref<8x4xf32, #tpu.memory_space<vmem>>, %arg26: memref<1x4xf32, #tpu.memory_space<vmem>>, %arg27: memref<8x4xf32, #tpu.memory_space<vmem>>, %arg28: memref<1x4xf32, #tpu.memory_space<vmem>>, %arg29: memref<32x4xf32, #tpu.memory_space<vmem>>, %arg30: memref<1x4xf32, #tpu.memory_space<vmem>>, %arg31: memref<32x32xf32, #tpu.memory_space<vmem>>, %arg32: memref<1x32xf32, #tpu.memory_space<vmem>>, %arg33: memref<32x1xf32, #tpu.memory_space<vmem>>, %arg34: memref<1x1xf32, #tpu.memory_space<vmem>>, %arg35: memref<32x1xf32, #tpu.memory_space<vmem>>, %arg36: memref<1x1xf32, #tpu.memory_space<vmem>>, %arg37: memref<4x4xf32, #tpu.memory_space<vmem>>, %arg38: memref<8x3xf32, #tpu.memory_space<vmem>>) attributes {dimension_semantics = [], scalar_prefetch = 0 : i64, scratch_operands = 0 : i64, tpu.core_type = #tpu.core_type<tc>} {
    %c0 = arith.constant 0 : index
    %c0_0 = arith.constant 0 : index
    %0 = vector.load %arg0[%c0, %c0_0] : memref<64x16xf32, #tpu.memory_space<vmem>>, vector<64x16xf32>
    %c0_1 = arith.constant 0 : index
    %c0_2 = arith.constant 0 : index
    %1 = vector.load %arg1[%c0_1, %c0_2] : memref<16x16xf32, #tpu.memory_space<vmem>>, vector<16x16xf32>
    %c0_3 = arith.constant 0 : index
    %c0_4 = arith.constant 0 : index
    %2 = vector.load %arg2[%c0_3, %c0_4] : memref<1x16xf32, #tpu.memory_space<vmem>>, vector<1x16xf32>
    %c0_5 = arith.constant 0 : index
    %c0_6 = arith.constant 0 : index
    %3 = vector.load %arg3[%c0_5, %c0_6] : memref<16x96xf32, #tpu.memory_space<vmem>>, vector<16x96xf32>
    %c0_7 = arith.constant 0 : index
    %c0_8 = arith.constant 0 : index
    %4 = vector.load %arg4[%c0_7, %c0_8] : memref<1x96xf32, #tpu.memory_space<vmem>>, vector<1x96xf32>
    %c0_9 = arith.constant 0 : index
    %c0_10 = arith.constant 0 : index
    %5 = vector.load %arg5[%c0_9, %c0_10] : memref<32x96xf32, #tpu.memory_space<vmem>>, vector<32x96xf32>
    %c0_11 = arith.constant 0 : index
    %c0_12 = arith.constant 0 : index
    %6 = vector.load %arg6[%c0_11, %c0_12] : memref<1x96xf32, #tpu.memory_space<vmem>>, vector<1x96xf32>
    %c0_13 = arith.constant 0 : index
    %c0_14 = arith.constant 0 : index
    %7 = vector.load %arg7[%c0_13, %c0_14] : memref<32x96xf32, #tpu.memory_space<vmem>>, vector<32x96xf32>
    %c0_15 = arith.constant 0 : index
    %c0_16 = arith.constant 0 : index
    %8 = vector.load %arg8[%c0_15, %c0_16] : memref<1x96xf32, #tpu.memory_space<vmem>>, vector<1x96xf32>
    %c0_17 = arith.constant 0 : index
    %c0_18 = arith.constant 0 : index
    %9 = vector.load %arg9[%c0_17, %c0_18] : memref<32x96xf32, #tpu.memory_space<vmem>>, vector<32x96xf32>
    %c0_19 = arith.constant 0 : index
    %c0_20 = arith.constant 0 : index
    %10 = vector.load %arg10[%c0_19, %c0_20] : memref<1x96xf32, #tpu.memory_space<vmem>>, vector<1x96xf32>
    %c0_21 = arith.constant 0 : index
    %c0_22 = arith.constant 0 : index
    %11 = vector.load %arg11[%c0_21, %c0_22] : memref<8x1xf32, #tpu.memory_space<vmem>>, vector<8x1xf32>
    %c0_23 = arith.constant 0 : index
    %c0_24 = arith.constant 0 : index
    %12 = vector.load %arg12[%c0_23, %c0_24] : memref<32x32xf32, #tpu.memory_space<vmem>>, vector<32x32xf32>
    %c0_25 = arith.constant 0 : index
    %c0_26 = arith.constant 0 : index
    %13 = vector.load %arg13[%c0_25, %c0_26] : memref<1x32xf32, #tpu.memory_space<vmem>>, vector<1x32xf32>
    %c0_27 = arith.constant 0 : index
    %c0_28 = arith.constant 0 : index
    %14 = vector.load %arg14[%c0_27, %c0_28] : memref<32x32xf32, #tpu.memory_space<vmem>>, vector<32x32xf32>
    %c0_29 = arith.constant 0 : index
    %c0_30 = arith.constant 0 : index
    %15 = vector.load %arg15[%c0_29, %c0_30] : memref<1x32xf32, #tpu.memory_space<vmem>>, vector<1x32xf32>
    %c0_31 = arith.constant 0 : index
    %c0_32 = arith.constant 0 : index
    %16 = vector.load %arg16[%c0_31, %c0_32] : memref<8x4xf32, #tpu.memory_space<vmem>>, vector<8x4xf32>
    %c0_33 = arith.constant 0 : index
    %c0_34 = arith.constant 0 : index
    %17 = vector.load %arg17[%c0_33, %c0_34] : memref<32x4xf32, #tpu.memory_space<vmem>>, vector<32x4xf32>
    %c0_35 = arith.constant 0 : index
    %c0_36 = arith.constant 0 : index
    %18 = vector.load %arg18[%c0_35, %c0_36] : memref<4x32xf32, #tpu.memory_space<vmem>>, vector<4x32xf32>
    %c0_37 = arith.constant 0 : index
    %c0_38 = arith.constant 0 : index
    %19 = vector.load %arg19[%c0_37, %c0_38] : memref<32x4xf32, #tpu.memory_space<vmem>>, vector<32x4xf32>
    %c0_39 = arith.constant 0 : index
    %c0_40 = arith.constant 0 : index
    %20 = vector.load %arg20[%c0_39, %c0_40] : memref<1x4xf32, #tpu.memory_space<vmem>>, vector<1x4xf32>
    %c0_41 = arith.constant 0 : index
    %c0_42 = arith.constant 0 : index
    %21 = vector.load %arg21[%c0_41, %c0_42] : memref<32x4xf32, #tpu.memory_space<vmem>>, vector<32x4xf32>
    %c0_43 = arith.constant 0 : index
    %c0_44 = arith.constant 0 : index
    %22 = vector.load %arg22[%c0_43, %c0_44] : memref<1x4xf32, #tpu.memory_space<vmem>>, vector<1x4xf32>
    %c0_45 = arith.constant 0 : index
    %c0_46 = arith.constant 0 : index
    %23 = vector.load %arg23[%c0_45, %c0_46] : memref<32x8xf32, #tpu.memory_space<vmem>>, vector<32x8xf32>
    %c0_47 = arith.constant 0 : index
    %c0_48 = arith.constant 0 : index
    %24 = vector.load %arg24[%c0_47, %c0_48] : memref<1x8xf32, #tpu.memory_space<vmem>>, vector<1x8xf32>
    %c0_49 = arith.constant 0 : index
    %c0_50 = arith.constant 0 : index
    %25 = vector.load %arg25[%c0_49, %c0_50] : memref<8x4xf32, #tpu.memory_space<vmem>>, vector<8x4xf32>
    %c0_51 = arith.constant 0 : index
    %c0_52 = arith.constant 0 : index
    %26 = vector.load %arg26[%c0_51, %c0_52] : memref<1x4xf32, #tpu.memory_space<vmem>>, vector<1x4xf32>
    %c0_53 = arith.constant 0 : index
    %c0_54 = arith.constant 0 : index
    %27 = vector.load %arg27[%c0_53, %c0_54] : memref<8x4xf32, #tpu.memory_space<vmem>>, vector<8x4xf32>
    %c0_55 = arith.constant 0 : index
    %c0_56 = arith.constant 0 : index
    %28 = vector.load %arg28[%c0_55, %c0_56] : memref<1x4xf32, #tpu.memory_space<vmem>>, vector<1x4xf32>
    %c0_57 = arith.constant 0 : index
    %c0_58 = arith.constant 0 : index
    %29 = vector.load %arg29[%c0_57, %c0_58] : memref<32x4xf32, #tpu.memory_space<vmem>>, vector<32x4xf32>
    %c0_59 = arith.constant 0 : index
    %c0_60 = arith.constant 0 : index
    %30 = vector.load %arg30[%c0_59, %c0_60] : memref<1x4xf32, #tpu.memory_space<vmem>>, vector<1x4xf32>
    %c0_61 = arith.constant 0 : index
    %c0_62 = arith.constant 0 : index
    %31 = vector.load %arg31[%c0_61, %c0_62] : memref<32x32xf32, #tpu.memory_space<vmem>>, vector<32x32xf32>
    %c0_63 = arith.constant 0 : index
    %c0_64 = arith.constant 0 : index
    %32 = vector.load %arg32[%c0_63, %c0_64] : memref<1x32xf32, #tpu.memory_space<vmem>>, vector<1x32xf32>
    %c0_65 = arith.constant 0 : index
    %c0_66 = arith.constant 0 : index
    %33 = vector.load %arg33[%c0_65, %c0_66] : memref<32x1xf32, #tpu.memory_space<vmem>>, vector<32x1xf32>
    %c0_67 = arith.constant 0 : index
    %c0_68 = arith.constant 0 : index
    %34 = vector.load %arg34[%c0_67, %c0_68] : memref<1x1xf32, #tpu.memory_space<vmem>>, vector<1x1xf32>
    %c0_69 = arith.constant 0 : index
    %c0_70 = arith.constant 0 : index
    %35 = vector.load %arg35[%c0_69, %c0_70] : memref<32x1xf32, #tpu.memory_space<vmem>>, vector<32x1xf32>
    %c0_71 = arith.constant 0 : index
    %c0_72 = arith.constant 0 : index
    %36 = vector.load %arg36[%c0_71, %c0_72] : memref<1x1xf32, #tpu.memory_space<vmem>>, vector<1x1xf32>
    %cst = arith.constant dense<0.000000e+00> : vector<64x16xf32>
    %37 = tpu.matmul %0, %1, %cst {dimension_numbers = #tpu.dot_dimension_numbers<[1], [0], [0], [1], [0, 0, 1, 1], [], []>} : vector<64x16xf32>, vector<16x16xf32>, vector<64x16xf32> -> vector<64x16xf32>
    %38 = vector.broadcast %2 : vector<1x16xf32> to vector<64x16xf32>
    %39 = arith.addf %37, %38 : vector<64x16xf32>
    %cst_73 = arith.constant 0.000000e+00 : f32
    %40 = vector.broadcast %cst_73 : f32 to vector<64x16xf32>
    %41 = arith.cmpf oge, %39, %40 : vector<64x16xf32>
    %cst_74 = arith.constant 0.00999999977 : f32
    %42 = vector.broadcast %cst_74 : f32 to vector<64x16xf32>
    %43 = arith.mulf %42, %39 : vector<64x16xf32>
    %44 = arith.select %41, %39, %43 : vector<64x16xi1>, vector<64x16xf32>
    %cst_75 = arith.constant dense<0.000000e+00> : vector<64x96xf32>
    %45 = tpu.matmul %44, %3, %cst_75 {dimension_numbers = #tpu.dot_dimension_numbers<[1], [0], [0], [1], [0, 0, 1, 1], [], []>} : vector<64x16xf32>, vector<16x96xf32>, vector<64x96xf32> -> vector<64x96xf32>
    %46 = vector.broadcast %4 : vector<1x96xf32> to vector<64x96xf32>
    %47 = arith.addf %45, %46 : vector<64x96xf32>
    %cst_76 = arith.constant 0.000000e+00 : f32
    %48 = vector.broadcast %cst_76 : f32 to vector<8x32xf32>
    %49 = vector.extract_strided_slice %47 {offsets = [0, 0], sizes = [8, 96], strides = [1, 1]} : vector<64x96xf32> to vector<8x96xf32>
    %cst_77 = arith.constant dense<0.000000e+00> : vector<8x96xf32>
    %50 = tpu.matmul %48, %5, %cst_77 {dimension_numbers = #tpu.dot_dimension_numbers<[1], [0], [0], [1], [0, 0, 1, 1], [], []>} : vector<8x32xf32>, vector<32x96xf32>, vector<8x96xf32> -> vector<8x96xf32>
    %51 = vector.broadcast %6 : vector<1x96xf32> to vector<8x96xf32>
    %52 = arith.addf %50, %51 : vector<8x96xf32>
    %53 = vector.extract_strided_slice %49 {offsets = [0, 0], sizes = [8, 32], strides = [1, 1]} : vector<8x96xf32> to vector<8x32xf32>
    %54 = vector.extract_strided_slice %52 {offsets = [0, 0], sizes = [8, 32], strides = [1, 1]} : vector<8x96xf32> to vector<8x32xf32>
    %55 = arith.addf %53, %54 : vector<8x32xf32>
    %56 = arith.negf %55 : vector<8x32xf32>
    %57 = math.exp %56 : vector<8x32xf32>
    %cst_78 = arith.constant 1.000000e+00 : f32
    %58 = vector.broadcast %cst_78 : f32 to vector<8x32xf32>
    %59 = arith.addf %58, %57 : vector<8x32xf32>
    %60 = arith.divf %58, %59 : vector<8x32xf32>
    %61 = vector.extract_strided_slice %49 {offsets = [0, 32], sizes = [8, 32], strides = [1, 1]} : vector<8x96xf32> to vector<8x32xf32>
    %62 = vector.extract_strided_slice %52 {offsets = [0, 32], sizes = [8, 32], strides = [1, 1]} : vector<8x96xf32> to vector<8x32xf32>
    %63 = arith.addf %61, %62 : vector<8x32xf32>
    %64 = arith.negf %63 : vector<8x32xf32>
    %65 = math.exp %64 : vector<8x32xf32>
    %cst_79 = arith.constant 1.000000e+00 : f32
    %66 = vector.broadcast %cst_79 : f32 to vector<8x32xf32>
    %67 = arith.addf %66, %65 : vector<8x32xf32>
    %68 = arith.divf %66, %67 : vector<8x32xf32>
    %69 = vector.extract_strided_slice %49 {offsets = [0, 64], sizes = [8, 32], strides = [1, 1]} : vector<8x96xf32> to vector<8x32xf32>
    %70 = vector.extract_strided_slice %52 {offsets = [0, 64], sizes = [8, 32], strides = [1, 1]} : vector<8x96xf32> to vector<8x32xf32>
    %71 = arith.mulf %60, %70 : vector<8x32xf32>
    %72 = arith.addf %69, %71 : vector<8x32xf32>
    %73 = math.tanh %72 : vector<8x32xf32>
    %cst_80 = arith.constant 1.000000e+00 : f32
    %74 = vector.broadcast %cst_80 : f32 to vector<8x32xf32>
    %75 = arith.subf %74, %68 : vector<8x32xf32>
    %76 = arith.mulf %75, %73 : vector<8x32xf32>
    %77 = arith.mulf %68, %48 : vector<8x32xf32>
    %78 = arith.addf %76, %77 : vector<8x32xf32>
    %79 = vector.extract_strided_slice %47 {offsets = [8, 0], sizes = [8, 96], strides = [1, 1]} : vector<64x96xf32> to vector<8x96xf32>
    %cst_81 = arith.constant dense<0.000000e+00> : vector<8x96xf32>
    %80 = tpu.matmul %78, %5, %cst_81 {dimension_numbers = #tpu.dot_dimension_numbers<[1], [0], [0], [1], [0, 0, 1, 1], [], []>} : vector<8x32xf32>, vector<32x96xf32>, vector<8x96xf32> -> vector<8x96xf32>
    %81 = vector.broadcast %6 : vector<1x96xf32> to vector<8x96xf32>
    %82 = arith.addf %80, %81 : vector<8x96xf32>
    %83 = vector.extract_strided_slice %79 {offsets = [0, 0], sizes = [8, 32], strides = [1, 1]} : vector<8x96xf32> to vector<8x32xf32>
    %84 = vector.extract_strided_slice %82 {offsets = [0, 0], sizes = [8, 32], strides = [1, 1]} : vector<8x96xf32> to vector<8x32xf32>
    %85 = arith.addf %83, %84 : vector<8x32xf32>
    %86 = arith.negf %85 : vector<8x32xf32>
    %87 = math.exp %86 : vector<8x32xf32>
    %cst_82 = arith.constant 1.000000e+00 : f32
    %88 = vector.broadcast %cst_82 : f32 to vector<8x32xf32>
    %89 = arith.addf %88, %87 : vector<8x32xf32>
    %90 = arith.divf %88, %89 : vector<8x32xf32>
    %91 = vector.extract_strided_slice %79 {offsets = [0, 32], sizes = [8, 32], strides = [1, 1]} : vector<8x96xf32> to vector<8x32xf32>
    %92 = vector.extract_strided_slice %82 {offsets = [0, 32], sizes = [8, 32], strides = [1, 1]} : vector<8x96xf32> to vector<8x32xf32>
    %93 = arith.addf %91, %92 : vector<8x32xf32>
    %94 = arith.negf %93 : vector<8x32xf32>
    %95 = math.exp %94 : vector<8x32xf32>
    %cst_83 = arith.constant 1.000000e+00 : f32
    %96 = vector.broadcast %cst_83 : f32 to vector<8x32xf32>
    %97 = arith.addf %96, %95 : vector<8x32xf32>
    %98 = arith.divf %96, %97 : vector<8x32xf32>
    %99 = vector.extract_strided_slice %79 {offsets = [0, 64], sizes = [8, 32], strides = [1, 1]} : vector<8x96xf32> to vector<8x32xf32>
    %100 = vector.extract_strided_slice %82 {offsets = [0, 64], sizes = [8, 32], strides = [1, 1]} : vector<8x96xf32> to vector<8x32xf32>
    %101 = arith.mulf %90, %100 : vector<8x32xf32>
    %102 = arith.addf %99, %101 : vector<8x32xf32>
    %103 = math.tanh %102 : vector<8x32xf32>
    %cst_84 = arith.constant 1.000000e+00 : f32
    %104 = vector.broadcast %cst_84 : f32 to vector<8x32xf32>
    %105 = arith.subf %104, %98 : vector<8x32xf32>
    %106 = arith.mulf %105, %103 : vector<8x32xf32>
    %107 = arith.mulf %98, %78 : vector<8x32xf32>
    %108 = arith.addf %106, %107 : vector<8x32xf32>
    %109 = vector.extract_strided_slice %47 {offsets = [16, 0], sizes = [8, 96], strides = [1, 1]} : vector<64x96xf32> to vector<8x96xf32>
    %cst_85 = arith.constant dense<0.000000e+00> : vector<8x96xf32>
    %110 = tpu.matmul %108, %5, %cst_85 {dimension_numbers = #tpu.dot_dimension_numbers<[1], [0], [0], [1], [0, 0, 1, 1], [], []>} : vector<8x32xf32>, vector<32x96xf32>, vector<8x96xf32> -> vector<8x96xf32>
    %111 = vector.broadcast %6 : vector<1x96xf32> to vector<8x96xf32>
    %112 = arith.addf %110, %111 : vector<8x96xf32>
    %113 = vector.extract_strided_slice %109 {offsets = [0, 0], sizes = [8, 32], strides = [1, 1]} : vector<8x96xf32> to vector<8x32xf32>
    %114 = vector.extract_strided_slice %112 {offsets = [0, 0], sizes = [8, 32], strides = [1, 1]} : vector<8x96xf32> to vector<8x32xf32>
    %115 = arith.addf %113, %114 : vector<8x32xf32>
    %116 = arith.negf %115 : vector<8x32xf32>
    %117 = math.exp %116 : vector<8x32xf32>
    %cst_86 = arith.constant 1.000000e+00 : f32
    %118 = vector.broadcast %cst_86 : f32 to vector<8x32xf32>
    %119 = arith.addf %118, %117 : vector<8x32xf32>
    %120 = arith.divf %118, %119 : vector<8x32xf32>
    %121 = vector.extract_strided_slice %109 {offsets = [0, 32], sizes = [8, 32], strides = [1, 1]} : vector<8x96xf32> to vector<8x32xf32>
    %122 = vector.extract_strided_slice %112 {offsets = [0, 32], sizes = [8, 32], strides = [1, 1]} : vector<8x96xf32> to vector<8x32xf32>
    %123 = arith.addf %121, %122 : vector<8x32xf32>
    %124 = arith.negf %123 : vector<8x32xf32>
    %125 = math.exp %124 : vector<8x32xf32>
    %cst_87 = arith.constant 1.000000e+00 : f32
    %126 = vector.broadcast %cst_87 : f32 to vector<8x32xf32>
    %127 = arith.addf %126, %125 : vector<8x32xf32>
    %128 = arith.divf %126, %127 : vector<8x32xf32>
    %129 = vector.extract_strided_slice %109 {offsets = [0, 64], sizes = [8, 32], strides = [1, 1]} : vector<8x96xf32> to vector<8x32xf32>
    %130 = vector.extract_strided_slice %112 {offsets = [0, 64], sizes = [8, 32], strides = [1, 1]} : vector<8x96xf32> to vector<8x32xf32>
    %131 = arith.mulf %120, %130 : vector<8x32xf32>
    %132 = arith.addf %129, %131 : vector<8x32xf32>
    %133 = math.tanh %132 : vector<8x32xf32>
    %cst_88 = arith.constant 1.000000e+00 : f32
    %134 = vector.broadcast %cst_88 : f32 to vector<8x32xf32>
    %135 = arith.subf %134, %128 : vector<8x32xf32>
    %136 = arith.mulf %135, %133 : vector<8x32xf32>
    %137 = arith.mulf %128, %108 : vector<8x32xf32>
    %138 = arith.addf %136, %137 : vector<8x32xf32>
    %139 = vector.extract_strided_slice %47 {offsets = [24, 0], sizes = [8, 96], strides = [1, 1]} : vector<64x96xf32> to vector<8x96xf32>
    %cst_89 = arith.constant dense<0.000000e+00> : vector<8x96xf32>
    %140 = tpu.matmul %138, %5, %cst_89 {dimension_numbers = #tpu.dot_dimension_numbers<[1], [0], [0], [1], [0, 0, 1, 1], [], []>} : vector<8x32xf32>, vector<32x96xf32>, vector<8x96xf32> -> vector<8x96xf32>
    %141 = vector.broadcast %6 : vector<1x96xf32> to vector<8x96xf32>
    %142 = arith.addf %140, %141 : vector<8x96xf32>
    %143 = vector.extract_strided_slice %139 {offsets = [0, 0], sizes = [8, 32], strides = [1, 1]} : vector<8x96xf32> to vector<8x32xf32>
    %144 = vector.extract_strided_slice %142 {offsets = [0, 0], sizes = [8, 32], strides = [1, 1]} : vector<8x96xf32> to vector<8x32xf32>
    %145 = arith.addf %143, %144 : vector<8x32xf32>
    %146 = arith.negf %145 : vector<8x32xf32>
    %147 = math.exp %146 : vector<8x32xf32>
    %cst_90 = arith.constant 1.000000e+00 : f32
    %148 = vector.broadcast %cst_90 : f32 to vector<8x32xf32>
    %149 = arith.addf %148, %147 : vector<8x32xf32>
    %150 = arith.divf %148, %149 : vector<8x32xf32>
    %151 = vector.extract_strided_slice %139 {offsets = [0, 32], sizes = [8, 32], strides = [1, 1]} : vector<8x96xf32> to vector<8x32xf32>
    %152 = vector.extract_strided_slice %142 {offsets = [0, 32], sizes = [8, 32], strides = [1, 1]} : vector<8x96xf32> to vector<8x32xf32>
    %153 = arith.addf %151, %152 : vector<8x32xf32>
    %154 = arith.negf %153 : vector<8x32xf32>
    %155 = math.exp %154 : vector<8x32xf32>
    %cst_91 = arith.constant 1.000000e+00 : f32
    %156 = vector.broadcast %cst_91 : f32 to vector<8x32xf32>
    %157 = arith.addf %156, %155 : vector<8x32xf32>
    %158 = arith.divf %156, %157 : vector<8x32xf32>
    %159 = vector.extract_strided_slice %139 {offsets = [0, 64], sizes = [8, 32], strides = [1, 1]} : vector<8x96xf32> to vector<8x32xf32>
    %160 = vector.extract_strided_slice %142 {offsets = [0, 64], sizes = [8, 32], strides = [1, 1]} : vector<8x96xf32> to vector<8x32xf32>
    %161 = arith.mulf %150, %160 : vector<8x32xf32>
    %162 = arith.addf %159, %161 : vector<8x32xf32>
    %163 = math.tanh %162 : vector<8x32xf32>
    %cst_92 = arith.constant 1.000000e+00 : f32
    %164 = vector.broadcast %cst_92 : f32 to vector<8x32xf32>
    %165 = arith.subf %164, %158 : vector<8x32xf32>
    %166 = arith.mulf %165, %163 : vector<8x32xf32>
    %167 = arith.mulf %158, %138 : vector<8x32xf32>
    %168 = arith.addf %166, %167 : vector<8x32xf32>
    %169 = vector.extract_strided_slice %47 {offsets = [32, 0], sizes = [8, 96], strides = [1, 1]} : vector<64x96xf32> to vector<8x96xf32>
    %cst_93 = arith.constant dense<0.000000e+00> : vector<8x96xf32>
    %170 = tpu.matmul %168, %5, %cst_93 {dimension_numbers = #tpu.dot_dimension_numbers<[1], [0], [0], [1], [0, 0, 1, 1], [], []>} : vector<8x32xf32>, vector<32x96xf32>, vector<8x96xf32> -> vector<8x96xf32>
    %171 = vector.broadcast %6 : vector<1x96xf32> to vector<8x96xf32>
    %172 = arith.addf %170, %171 : vector<8x96xf32>
    %173 = vector.extract_strided_slice %169 {offsets = [0, 0], sizes = [8, 32], strides = [1, 1]} : vector<8x96xf32> to vector<8x32xf32>
    %174 = vector.extract_strided_slice %172 {offsets = [0, 0], sizes = [8, 32], strides = [1, 1]} : vector<8x96xf32> to vector<8x32xf32>
    %175 = arith.addf %173, %174 : vector<8x32xf32>
    %176 = arith.negf %175 : vector<8x32xf32>
    %177 = math.exp %176 : vector<8x32xf32>
    %cst_94 = arith.constant 1.000000e+00 : f32
    %178 = vector.broadcast %cst_94 : f32 to vector<8x32xf32>
    %179 = arith.addf %178, %177 : vector<8x32xf32>
    %180 = arith.divf %178, %179 : vector<8x32xf32>
    %181 = vector.extract_strided_slice %169 {offsets = [0, 32], sizes = [8, 32], strides = [1, 1]} : vector<8x96xf32> to vector<8x32xf32>
    %182 = vector.extract_strided_slice %172 {offsets = [0, 32], sizes = [8, 32], strides = [1, 1]} : vector<8x96xf32> to vector<8x32xf32>
    %183 = arith.addf %181, %182 : vector<8x32xf32>
    %184 = arith.negf %183 : vector<8x32xf32>
    %185 = math.exp %184 : vector<8x32xf32>
    %cst_95 = arith.constant 1.000000e+00 : f32
    %186 = vector.broadcast %cst_95 : f32 to vector<8x32xf32>
    %187 = arith.addf %186, %185 : vector<8x32xf32>
    %188 = arith.divf %186, %187 : vector<8x32xf32>
    %189 = vector.extract_strided_slice %169 {offsets = [0, 64], sizes = [8, 32], strides = [1, 1]} : vector<8x96xf32> to vector<8x32xf32>
    %190 = vector.extract_strided_slice %172 {offsets = [0, 64], sizes = [8, 32], strides = [1, 1]} : vector<8x96xf32> to vector<8x32xf32>
    %191 = arith.mulf %180, %190 : vector<8x32xf32>
    %192 = arith.addf %189, %191 : vector<8x32xf32>
    %193 = math.tanh %192 : vector<8x32xf32>
    %cst_96 = arith.constant 1.000000e+00 : f32
    %194 = vector.broadcast %cst_96 : f32 to vector<8x32xf32>
    %195 = arith.subf %194, %188 : vector<8x32xf32>
    %196 = arith.mulf %195, %193 : vector<8x32xf32>
    %197 = arith.mulf %188, %168 : vector<8x32xf32>
    %198 = arith.addf %196, %197 : vector<8x32xf32>
    %199 = vector.extract_strided_slice %47 {offsets = [40, 0], sizes = [8, 96], strides = [1, 1]} : vector<64x96xf32> to vector<8x96xf32>
    %cst_97 = arith.constant dense<0.000000e+00> : vector<8x96xf32>
    %200 = tpu.matmul %198, %5, %cst_97 {dimension_numbers = #tpu.dot_dimension_numbers<[1], [0], [0], [1], [0, 0, 1, 1], [], []>} : vector<8x32xf32>, vector<32x96xf32>, vector<8x96xf32> -> vector<8x96xf32>
    %201 = vector.broadcast %6 : vector<1x96xf32> to vector<8x96xf32>
    %202 = arith.addf %200, %201 : vector<8x96xf32>
    %203 = vector.extract_strided_slice %199 {offsets = [0, 0], sizes = [8, 32], strides = [1, 1]} : vector<8x96xf32> to vector<8x32xf32>
    %204 = vector.extract_strided_slice %202 {offsets = [0, 0], sizes = [8, 32], strides = [1, 1]} : vector<8x96xf32> to vector<8x32xf32>
    %205 = arith.addf %203, %204 : vector<8x32xf32>
    %206 = arith.negf %205 : vector<8x32xf32>
    %207 = math.exp %206 : vector<8x32xf32>
    %cst_98 = arith.constant 1.000000e+00 : f32
    %208 = vector.broadcast %cst_98 : f32 to vector<8x32xf32>
    %209 = arith.addf %208, %207 : vector<8x32xf32>
    %210 = arith.divf %208, %209 : vector<8x32xf32>
    %211 = vector.extract_strided_slice %199 {offsets = [0, 32], sizes = [8, 32], strides = [1, 1]} : vector<8x96xf32> to vector<8x32xf32>
    %212 = vector.extract_strided_slice %202 {offsets = [0, 32], sizes = [8, 32], strides = [1, 1]} : vector<8x96xf32> to vector<8x32xf32>
    %213 = arith.addf %211, %212 : vector<8x32xf32>
    %214 = arith.negf %213 : vector<8x32xf32>
    %215 = math.exp %214 : vector<8x32xf32>
    %cst_99 = arith.constant 1.000000e+00 : f32
    %216 = vector.broadcast %cst_99 : f32 to vector<8x32xf32>
    %217 = arith.addf %216, %215 : vector<8x32xf32>
    %218 = arith.divf %216, %217 : vector<8x32xf32>
    %219 = vector.extract_strided_slice %199 {offsets = [0, 64], sizes = [8, 32], strides = [1, 1]} : vector<8x96xf32> to vector<8x32xf32>
    %220 = vector.extract_strided_slice %202 {offsets = [0, 64], sizes = [8, 32], strides = [1, 1]} : vector<8x96xf32> to vector<8x32xf32>
    %221 = arith.mulf %210, %220 : vector<8x32xf32>
    %222 = arith.addf %219, %221 : vector<8x32xf32>
    %223 = math.tanh %222 : vector<8x32xf32>
    %cst_100 = arith.constant 1.000000e+00 : f32
    %224 = vector.broadcast %cst_100 : f32 to vector<8x32xf32>
    %225 = arith.subf %224, %218 : vector<8x32xf32>
    %226 = arith.mulf %225, %223 : vector<8x32xf32>
    %227 = arith.mulf %218, %198 : vector<8x32xf32>
    %228 = arith.addf %226, %227 : vector<8x32xf32>
    %229 = vector.extract_strided_slice %47 {offsets = [48, 0], sizes = [8, 96], strides = [1, 1]} : vector<64x96xf32> to vector<8x96xf32>
    %cst_101 = arith.constant dense<0.000000e+00> : vector<8x96xf32>
    %230 = tpu.matmul %228, %5, %cst_101 {dimension_numbers = #tpu.dot_dimension_numbers<[1], [0], [0], [1], [0, 0, 1, 1], [], []>} : vector<8x32xf32>, vector<32x96xf32>, vector<8x96xf32> -> vector<8x96xf32>
    %231 = vector.broadcast %6 : vector<1x96xf32> to vector<8x96xf32>
    %232 = arith.addf %230, %231 : vector<8x96xf32>
    %233 = vector.extract_strided_slice %229 {offsets = [0, 0], sizes = [8, 32], strides = [1, 1]} : vector<8x96xf32> to vector<8x32xf32>
    %234 = vector.extract_strided_slice %232 {offsets = [0, 0], sizes = [8, 32], strides = [1, 1]} : vector<8x96xf32> to vector<8x32xf32>
    %235 = arith.addf %233, %234 : vector<8x32xf32>
    %236 = arith.negf %235 : vector<8x32xf32>
    %237 = math.exp %236 : vector<8x32xf32>
    %cst_102 = arith.constant 1.000000e+00 : f32
    %238 = vector.broadcast %cst_102 : f32 to vector<8x32xf32>
    %239 = arith.addf %238, %237 : vector<8x32xf32>
    %240 = arith.divf %238, %239 : vector<8x32xf32>
    %241 = vector.extract_strided_slice %229 {offsets = [0, 32], sizes = [8, 32], strides = [1, 1]} : vector<8x96xf32> to vector<8x32xf32>
    %242 = vector.extract_strided_slice %232 {offsets = [0, 32], sizes = [8, 32], strides = [1, 1]} : vector<8x96xf32> to vector<8x32xf32>
    %243 = arith.addf %241, %242 : vector<8x32xf32>
    %244 = arith.negf %243 : vector<8x32xf32>
    %245 = math.exp %244 : vector<8x32xf32>
    %cst_103 = arith.constant 1.000000e+00 : f32
    %246 = vector.broadcast %cst_103 : f32 to vector<8x32xf32>
    %247 = arith.addf %246, %245 : vector<8x32xf32>
    %248 = arith.divf %246, %247 : vector<8x32xf32>
    %249 = vector.extract_strided_slice %229 {offsets = [0, 64], sizes = [8, 32], strides = [1, 1]} : vector<8x96xf32> to vector<8x32xf32>
    %250 = vector.extract_strided_slice %232 {offsets = [0, 64], sizes = [8, 32], strides = [1, 1]} : vector<8x96xf32> to vector<8x32xf32>
    %251 = arith.mulf %240, %250 : vector<8x32xf32>
    %252 = arith.addf %249, %251 : vector<8x32xf32>
    %253 = math.tanh %252 : vector<8x32xf32>
    %cst_104 = arith.constant 1.000000e+00 : f32
    %254 = vector.broadcast %cst_104 : f32 to vector<8x32xf32>
    %255 = arith.subf %254, %248 : vector<8x32xf32>
    %256 = arith.mulf %255, %253 : vector<8x32xf32>
    %257 = arith.mulf %248, %228 : vector<8x32xf32>
    %258 = arith.addf %256, %257 : vector<8x32xf32>
    %259 = vector.extract_strided_slice %47 {offsets = [56, 0], sizes = [8, 96], strides = [1, 1]} : vector<64x96xf32> to vector<8x96xf32>
    %cst_105 = arith.constant dense<0.000000e+00> : vector<8x96xf32>
    %260 = tpu.matmul %258, %5, %cst_105 {dimension_numbers = #tpu.dot_dimension_numbers<[1], [0], [0], [1], [0, 0, 1, 1], [], []>} : vector<8x32xf32>, vector<32x96xf32>, vector<8x96xf32> -> vector<8x96xf32>
    %261 = vector.broadcast %6 : vector<1x96xf32> to vector<8x96xf32>
    %262 = arith.addf %260, %261 : vector<8x96xf32>
    %263 = vector.extract_strided_slice %259 {offsets = [0, 0], sizes = [8, 32], strides = [1, 1]} : vector<8x96xf32> to vector<8x32xf32>
    %264 = vector.extract_strided_slice %262 {offsets = [0, 0], sizes = [8, 32], strides = [1, 1]} : vector<8x96xf32> to vector<8x32xf32>
    %265 = arith.addf %263, %264 : vector<8x32xf32>
    %266 = arith.negf %265 : vector<8x32xf32>
    %267 = math.exp %266 : vector<8x32xf32>
    %cst_106 = arith.constant 1.000000e+00 : f32
    %268 = vector.broadcast %cst_106 : f32 to vector<8x32xf32>
    %269 = arith.addf %268, %267 : vector<8x32xf32>
    %270 = arith.divf %268, %269 : vector<8x32xf32>
    %271 = vector.extract_strided_slice %259 {offsets = [0, 32], sizes = [8, 32], strides = [1, 1]} : vector<8x96xf32> to vector<8x32xf32>
    %272 = vector.extract_strided_slice %262 {offsets = [0, 32], sizes = [8, 32], strides = [1, 1]} : vector<8x96xf32> to vector<8x32xf32>
    %273 = arith.addf %271, %272 : vector<8x32xf32>
    %274 = arith.negf %273 : vector<8x32xf32>
    %275 = math.exp %274 : vector<8x32xf32>
    %cst_107 = arith.constant 1.000000e+00 : f32
    %276 = vector.broadcast %cst_107 : f32 to vector<8x32xf32>
    %277 = arith.addf %276, %275 : vector<8x32xf32>
    %278 = arith.divf %276, %277 : vector<8x32xf32>
    %279 = vector.extract_strided_slice %259 {offsets = [0, 64], sizes = [8, 32], strides = [1, 1]} : vector<8x96xf32> to vector<8x32xf32>
    %280 = vector.extract_strided_slice %262 {offsets = [0, 64], sizes = [8, 32], strides = [1, 1]} : vector<8x96xf32> to vector<8x32xf32>
    %281 = arith.mulf %270, %280 : vector<8x32xf32>
    %282 = arith.addf %279, %281 : vector<8x32xf32>
    %283 = math.tanh %282 : vector<8x32xf32>
    %cst_108 = arith.constant 1.000000e+00 : f32
    %284 = vector.broadcast %cst_108 : f32 to vector<8x32xf32>
    %285 = arith.subf %284, %278 : vector<8x32xf32>
    %286 = arith.mulf %285, %283 : vector<8x32xf32>
    %287 = arith.mulf %278, %258 : vector<8x32xf32>
    %288 = arith.addf %286, %287 : vector<8x32xf32>
    %289 = tpu.concatenate %78, %108, %138, %168, %198, %228, %258, %288 in 0 : vector<8x32xf32>, vector<8x32xf32>, vector<8x32xf32>, vector<8x32xf32>, vector<8x32xf32>, vector<8x32xf32>, vector<8x32xf32>, vector<8x32xf32> -> vector<64x32xf32>
    %cst_109 = arith.constant dense<0.000000e+00> : vector<64x96xf32>
    %290 = tpu.matmul %289, %7, %cst_109 {dimension_numbers = #tpu.dot_dimension_numbers<[1], [0], [0], [1], [0, 0, 1, 1], [], []>} : vector<64x32xf32>, vector<32x96xf32>, vector<64x96xf32> -> vector<64x96xf32>
    %291 = vector.broadcast %8 : vector<1x96xf32> to vector<64x96xf32>
    %292 = arith.addf %290, %291 : vector<64x96xf32>
    %cst_110 = arith.constant 0.000000e+00 : f32
    %293 = vector.broadcast %cst_110 : f32 to vector<8x32xf32>
    %294 = vector.extract_strided_slice %292 {offsets = [0, 0], sizes = [8, 96], strides = [1, 1]} : vector<64x96xf32> to vector<8x96xf32>
    %cst_111 = arith.constant dense<0.000000e+00> : vector<8x96xf32>
    %295 = tpu.matmul %293, %9, %cst_111 {dimension_numbers = #tpu.dot_dimension_numbers<[1], [0], [0], [1], [0, 0, 1, 1], [], []>} : vector<8x32xf32>, vector<32x96xf32>, vector<8x96xf32> -> vector<8x96xf32>
    %296 = vector.broadcast %10 : vector<1x96xf32> to vector<8x96xf32>
    %297 = arith.addf %295, %296 : vector<8x96xf32>
    %298 = vector.extract_strided_slice %294 {offsets = [0, 0], sizes = [8, 32], strides = [1, 1]} : vector<8x96xf32> to vector<8x32xf32>
    %299 = vector.extract_strided_slice %297 {offsets = [0, 0], sizes = [8, 32], strides = [1, 1]} : vector<8x96xf32> to vector<8x32xf32>
    %300 = arith.addf %298, %299 : vector<8x32xf32>
    %301 = arith.negf %300 : vector<8x32xf32>
    %302 = math.exp %301 : vector<8x32xf32>
    %cst_112 = arith.constant 1.000000e+00 : f32
    %303 = vector.broadcast %cst_112 : f32 to vector<8x32xf32>
    %304 = arith.addf %303, %302 : vector<8x32xf32>
    %305 = arith.divf %303, %304 : vector<8x32xf32>
    %306 = vector.extract_strided_slice %294 {offsets = [0, 32], sizes = [8, 32], strides = [1, 1]} : vector<8x96xf32> to vector<8x32xf32>
    %307 = vector.extract_strided_slice %297 {offsets = [0, 32], sizes = [8, 32], strides = [1, 1]} : vector<8x96xf32> to vector<8x32xf32>
    %308 = arith.addf %306, %307 : vector<8x32xf32>
    %309 = arith.negf %308 : vector<8x32xf32>
    %310 = math.exp %309 : vector<8x32xf32>
    %cst_113 = arith.constant 1.000000e+00 : f32
    %311 = vector.broadcast %cst_113 : f32 to vector<8x32xf32>
    %312 = arith.addf %311, %310 : vector<8x32xf32>
    %313 = arith.divf %311, %312 : vector<8x32xf32>
    %314 = vector.extract_strided_slice %294 {offsets = [0, 64], sizes = [8, 32], strides = [1, 1]} : vector<8x96xf32> to vector<8x32xf32>
    %315 = vector.extract_strided_slice %297 {offsets = [0, 64], sizes = [8, 32], strides = [1, 1]} : vector<8x96xf32> to vector<8x32xf32>
    %316 = arith.mulf %305, %315 : vector<8x32xf32>
    %317 = arith.addf %314, %316 : vector<8x32xf32>
    %318 = math.tanh %317 : vector<8x32xf32>
    %cst_114 = arith.constant 1.000000e+00 : f32
    %319 = vector.broadcast %cst_114 : f32 to vector<8x32xf32>
    %320 = arith.subf %319, %313 : vector<8x32xf32>
    %321 = arith.mulf %320, %318 : vector<8x32xf32>
    %322 = arith.mulf %313, %293 : vector<8x32xf32>
    %323 = arith.addf %321, %322 : vector<8x32xf32>
    %324 = vector.extract_strided_slice %292 {offsets = [8, 0], sizes = [8, 96], strides = [1, 1]} : vector<64x96xf32> to vector<8x96xf32>
    %cst_115 = arith.constant dense<0.000000e+00> : vector<8x96xf32>
    %325 = tpu.matmul %323, %9, %cst_115 {dimension_numbers = #tpu.dot_dimension_numbers<[1], [0], [0], [1], [0, 0, 1, 1], [], []>} : vector<8x32xf32>, vector<32x96xf32>, vector<8x96xf32> -> vector<8x96xf32>
    %326 = vector.broadcast %10 : vector<1x96xf32> to vector<8x96xf32>
    %327 = arith.addf %325, %326 : vector<8x96xf32>
    %328 = vector.extract_strided_slice %324 {offsets = [0, 0], sizes = [8, 32], strides = [1, 1]} : vector<8x96xf32> to vector<8x32xf32>
    %329 = vector.extract_strided_slice %327 {offsets = [0, 0], sizes = [8, 32], strides = [1, 1]} : vector<8x96xf32> to vector<8x32xf32>
    %330 = arith.addf %328, %329 : vector<8x32xf32>
    %331 = arith.negf %330 : vector<8x32xf32>
    %332 = math.exp %331 : vector<8x32xf32>
    %cst_116 = arith.constant 1.000000e+00 : f32
    %333 = vector.broadcast %cst_116 : f32 to vector<8x32xf32>
    %334 = arith.addf %333, %332 : vector<8x32xf32>
    %335 = arith.divf %333, %334 : vector<8x32xf32>
    %336 = vector.extract_strided_slice %324 {offsets = [0, 32], sizes = [8, 32], strides = [1, 1]} : vector<8x96xf32> to vector<8x32xf32>
    %337 = vector.extract_strided_slice %327 {offsets = [0, 32], sizes = [8, 32], strides = [1, 1]} : vector<8x96xf32> to vector<8x32xf32>
    %338 = arith.addf %336, %337 : vector<8x32xf32>
    %339 = arith.negf %338 : vector<8x32xf32>
    %340 = math.exp %339 : vector<8x32xf32>
    %cst_117 = arith.constant 1.000000e+00 : f32
    %341 = vector.broadcast %cst_117 : f32 to vector<8x32xf32>
    %342 = arith.addf %341, %340 : vector<8x32xf32>
    %343 = arith.divf %341, %342 : vector<8x32xf32>
    %344 = vector.extract_strided_slice %324 {offsets = [0, 64], sizes = [8, 32], strides = [1, 1]} : vector<8x96xf32> to vector<8x32xf32>
    %345 = vector.extract_strided_slice %327 {offsets = [0, 64], sizes = [8, 32], strides = [1, 1]} : vector<8x96xf32> to vector<8x32xf32>
    %346 = arith.mulf %335, %345 : vector<8x32xf32>
    %347 = arith.addf %344, %346 : vector<8x32xf32>
    %348 = math.tanh %347 : vector<8x32xf32>
    %cst_118 = arith.constant 1.000000e+00 : f32
    %349 = vector.broadcast %cst_118 : f32 to vector<8x32xf32>
    %350 = arith.subf %349, %343 : vector<8x32xf32>
    %351 = arith.mulf %350, %348 : vector<8x32xf32>
    %352 = arith.mulf %343, %323 : vector<8x32xf32>
    %353 = arith.addf %351, %352 : vector<8x32xf32>
    %354 = vector.extract_strided_slice %292 {offsets = [16, 0], sizes = [8, 96], strides = [1, 1]} : vector<64x96xf32> to vector<8x96xf32>
    %cst_119 = arith.constant dense<0.000000e+00> : vector<8x96xf32>
    %355 = tpu.matmul %353, %9, %cst_119 {dimension_numbers = #tpu.dot_dimension_numbers<[1], [0], [0], [1], [0, 0, 1, 1], [], []>} : vector<8x32xf32>, vector<32x96xf32>, vector<8x96xf32> -> vector<8x96xf32>
    %356 = vector.broadcast %10 : vector<1x96xf32> to vector<8x96xf32>
    %357 = arith.addf %355, %356 : vector<8x96xf32>
    %358 = vector.extract_strided_slice %354 {offsets = [0, 0], sizes = [8, 32], strides = [1, 1]} : vector<8x96xf32> to vector<8x32xf32>
    %359 = vector.extract_strided_slice %357 {offsets = [0, 0], sizes = [8, 32], strides = [1, 1]} : vector<8x96xf32> to vector<8x32xf32>
    %360 = arith.addf %358, %359 : vector<8x32xf32>
    %361 = arith.negf %360 : vector<8x32xf32>
    %362 = math.exp %361 : vector<8x32xf32>
    %cst_120 = arith.constant 1.000000e+00 : f32
    %363 = vector.broadcast %cst_120 : f32 to vector<8x32xf32>
    %364 = arith.addf %363, %362 : vector<8x32xf32>
    %365 = arith.divf %363, %364 : vector<8x32xf32>
    %366 = vector.extract_strided_slice %354 {offsets = [0, 32], sizes = [8, 32], strides = [1, 1]} : vector<8x96xf32> to vector<8x32xf32>
    %367 = vector.extract_strided_slice %357 {offsets = [0, 32], sizes = [8, 32], strides = [1, 1]} : vector<8x96xf32> to vector<8x32xf32>
    %368 = arith.addf %366, %367 : vector<8x32xf32>
    %369 = arith.negf %368 : vector<8x32xf32>
    %370 = math.exp %369 : vector<8x32xf32>
    %cst_121 = arith.constant 1.000000e+00 : f32
    %371 = vector.broadcast %cst_121 : f32 to vector<8x32xf32>
    %372 = arith.addf %371, %370 : vector<8x32xf32>
    %373 = arith.divf %371, %372 : vector<8x32xf32>
    %374 = vector.extract_strided_slice %354 {offsets = [0, 64], sizes = [8, 32], strides = [1, 1]} : vector<8x96xf32> to vector<8x32xf32>
    %375 = vector.extract_strided_slice %357 {offsets = [0, 64], sizes = [8, 32], strides = [1, 1]} : vector<8x96xf32> to vector<8x32xf32>
    %376 = arith.mulf %365, %375 : vector<8x32xf32>
    %377 = arith.addf %374, %376 : vector<8x32xf32>
    %378 = math.tanh %377 : vector<8x32xf32>
    %cst_122 = arith.constant 1.000000e+00 : f32
    %379 = vector.broadcast %cst_122 : f32 to vector<8x32xf32>
    %380 = arith.subf %379, %373 : vector<8x32xf32>
    %381 = arith.mulf %380, %378 : vector<8x32xf32>
    %382 = arith.mulf %373, %353 : vector<8x32xf32>
    %383 = arith.addf %381, %382 : vector<8x32xf32>
    %384 = vector.extract_strided_slice %292 {offsets = [24, 0], sizes = [8, 96], strides = [1, 1]} : vector<64x96xf32> to vector<8x96xf32>
    %cst_123 = arith.constant dense<0.000000e+00> : vector<8x96xf32>
    %385 = tpu.matmul %383, %9, %cst_123 {dimension_numbers = #tpu.dot_dimension_numbers<[1], [0], [0], [1], [0, 0, 1, 1], [], []>} : vector<8x32xf32>, vector<32x96xf32>, vector<8x96xf32> -> vector<8x96xf32>
    %386 = vector.broadcast %10 : vector<1x96xf32> to vector<8x96xf32>
    %387 = arith.addf %385, %386 : vector<8x96xf32>
    %388 = vector.extract_strided_slice %384 {offsets = [0, 0], sizes = [8, 32], strides = [1, 1]} : vector<8x96xf32> to vector<8x32xf32>
    %389 = vector.extract_strided_slice %387 {offsets = [0, 0], sizes = [8, 32], strides = [1, 1]} : vector<8x96xf32> to vector<8x32xf32>
    %390 = arith.addf %388, %389 : vector<8x32xf32>
    %391 = arith.negf %390 : vector<8x32xf32>
    %392 = math.exp %391 : vector<8x32xf32>
    %cst_124 = arith.constant 1.000000e+00 : f32
    %393 = vector.broadcast %cst_124 : f32 to vector<8x32xf32>
    %394 = arith.addf %393, %392 : vector<8x32xf32>
    %395 = arith.divf %393, %394 : vector<8x32xf32>
    %396 = vector.extract_strided_slice %384 {offsets = [0, 32], sizes = [8, 32], strides = [1, 1]} : vector<8x96xf32> to vector<8x32xf32>
    %397 = vector.extract_strided_slice %387 {offsets = [0, 32], sizes = [8, 32], strides = [1, 1]} : vector<8x96xf32> to vector<8x32xf32>
    %398 = arith.addf %396, %397 : vector<8x32xf32>
    %399 = arith.negf %398 : vector<8x32xf32>
    %400 = math.exp %399 : vector<8x32xf32>
    %cst_125 = arith.constant 1.000000e+00 : f32
    %401 = vector.broadcast %cst_125 : f32 to vector<8x32xf32>
    %402 = arith.addf %401, %400 : vector<8x32xf32>
    %403 = arith.divf %401, %402 : vector<8x32xf32>
    %404 = vector.extract_strided_slice %384 {offsets = [0, 64], sizes = [8, 32], strides = [1, 1]} : vector<8x96xf32> to vector<8x32xf32>
    %405 = vector.extract_strided_slice %387 {offsets = [0, 64], sizes = [8, 32], strides = [1, 1]} : vector<8x96xf32> to vector<8x32xf32>
    %406 = arith.mulf %395, %405 : vector<8x32xf32>
    %407 = arith.addf %404, %406 : vector<8x32xf32>
    %408 = math.tanh %407 : vector<8x32xf32>
    %cst_126 = arith.constant 1.000000e+00 : f32
    %409 = vector.broadcast %cst_126 : f32 to vector<8x32xf32>
    %410 = arith.subf %409, %403 : vector<8x32xf32>
    %411 = arith.mulf %410, %408 : vector<8x32xf32>
    %412 = arith.mulf %403, %383 : vector<8x32xf32>
    %413 = arith.addf %411, %412 : vector<8x32xf32>
    %414 = vector.extract_strided_slice %292 {offsets = [32, 0], sizes = [8, 96], strides = [1, 1]} : vector<64x96xf32> to vector<8x96xf32>
    %cst_127 = arith.constant dense<0.000000e+00> : vector<8x96xf32>
    %415 = tpu.matmul %413, %9, %cst_127 {dimension_numbers = #tpu.dot_dimension_numbers<[1], [0], [0], [1], [0, 0, 1, 1], [], []>} : vector<8x32xf32>, vector<32x96xf32>, vector<8x96xf32> -> vector<8x96xf32>
    %416 = vector.broadcast %10 : vector<1x96xf32> to vector<8x96xf32>
    %417 = arith.addf %415, %416 : vector<8x96xf32>
    %418 = vector.extract_strided_slice %414 {offsets = [0, 0], sizes = [8, 32], strides = [1, 1]} : vector<8x96xf32> to vector<8x32xf32>
    %419 = vector.extract_strided_slice %417 {offsets = [0, 0], sizes = [8, 32], strides = [1, 1]} : vector<8x96xf32> to vector<8x32xf32>
    %420 = arith.addf %418, %419 : vector<8x32xf32>
    %421 = arith.negf %420 : vector<8x32xf32>
    %422 = math.exp %421 : vector<8x32xf32>
    %cst_128 = arith.constant 1.000000e+00 : f32
    %423 = vector.broadcast %cst_128 : f32 to vector<8x32xf32>
    %424 = arith.addf %423, %422 : vector<8x32xf32>
    %425 = arith.divf %423, %424 : vector<8x32xf32>
    %426 = vector.extract_strided_slice %414 {offsets = [0, 32], sizes = [8, 32], strides = [1, 1]} : vector<8x96xf32> to vector<8x32xf32>
    %427 = vector.extract_strided_slice %417 {offsets = [0, 32], sizes = [8, 32], strides = [1, 1]} : vector<8x96xf32> to vector<8x32xf32>
    %428 = arith.addf %426, %427 : vector<8x32xf32>
    %429 = arith.negf %428 : vector<8x32xf32>
    %430 = math.exp %429 : vector<8x32xf32>
    %cst_129 = arith.constant 1.000000e+00 : f32
    %431 = vector.broadcast %cst_129 : f32 to vector<8x32xf32>
    %432 = arith.addf %431, %430 : vector<8x32xf32>
    %433 = arith.divf %431, %432 : vector<8x32xf32>
    %434 = vector.extract_strided_slice %414 {offsets = [0, 64], sizes = [8, 32], strides = [1, 1]} : vector<8x96xf32> to vector<8x32xf32>
    %435 = vector.extract_strided_slice %417 {offsets = [0, 64], sizes = [8, 32], strides = [1, 1]} : vector<8x96xf32> to vector<8x32xf32>
    %436 = arith.mulf %425, %435 : vector<8x32xf32>
    %437 = arith.addf %434, %436 : vector<8x32xf32>
    %438 = math.tanh %437 : vector<8x32xf32>
    %cst_130 = arith.constant 1.000000e+00 : f32
    %439 = vector.broadcast %cst_130 : f32 to vector<8x32xf32>
    %440 = arith.subf %439, %433 : vector<8x32xf32>
    %441 = arith.mulf %440, %438 : vector<8x32xf32>
    %442 = arith.mulf %433, %413 : vector<8x32xf32>
    %443 = arith.addf %441, %442 : vector<8x32xf32>
    %444 = vector.extract_strided_slice %292 {offsets = [40, 0], sizes = [8, 96], strides = [1, 1]} : vector<64x96xf32> to vector<8x96xf32>
    %cst_131 = arith.constant dense<0.000000e+00> : vector<8x96xf32>
    %445 = tpu.matmul %443, %9, %cst_131 {dimension_numbers = #tpu.dot_dimension_numbers<[1], [0], [0], [1], [0, 0, 1, 1], [], []>} : vector<8x32xf32>, vector<32x96xf32>, vector<8x96xf32> -> vector<8x96xf32>
    %446 = vector.broadcast %10 : vector<1x96xf32> to vector<8x96xf32>
    %447 = arith.addf %445, %446 : vector<8x96xf32>
    %448 = vector.extract_strided_slice %444 {offsets = [0, 0], sizes = [8, 32], strides = [1, 1]} : vector<8x96xf32> to vector<8x32xf32>
    %449 = vector.extract_strided_slice %447 {offsets = [0, 0], sizes = [8, 32], strides = [1, 1]} : vector<8x96xf32> to vector<8x32xf32>
    %450 = arith.addf %448, %449 : vector<8x32xf32>
    %451 = arith.negf %450 : vector<8x32xf32>
    %452 = math.exp %451 : vector<8x32xf32>
    %cst_132 = arith.constant 1.000000e+00 : f32
    %453 = vector.broadcast %cst_132 : f32 to vector<8x32xf32>
    %454 = arith.addf %453, %452 : vector<8x32xf32>
    %455 = arith.divf %453, %454 : vector<8x32xf32>
    %456 = vector.extract_strided_slice %444 {offsets = [0, 32], sizes = [8, 32], strides = [1, 1]} : vector<8x96xf32> to vector<8x32xf32>
    %457 = vector.extract_strided_slice %447 {offsets = [0, 32], sizes = [8, 32], strides = [1, 1]} : vector<8x96xf32> to vector<8x32xf32>
    %458 = arith.addf %456, %457 : vector<8x32xf32>
    %459 = arith.negf %458 : vector<8x32xf32>
    %460 = math.exp %459 : vector<8x32xf32>
    %cst_133 = arith.constant 1.000000e+00 : f32
    %461 = vector.broadcast %cst_133 : f32 to vector<8x32xf32>
    %462 = arith.addf %461, %460 : vector<8x32xf32>
    %463 = arith.divf %461, %462 : vector<8x32xf32>
    %464 = vector.extract_strided_slice %444 {offsets = [0, 64], sizes = [8, 32], strides = [1, 1]} : vector<8x96xf32> to vector<8x32xf32>
    %465 = vector.extract_strided_slice %447 {offsets = [0, 64], sizes = [8, 32], strides = [1, 1]} : vector<8x96xf32> to vector<8x32xf32>
    %466 = arith.mulf %455, %465 : vector<8x32xf32>
    %467 = arith.addf %464, %466 : vector<8x32xf32>
    %468 = math.tanh %467 : vector<8x32xf32>
    %cst_134 = arith.constant 1.000000e+00 : f32
    %469 = vector.broadcast %cst_134 : f32 to vector<8x32xf32>
    %470 = arith.subf %469, %463 : vector<8x32xf32>
    %471 = arith.mulf %470, %468 : vector<8x32xf32>
    %472 = arith.mulf %463, %443 : vector<8x32xf32>
    %473 = arith.addf %471, %472 : vector<8x32xf32>
    %474 = vector.extract_strided_slice %292 {offsets = [48, 0], sizes = [8, 96], strides = [1, 1]} : vector<64x96xf32> to vector<8x96xf32>
    %cst_135 = arith.constant dense<0.000000e+00> : vector<8x96xf32>
    %475 = tpu.matmul %473, %9, %cst_135 {dimension_numbers = #tpu.dot_dimension_numbers<[1], [0], [0], [1], [0, 0, 1, 1], [], []>} : vector<8x32xf32>, vector<32x96xf32>, vector<8x96xf32> -> vector<8x96xf32>
    %476 = vector.broadcast %10 : vector<1x96xf32> to vector<8x96xf32>
    %477 = arith.addf %475, %476 : vector<8x96xf32>
    %478 = vector.extract_strided_slice %474 {offsets = [0, 0], sizes = [8, 32], strides = [1, 1]} : vector<8x96xf32> to vector<8x32xf32>
    %479 = vector.extract_strided_slice %477 {offsets = [0, 0], sizes = [8, 32], strides = [1, 1]} : vector<8x96xf32> to vector<8x32xf32>
    %480 = arith.addf %478, %479 : vector<8x32xf32>
    %481 = arith.negf %480 : vector<8x32xf32>
    %482 = math.exp %481 : vector<8x32xf32>
    %cst_136 = arith.constant 1.000000e+00 : f32
    %483 = vector.broadcast %cst_136 : f32 to vector<8x32xf32>
    %484 = arith.addf %483, %482 : vector<8x32xf32>
    %485 = arith.divf %483, %484 : vector<8x32xf32>
    %486 = vector.extract_strided_slice %474 {offsets = [0, 32], sizes = [8, 32], strides = [1, 1]} : vector<8x96xf32> to vector<8x32xf32>
    %487 = vector.extract_strided_slice %477 {offsets = [0, 32], sizes = [8, 32], strides = [1, 1]} : vector<8x96xf32> to vector<8x32xf32>
    %488 = arith.addf %486, %487 : vector<8x32xf32>
    %489 = arith.negf %488 : vector<8x32xf32>
    %490 = math.exp %489 : vector<8x32xf32>
    %cst_137 = arith.constant 1.000000e+00 : f32
    %491 = vector.broadcast %cst_137 : f32 to vector<8x32xf32>
    %492 = arith.addf %491, %490 : vector<8x32xf32>
    %493 = arith.divf %491, %492 : vector<8x32xf32>
    %494 = vector.extract_strided_slice %474 {offsets = [0, 64], sizes = [8, 32], strides = [1, 1]} : vector<8x96xf32> to vector<8x32xf32>
    %495 = vector.extract_strided_slice %477 {offsets = [0, 64], sizes = [8, 32], strides = [1, 1]} : vector<8x96xf32> to vector<8x32xf32>
    %496 = arith.mulf %485, %495 : vector<8x32xf32>
    %497 = arith.addf %494, %496 : vector<8x32xf32>
    %498 = math.tanh %497 : vector<8x32xf32>
    %cst_138 = arith.constant 1.000000e+00 : f32
    %499 = vector.broadcast %cst_138 : f32 to vector<8x32xf32>
    %500 = arith.subf %499, %493 : vector<8x32xf32>
    %501 = arith.mulf %500, %498 : vector<8x32xf32>
    %502 = arith.mulf %493, %473 : vector<8x32xf32>
    %503 = arith.addf %501, %502 : vector<8x32xf32>
    %504 = vector.extract_strided_slice %292 {offsets = [56, 0], sizes = [8, 96], strides = [1, 1]} : vector<64x96xf32> to vector<8x96xf32>
    %cst_139 = arith.constant dense<0.000000e+00> : vector<8x96xf32>
    %505 = tpu.matmul %503, %9, %cst_139 {dimension_numbers = #tpu.dot_dimension_numbers<[1], [0], [0], [1], [0, 0, 1, 1], [], []>} : vector<8x32xf32>, vector<32x96xf32>, vector<8x96xf32> -> vector<8x96xf32>
    %506 = vector.broadcast %10 : vector<1x96xf32> to vector<8x96xf32>
    %507 = arith.addf %505, %506 : vector<8x96xf32>
    %508 = vector.extract_strided_slice %504 {offsets = [0, 0], sizes = [8, 32], strides = [1, 1]} : vector<8x96xf32> to vector<8x32xf32>
    %509 = vector.extract_strided_slice %507 {offsets = [0, 0], sizes = [8, 32], strides = [1, 1]} : vector<8x96xf32> to vector<8x32xf32>
    %510 = arith.addf %508, %509 : vector<8x32xf32>
    %511 = arith.negf %510 : vector<8x32xf32>
    %512 = math.exp %511 : vector<8x32xf32>
    %cst_140 = arith.constant 1.000000e+00 : f32
    %513 = vector.broadcast %cst_140 : f32 to vector<8x32xf32>
    %514 = arith.addf %513, %512 : vector<8x32xf32>
    %515 = arith.divf %513, %514 : vector<8x32xf32>
    %516 = vector.extract_strided_slice %504 {offsets = [0, 32], sizes = [8, 32], strides = [1, 1]} : vector<8x96xf32> to vector<8x32xf32>
    %517 = vector.extract_strided_slice %507 {offsets = [0, 32], sizes = [8, 32], strides = [1, 1]} : vector<8x96xf32> to vector<8x32xf32>
    %518 = arith.addf %516, %517 : vector<8x32xf32>
    %519 = arith.negf %518 : vector<8x32xf32>
    %520 = math.exp %519 : vector<8x32xf32>
    %cst_141 = arith.constant 1.000000e+00 : f32
    %521 = vector.broadcast %cst_141 : f32 to vector<8x32xf32>
    %522 = arith.addf %521, %520 : vector<8x32xf32>
    %523 = arith.divf %521, %522 : vector<8x32xf32>
    %524 = vector.extract_strided_slice %504 {offsets = [0, 64], sizes = [8, 32], strides = [1, 1]} : vector<8x96xf32> to vector<8x32xf32>
    %525 = vector.extract_strided_slice %507 {offsets = [0, 64], sizes = [8, 32], strides = [1, 1]} : vector<8x96xf32> to vector<8x32xf32>
    %526 = arith.mulf %515, %525 : vector<8x32xf32>
    %527 = arith.addf %524, %526 : vector<8x32xf32>
    %528 = math.tanh %527 : vector<8x32xf32>
    %cst_142 = arith.constant 1.000000e+00 : f32
    %529 = vector.broadcast %cst_142 : f32 to vector<8x32xf32>
    %530 = arith.subf %529, %523 : vector<8x32xf32>
    %531 = arith.mulf %530, %528 : vector<8x32xf32>
    %532 = arith.mulf %523, %503 : vector<8x32xf32>
    %533 = arith.addf %531, %532 : vector<8x32xf32>
    %cst_143 = arith.constant dense<0.000000e+00> : vector<8x32xf32>
    %534 = tpu.matmul %533, %12, %cst_143 {dimension_numbers = #tpu.dot_dimension_numbers<[1], [0], [0], [1], [0, 0, 1, 1], [], []>} : vector<8x32xf32>, vector<32x32xf32>, vector<8x32xf32> -> vector<8x32xf32>
    %535 = vector.broadcast %13 : vector<1x32xf32> to vector<8x32xf32>
    %536 = arith.addf %534, %535 : vector<8x32xf32>
    %cst_144 = arith.constant dense<0.000000e+00> : vector<8x32xf32>
    %537 = tpu.matmul %533, %14, %cst_144 {dimension_numbers = #tpu.dot_dimension_numbers<[1], [0], [0], [1], [0, 0, 1, 1], [], []>} : vector<8x32xf32>, vector<32x32xf32>, vector<8x32xf32> -> vector<8x32xf32>
    %538 = vector.broadcast %15 : vector<1x32xf32> to vector<8x32xf32>
    %539 = arith.addf %537, %538 : vector<8x32xf32>
    %cst_145 = arith.constant dense<0.000000e+00> : vector<4xf32>
    %540 = vector.multi_reduction <add>, %16, %cst_145 [0] : vector<8x4xf32> to vector<4xf32>
    %541 = vector.shape_cast %540 : vector<4xf32> to vector<1x4xf32>
    %542 = arith.mulf %16, %16 : vector<8x4xf32>
    %cst_146 = arith.constant dense<0.000000e+00> : vector<4xf32>
    %543 = vector.multi_reduction <add>, %542, %cst_146 [0] : vector<8x4xf32> to vector<4xf32>
    %544 = vector.shape_cast %543 : vector<4xf32> to vector<1x4xf32>
    %cst_147 = arith.constant dense<0.000000e+00> : vector<8x4xf32>
    %545 = tpu.matmul %536, %17, %cst_147 {dimension_numbers = #tpu.dot_dimension_numbers<[1], [0], [0], [1], [0, 0, 1, 1], [], []>} : vector<8x32xf32>, vector<32x4xf32>, vector<8x4xf32> -> vector<8x4xf32>
    %546 = arith.mulf %536, %536 : vector<8x32xf32>
    %cst_148 = arith.constant dense<0.000000e+00> : vector<8x4xf32>
    %547 = tpu.matmul %546, %17, %cst_148 {dimension_numbers = #tpu.dot_dimension_numbers<[1], [0], [0], [1], [0, 0, 1, 1], [], []>} : vector<8x32xf32>, vector<32x4xf32>, vector<8x4xf32> -> vector<8x4xf32>
    %548 = math.sqrt %547 : vector<8x4xf32>
    %549 = vector.broadcast %541 : vector<1x4xf32> to vector<8x4xf32>
    %550 = arith.mulf %545, %549 : vector<8x4xf32>
    %cst_149 = arith.constant 9.99999997E-7 : f32
    %551 = vector.broadcast %cst_149 : f32 to vector<8x4xf32>
    %552 = arith.maximumf %550, %551 : vector<8x4xf32>
    %553 = vector.broadcast %544 : vector<1x4xf32> to vector<8x4xf32>
    %554 = arith.mulf %548, %553 : vector<8x4xf32>
    %cst_150 = arith.constant 9.99999997E-7 : f32
    %555 = vector.broadcast %cst_150 : f32 to vector<8x4xf32>
    %556 = arith.maximumf %554, %555 : vector<8x4xf32>
    %557 = arith.divf %552, %556 : vector<8x4xf32>
    %cst_151 = arith.constant dense<0.000000e+00> : vector<8x32xf32>
    %558 = tpu.matmul %557, %18, %cst_151 {dimension_numbers = #tpu.dot_dimension_numbers<[1], [0], [0], [1], [0, 0, 1, 1], [], []>} : vector<8x4xf32>, vector<4x32xf32>, vector<8x32xf32> -> vector<8x32xf32>
    %559 = arith.mulf %558, %539 : vector<8x32xf32>
    %cst_152 = arith.constant dense<0.000000e+00> : vector<32xf32>
    %560 = vector.multi_reduction <add>, %559, %cst_152 [0] : vector<8x32xf32> to vector<32xf32>
    %561 = vector.shape_cast %560 : vector<32xf32> to vector<1x32xf32>
    %cst_153 = arith.constant dense<0.000000e+00> : vector<1x4xf32>
    %562 = tpu.matmul %561, %19, %cst_153 {dimension_numbers = #tpu.dot_dimension_numbers<[1], [0], [0], [1], [0, 0, 1, 1], [], []>} : vector<1x32xf32>, vector<32x4xf32>, vector<1x4xf32> -> vector<1x4xf32>
    %563 = arith.addf %562, %20 : vector<1x4xf32>
    %cst_154 = arith.constant dense<0.000000e+00> : vector<1x4xf32>
    %564 = tpu.matmul %561, %21, %cst_154 {dimension_numbers = #tpu.dot_dimension_numbers<[1], [0], [0], [1], [0, 0, 1, 1], [], []>} : vector<1x32xf32>, vector<32x4xf32>, vector<1x4xf32> -> vector<1x4xf32>
    %565 = arith.addf %564, %22 : vector<1x4xf32>
    %566 = math.absf %565 : vector<1x4xf32>
    %cst_155 = arith.constant 0.000000e+00 : f32
    %567 = vector.broadcast %cst_155 : f32 to vector<1x4xf32>
    %568 = arith.subf %567, %566 : vector<1x4xf32>
    %569 = math.exp %568 : vector<1x4xf32>
    %cst_156 = arith.constant 1.000000e+00 : f32
    %570 = vector.broadcast %cst_156 : f32 to vector<1x4xf32>
    %571 = arith.addf %570, %569 : vector<1x4xf32>
    %572 = math.log %571 : vector<1x4xf32>
    %573 = arith.addf %566, %572 : vector<1x4xf32>
    %cst_157 = arith.constant dense<0.000000e+00> : vector<8x8xf32>
    %574 = tpu.matmul %533, %23, %cst_157 {dimension_numbers = #tpu.dot_dimension_numbers<[1], [0], [0], [1], [0, 0, 1, 1], [], []>} : vector<8x32xf32>, vector<32x8xf32>, vector<8x8xf32> -> vector<8x8xf32>
    %575 = vector.broadcast %24 : vector<1x8xf32> to vector<8x8xf32>
    %576 = arith.addf %574, %575 : vector<8x8xf32>
    %cst_158 = arith.constant dense<0xFF800000> : vector<8xf32>
    %577 = vector.multi_reduction <maximumf>, %576, %cst_158 [0] : vector<8x8xf32> to vector<8xf32>
    %578 = vector.shape_cast %577 : vector<8xf32> to vector<1x8xf32>
    %579 = vector.broadcast %578 : vector<1x8xf32> to vector<8x8xf32>
    %580 = arith.subf %576, %579 : vector<8x8xf32>
    %581 = math.exp %580 : vector<8x8xf32>
    %cst_159 = arith.constant dense<0.000000e+00> : vector<8xf32>
    %582 = vector.multi_reduction <add>, %581, %cst_159 [0] : vector<8x8xf32> to vector<8xf32>
    %583 = vector.shape_cast %582 : vector<8xf32> to vector<1x8xf32>
    %584 = vector.broadcast %583 : vector<1x8xf32> to vector<8x8xf32>
    %585 = arith.divf %581, %584 : vector<8x8xf32>
    %586 = vector.broadcast %11 : vector<8x1xf32> to vector<8x8xf32>
    %587 = arith.mulf %585, %586 : vector<8x8xf32>
    %cst_160 = arith.constant dense<0.000000e+00> : vector<8xf32>
    %588 = vector.multi_reduction <add>, %587, %cst_160 [0] : vector<8x8xf32> to vector<8xf32>
    %589 = vector.shape_cast %588 : vector<8xf32> to vector<1x8xf32>
    %cst_161 = arith.constant dense<0.000000e+00> : vector<1x4xf32>
    %590 = tpu.matmul %589, %25, %cst_161 {dimension_numbers = #tpu.dot_dimension_numbers<[1], [0], [0], [1], [0, 0, 1, 1], [], []>} : vector<1x8xf32>, vector<8x4xf32>, vector<1x4xf32> -> vector<1x4xf32>
    %591 = arith.addf %590, %26 : vector<1x4xf32>
    %cst_162 = arith.constant dense<0.000000e+00> : vector<1x4xf32>
    %592 = tpu.matmul %589, %27, %cst_162 {dimension_numbers = #tpu.dot_dimension_numbers<[1], [0], [0], [1], [0, 0, 1, 1], [], []>} : vector<1x8xf32>, vector<8x4xf32>, vector<1x4xf32> -> vector<1x4xf32>
    %593 = arith.addf %592, %28 : vector<1x4xf32>
    %594 = math.absf %593 : vector<1x4xf32>
    %cst_163 = arith.constant 0.000000e+00 : f32
    %595 = vector.broadcast %cst_163 : f32 to vector<1x4xf32>
    %596 = arith.subf %595, %594 : vector<1x4xf32>
    %597 = math.exp %596 : vector<1x4xf32>
    %cst_164 = arith.constant 1.000000e+00 : f32
    %598 = vector.broadcast %cst_164 : f32 to vector<1x4xf32>
    %599 = arith.addf %598, %597 : vector<1x4xf32>
    %600 = math.log %599 : vector<1x4xf32>
    %601 = arith.addf %594, %600 : vector<1x4xf32>
    %cst_165 = arith.constant dense<0.000000e+00> : vector<8x4xf32>
    %602 = tpu.matmul %533, %29, %cst_165 {dimension_numbers = #tpu.dot_dimension_numbers<[1], [0], [0], [1], [0, 0, 1, 1], [], []>} : vector<8x32xf32>, vector<32x4xf32>, vector<8x4xf32> -> vector<8x4xf32>
    %603 = vector.broadcast %30 : vector<1x4xf32> to vector<8x4xf32>
    %604 = arith.addf %602, %603 : vector<8x4xf32>
    %cst_166 = arith.constant dense<0.000000e+00> : vector<8x32xf32>
    %605 = tpu.matmul %533, %31, %cst_166 {dimension_numbers = #tpu.dot_dimension_numbers<[1], [0], [0], [1], [0, 0, 1, 1], [], []>} : vector<8x32xf32>, vector<32x32xf32>, vector<8x32xf32> -> vector<8x32xf32>
    %606 = vector.broadcast %32 : vector<1x32xf32> to vector<8x32xf32>
    %607 = arith.addf %605, %606 : vector<8x32xf32>
    %cst_167 = arith.constant 0.000000e+00 : f32
    %608 = vector.broadcast %cst_167 : f32 to vector<8x32xf32>
    %609 = arith.cmpf oge, %607, %608 : vector<8x32xf32>
    %cst_168 = arith.constant 0.00999999977 : f32
    %610 = vector.broadcast %cst_168 : f32 to vector<8x32xf32>
    %611 = arith.mulf %610, %607 : vector<8x32xf32>
    %612 = arith.select %609, %607, %611 : vector<8x32xi1>, vector<8x32xf32>
    %cst_169 = arith.constant dense<0.000000e+00> : vector<8x1xf32>
    %613 = tpu.matmul %612, %33, %cst_169 {dimension_numbers = #tpu.dot_dimension_numbers<[1], [0], [0], [1], [0, 0, 1, 1], [], []>} : vector<8x32xf32>, vector<32x1xf32>, vector<8x1xf32> -> vector<8x1xf32>
    %614 = vector.broadcast %34 : vector<1x1xf32> to vector<8x1xf32>
    %615 = arith.addf %613, %614 : vector<8x1xf32>
    %cst_170 = arith.constant dense<0.000000e+00> : vector<8x1xf32>
    %616 = tpu.matmul %612, %35, %cst_170 {dimension_numbers = #tpu.dot_dimension_numbers<[1], [0], [0], [1], [0, 0, 1, 1], [], []>} : vector<8x32xf32>, vector<32x1xf32>, vector<8x1xf32> -> vector<8x1xf32>
    %617 = vector.broadcast %36 : vector<1x1xf32> to vector<8x1xf32>
    %618 = arith.addf %616, %617 : vector<8x1xf32>
    %619 = math.absf %618 : vector<8x1xf32>
    %cst_171 = arith.constant 0.000000e+00 : f32
    %620 = vector.broadcast %cst_171 : f32 to vector<8x1xf32>
    %621 = arith.subf %620, %619 : vector<8x1xf32>
    %622 = math.exp %621 : vector<8x1xf32>
    %cst_172 = arith.constant 1.000000e+00 : f32
    %623 = vector.broadcast %cst_172 : f32 to vector<8x1xf32>
    %624 = arith.addf %623, %622 : vector<8x1xf32>
    %625 = math.log %624 : vector<8x1xf32>
    %626 = arith.addf %619, %625 : vector<8x1xf32>
    %627 = vector.broadcast %563 : vector<1x4xf32> to vector<8x4xf32>
    %628 = arith.mulf %604, %627 : vector<8x4xf32>
    %cst_173 = arith.constant dense<0.000000e+00> : vector<8xf32>
    %629 = vector.multi_reduction <add>, %628, %cst_173 [1] : vector<8x4xf32> to vector<8xf32>
    %630 = vector.shape_cast %629 : vector<8xf32> to vector<8x1xf32>
    %631 = arith.addf %615, %630 : vector<8x1xf32>
    %632 = vector.broadcast %591 : vector<1x4xf32> to vector<8x4xf32>
    %633 = arith.mulf %604, %632 : vector<8x4xf32>
    %cst_174 = arith.constant dense<0.000000e+00> : vector<8xf32>
    %634 = vector.multi_reduction <add>, %633, %cst_174 [1] : vector<8x4xf32> to vector<8xf32>
    %635 = vector.shape_cast %634 : vector<8xf32> to vector<8x1xf32>
    %636 = arith.addf %615, %635 : vector<8x1xf32>
    %637 = vector.broadcast %601 : vector<1x4xf32> to vector<8x4xf32>
    %638 = arith.mulf %604, %637 : vector<8x4xf32>
    %cst_175 = arith.constant dense<0.000000e+00> : vector<8xf32>
    %639 = vector.multi_reduction <add>, %638, %cst_175 [1] : vector<8x4xf32> to vector<8xf32>
    %640 = vector.shape_cast %639 : vector<8xf32> to vector<8x1xf32>
    %641 = arith.mulf %626, %626 : vector<8x1xf32>
    %642 = arith.mulf %640, %640 : vector<8x1xf32>
    %643 = arith.addf %641, %642 : vector<8x1xf32>
    %644 = math.sqrt %643 : vector<8x1xf32>
    %645 = tpu.iota {dimensions = array<i32: 0>} : vector<4x4xi32>
    %c0_i32 = arith.constant 0 : i32
    %646 = vector.broadcast %c0_i32 : i32 to vector<4x4xi32>
    %647 = arith.cmpi eq, %645, %646 : vector<4x4xi32>
    %c1_i32 = arith.constant 1 : i32
    %648 = vector.broadcast %c1_i32 : i32 to vector<4x4xi32>
    %649 = arith.cmpi eq, %645, %648 : vector<4x4xi32>
    %c2_i32 = arith.constant 2 : i32
    %650 = vector.broadcast %c2_i32 : i32 to vector<4x4xi32>
    %651 = arith.cmpi eq, %645, %650 : vector<4x4xi32>
    %652 = vector.shape_cast %563 : vector<1x4xf32> to vector<1x4xf32>
    %653 = vector.broadcast %652 : vector<1x4xf32> to vector<4x4xf32>
    %654 = vector.shape_cast %573 : vector<1x4xf32> to vector<1x4xf32>
    %655 = vector.broadcast %654 : vector<1x4xf32> to vector<4x4xf32>
    %656 = arith.select %651, %653, %655 : vector<4x4xi1>, vector<4x4xf32>
    %657 = vector.shape_cast %601 : vector<1x4xf32> to vector<1x4xf32>
    %658 = vector.broadcast %657 : vector<1x4xf32> to vector<4x4xf32>
    %659 = arith.select %649, %658, %656 : vector<4x4xi1>, vector<4x4xf32>
    %660 = vector.shape_cast %591 : vector<1x4xf32> to vector<1x4xf32>
    %661 = vector.broadcast %660 : vector<1x4xf32> to vector<4x4xf32>
    %662 = arith.select %647, %661, %659 : vector<4x4xi1>, vector<4x4xf32>
    %c0_176 = arith.constant 0 : index
    %c0_177 = arith.constant 0 : index
    %663 = vector.load %arg37[%c0_176, %c0_177] : memref<4x4xf32, #tpu.memory_space<vmem>>, vector<4x4xf32>
    tpu.vector_store %arg37[%c0_176, %c0_177], %662 {strides = array<i32>} : memref<4x4xf32, #tpu.memory_space<vmem>>, vector<4x4xf32>,
    %664 = tpu.iota {dimensions = array<i32: 1>} : vector<8x3xi32>
    %c0_i32_178 = arith.constant 0 : i32
    %665 = vector.broadcast %c0_i32_178 : i32 to vector<8x3xi32>
    %666 = arith.cmpi eq, %664, %665 : vector<8x3xi32>
    %c1_i32_179 = arith.constant 1 : i32
    %667 = vector.broadcast %c1_i32_179 : i32 to vector<8x3xi32>
    %668 = arith.cmpi eq, %664, %667 : vector<8x3xi32>
    %669 = vector.shape_cast %636 : vector<8x1xf32> to vector<8x1xf32>
    %670 = vector.broadcast %669 : vector<8x1xf32> to vector<8x3xf32>
    %671 = vector.shape_cast %644 : vector<8x1xf32> to vector<8x1xf32>
    %672 = vector.broadcast %671 : vector<8x1xf32> to vector<8x3xf32>
    %673 = arith.select %668, %670, %672 : vector<8x3xi1>, vector<8x3xf32>
    %674 = vector.shape_cast %631 : vector<8x1xf32> to vector<8x1xf32>
    %675 = vector.broadcast %674 : vector<8x1xf32> to vector<8x3xf32>
    %676 = arith.select %666, %675, %673 : vector<8x3xi1>, vector<8x3xf32>
    %c0_180 = arith.constant 0 : index
    %c0_181 = arith.constant 0 : index
    %677 = vector.load %arg38[%c0_180, %c0_181] : memref<8x3xf32, #tpu.memory_space<vmem>>, vector<8x3xf32>
    tpu.vector_store %arg38[%c0_180, %c0_181], %676 {strides = array<i32>} : memref<8x3xf32, #tpu.memory_space<vmem>>, vector<8x3xf32>,
    return
  }
}

</mosaic_0001>

<llo_original>
// kernel: factor_vae_forward.1
$region0: #{factor_vae_forward.1}
  #allocation0 [shape = 'u32[]', space=smem, size = 0x4, offset = 0x4, fixed_abs, tag = 'smem constant byte address 0x4 - core index']
  #allocation1 [shape = 'u32[72,128]{1,0:T(1,128)}', space=vmem, size = 0x9000, scoped, tag = 'internal scratch']
  #allocation2 [shape = 'f32[1,1]{1,0:T(1,128)S(1)}', space=vmem, size = 0x200, scoped, tag = 'scoped memory for factor_vae_forward.1']
  #allocation3 [shape = 'f32[1,1]{1,0:T(1,128)S(1)}', space=vmem, size = 0x200, scoped, tag = 'scoped memory for factor_vae_forward.1']
  %s0 = inlined_call_operand.smem [shape: u32[39], index: -1, kind: input, shape index: {}]
  %s1 = sld [smem:[%s0]]
  %s2 = scalar_lea.smem %s0, 1
  %s3 = sld [smem:[%s2]]
  %s4 = scalar_lea.smem %s0, 2
  %s5 = sld [smem:[%s4]]
  %s6 = scalar_lea.smem %s0, 3
  %s7 = sld [smem:[%s6]]
  %s8 = scalar_lea.smem %s0, 4
  %s9 = sld [smem:[%s8]]
  %s10 = scalar_lea.smem %s0, 5
  %s11 = sld [smem:[%s10]]
  %s12 = scalar_lea.smem %s0, 6
  %s13 = sld [smem:[%s12]]
  %s14 = scalar_lea.smem %s0, 7
  %s15 = sld [smem:[%s14]]
  %s16 = scalar_lea.smem %s0, 8
  %s17 = sld [smem:[%s16]]
  %s18 = scalar_lea.smem %s0, 9
  %s19 = sld [smem:[%s18]]
  %s20 = scalar_lea.smem %s0, 10
  %s21 = sld [smem:[%s20]]
  %s22 = scalar_lea.smem %s0, 11
  %s23 = sld [smem:[%s22]]
  %s24 = scalar_lea.smem %s0, 12
  %s25 = sld [smem:[%s24]]
  %s26 = scalar_lea.smem %s0, 13
  %s27 = sld [smem:[%s26]]
  %s28 = scalar_lea.smem %s0, 14
  %s29 = sld [smem:[%s28]]
  %s30 = scalar_lea.smem %s0, 15
  %s31 = sld [smem:[%s30]]
  %s32 = scalar_lea.smem %s0, 16
  %s33 = sld [smem:[%s32]]
  %s34 = scalar_lea.smem %s0, 17
  %s35 = sld [smem:[%s34]]
  %s36 = scalar_lea.smem %s0, 18
  %s37 = sld [smem:[%s36]]
  %s38 = scalar_lea.smem %s0, 19
  %s39 = sld [smem:[%s38]]
  %s40 = scalar_lea.smem %s0, 20
  %s41 = sld [smem:[%s40]]
  %s42 = scalar_lea.smem %s0, 21
  %s43 = sld [smem:[%s42]]
  %s44 = scalar_lea.smem %s0, 22
  %s45 = sld [smem:[%s44]]
  %s46 = scalar_lea.smem %s0, 23
  %s47 = sld [smem:[%s46]]
  %s48 = scalar_lea.smem %s0, 24
  %s49 = sld [smem:[%s48]]
  %s50 = scalar_lea.smem %s0, 25
  %s51 = sld [smem:[%s50]]
  %s52 = scalar_lea.smem %s0, 26
  %s53 = sld [smem:[%s52]]
  %s54 = scalar_lea.smem %s0, 27
  %s55 = sld [smem:[%s54]]
  %s56 = scalar_lea.smem %s0, 28
  %s57 = sld [smem:[%s56]]
  %s58 = scalar_lea.smem %s0, 29
  %s59 = sld [smem:[%s58]]
  %s60 = scalar_lea.smem %s0, 30
  %s61 = sld [smem:[%s60]]
  %s62 = scalar_lea.smem %s0, 31
  %s63 = sld [smem:[%s62]]
  %s64 = scalar_lea.smem %s0, 32
  %s65 = sld [smem:[%s64]]
  %s66 = scalar_lea.smem %s0, 33
  %s67 = sld [smem:[%s66]]
  %s68 = scalar_lea.smem %s0, 34
  %s69 = sld [smem:[%s68]]
  %s70 = scalar_lea.smem %s0, 35
  %s71 = sld [smem:[%s70]]
  %s72 = scalar_lea.smem %s0, 36
  %s73 = sld [smem:[%s72]]
  %s74 = scalar_lea.smem %s0, 37
  %s75 = sld [smem:[%s74]]
  %s76 = scalar_lea.smem %s0, 38
  %s77 = sld [smem:[%s76]]
  %78 = xla_tuple %s75, %s77
  %s79 = sld [smem:[#allocation0]]
  $region166: #{factor_vae_forward.1} parent=0
    _
  %s81 = ssub.s32 1, %s79
  %s82 = scalar_select 0, %s81, %s79
  %v83 = vstv %s69
  %84 = vst [vmem:[#allocation2] sm:$0x1] %v83
  %v85 = vstv %s73
  %86 = vst [vmem:[#allocation3] sm:$0x1] %v85
  // Predicated region
  $region2: #{factor_vae_forward.1} parent=0 // pred_check
    _
  $region3: #{factor_vae_forward.1} parent=0 // pred_check_branch
    %88 = sbr.rel (0) target = $region5
  $region4: #{factor_vae_forward.1} parent=0 // pred_region
    _
  $region5: #{factor_vae_forward.1} parent=0 // pred_fallthru
    _
  // Predicated region
  $region6: #{factor_vae_forward.1} parent=0 // pred_check
    _
  $region7: #{factor_vae_forward.1} parent=0 // pred_check_branch
    %90 = sbr.rel (0) target = $region9
  $region8: #{factor_vae_forward.1} parent=0 // pred_region
    _
  $region9: #{factor_vae_forward.1} parent=0 // pred_fallthru
    _
  // Predicated region
  $region10: #{factor_vae_forward.1} parent=0 // pred_check
    _
  $region11: #{factor_vae_forward.1} parent=0 // pred_check_branch
    %92 = sbr.rel (0) target = $region13
  $region12: #{factor_vae_forward.1} parent=0 // pred_region
    _
  $region13: #{factor_vae_forward.1} parent=0 // pred_fallthru
    _
  // Predicated region
  $region14: #{factor_vae_forward.1} parent=0 // pred_check
    _
  $region15: #{factor_vae_forward.1} parent=0 // pred_check_branch
    %94 = sbr.rel (0) target = $region17
  $region16: #{factor_vae_forward.1} parent=0 // pred_region
    _
  $region17: #{factor_vae_forward.1} parent=0 // pred_fallthru
    _
  // Predicated region
  $region18: #{factor_vae_forward.1} parent=0 // pred_check
    _
  $region19: #{factor_vae_forward.1} parent=0 // pred_check_branch
    %96 = sbr.rel (0) target = $region21
  $region20: #{factor_vae_forward.1} parent=0 // pred_region
    _
  $region21: #{factor_vae_forward.1} parent=0 // pred_fallthru
    _
  // Predicated region
  $region22: #{factor_vae_forward.1} parent=0 // pred_check
    _
  $region23: #{factor_vae_forward.1} parent=0 // pred_check_branch
    %98 = sbr.rel (0) target = $region25
  $region24: #{factor_vae_forward.1} parent=0 // pred_region
    _
  $region25: #{factor_vae_forward.1} parent=0 // pred_fallthru
    _
  // Predicated region
  $region26: #{factor_vae_forward.1} parent=0 // pred_check
    _
  $region27: #{factor_vae_forward.1} parent=0 // pred_check_branch
    %100 = sbr.rel (0) target = $region29
  $region28: #{factor_vae_forward.1} parent=0 // pred_region
    _
  $region29: #{factor_vae_forward.1} parent=0 // pred_fallthru
    _
  // Predicated region
  $region30: #{factor_vae_forward.1} parent=0 // pred_check
    _
  $region31: #{factor_vae_forward.1} parent=0 // pred_check_branch
    %102 = sbr.rel (0) target = $region33
  $region32: #{factor_vae_forward.1} parent=0 // pred_region
    _
  $region33: #{factor_vae_forward.1} parent=0 // pred_fallthru
    _
  // Predicated region
  $region34: #{factor_vae_forward.1} parent=0 // pred_check
    _
  $region35: #{factor_vae_forward.1} parent=0 // pred_check_branch
    %104 = sbr.rel (0) target = $region37
  $region36: #{factor_vae_forward.1} parent=0 // pred_region
    _
  $region37: #{factor_vae_forward.1} parent=0 // pred_fallthru
    _
  // Predicated region
  $region38: #{factor_vae_forward.1} parent=0 // pred_check
    _
  $region39: #{factor_vae_forward.1} parent=0 // pred_check_branch
    %106 = sbr.rel (0) target = $region41
  $region40: #{factor_vae_forward.1} parent=0 // pred_region
    _
  $region41: #{factor_vae_forward.1} parent=0 // pred_fallthru
    _
  // Predicated region
  $region42: #{factor_vae_forward.1} parent=0 // pred_check
    _
  $region43: #{factor_vae_forward.1} parent=0 // pred_check_branch
    %108 = sbr.rel (0) target = $region45
  $region44: #{factor_vae_forward.1} parent=0 // pred_region
    _
  $region45: #{factor_vae_forward.1} parent=0 // pred_fallthru
    _
  // Predicated region
  $region46: #{factor_vae_forward.1} parent=0 // pred_check
    _
  $region47: #{factor_vae_forward.1} parent=0 // pred_check_branch
    %110 = sbr.rel (0) target = $region49
  $region48: #{factor_vae_forward.1} parent=0 // pred_region
    _
  $region49: #{factor_vae_forward.1} parent=0 // pred_fallthru
    _
  // Predicated region
  $region50: #{factor_vae_forward.1} parent=0 // pred_check
    _
  $region51: #{factor_vae_forward.1} parent=0 // pred_check_branch
    %112 = sbr.rel (0) target = $region53
  $region52: #{factor_vae_forward.1} parent=0 // pred_region
    _
  $region53: #{factor_vae_forward.1} parent=0 // pred_fallthru
    _
  // Predicated region
  $region54: #{factor_vae_forward.1} parent=0 // pred_check
    _
  $region55: #{factor_vae_forward.1} parent=0 // pred_check_branch
    %114 = sbr.rel (0) target = $region57
  $region56: #{factor_vae_forward.1} parent=0 // pred_region
    _
  $region57: #{factor_vae_forward.1} parent=0 // pred_fallthru
    _
  // Predicated region
  $region58: #{factor_vae_forward.1} parent=0 // pred_check
    _
  $region59: #{factor_vae_forward.1} parent=0 // pred_check_branch
    %116 = sbr.rel (0) target = $region61
  $region60: #{factor_vae_forward.1} parent=0 // pred_region
    _
  $region61: #{factor_vae_forward.1} parent=0 // pred_fallthru
    _
  // Predicated region
  $region62: #{factor_vae_forward.1} parent=0 // pred_check
    _
  $region63: #{factor_vae_forward.1} parent=0 // pred_check_branch
    %118 = sbr.rel (0) target = $region65
  $region64: #{factor_vae_forward.1} parent=0 // pred_region
    _
  $region65: #{factor_vae_forward.1} parent=0 // pred_fallthru
    _
  // Predicated region
  $region66: #{factor_vae_forward.1} parent=0 // pred_check
    _
  $region67: #{factor_vae_forward.1} parent=0 // pred_check_branch
    %120 = sbr.rel (0) target = $region69
  $region68: #{factor_vae_forward.1} parent=0 // pred_region
    _
  $region69: #{factor_vae_forward.1} parent=0 // pred_fallthru
    _
  // Predicated region
  $region70: #{factor_vae_forward.1} parent=0 // pred_check
    _
  $region71: #{factor_vae_forward.1} parent=0 // pred_check_branch
    %122 = sbr.rel (0) target = $region73
  $region72: #{factor_vae_forward.1} parent=0 // pred_region
    _
  $region73: #{factor_vae_forward.1} parent=0 // pred_fallthru
    _
  // Predicated region
  $region74: #{factor_vae_forward.1} parent=0 // pred_check
    _
  $region75: #{factor_vae_forward.1} parent=0 // pred_check_branch
    %124 = sbr.rel (0) target = $region77
  $region76: #{factor_vae_forward.1} parent=0 // pred_region
    _
  $region77: #{factor_vae_forward.1} parent=0 // pred_fallthru
    _
  // Predicated region
  $region78: #{factor_vae_forward.1} parent=0 // pred_check
    _
  $region79: #{factor_vae_forward.1} parent=0 // pred_check_branch
    %126 = sbr.rel (0) target = $region81
  $region80: #{factor_vae_forward.1} parent=0 // pred_region
    _
  $region81: #{factor_vae_forward.1} parent=0 // pred_fallthru
    _
  // Predicated region
  $region82: #{factor_vae_forward.1} parent=0 // pred_check
    _
  $region83: #{factor_vae_forward.1} parent=0 // pred_check_branch
    %128 = sbr.rel (0) target = $region85
  $region84: #{factor_vae_forward.1} parent=0 // pred_region
    _
  $region85: #{factor_vae_forward.1} parent=0 // pred_fallthru
    _
  // Predicated region
  $region86: #{factor_vae_forward.1} parent=0 // pred_check
    _
  $region87: #{factor_vae_forward.1} parent=0 // pred_check_branch
    %130 = sbr.rel (0) target = $region89
  $region88: #{factor_vae_forward.1} parent=0 // pred_region
    _
  $region89: #{factor_vae_forward.1} parent=0 // pred_fallthru
    _
  // Predicated region
  $region90: #{factor_vae_forward.1} parent=0 // pred_check
    _
  $region91: #{factor_vae_forward.1} parent=0 // pred_check_branch
    %132 = sbr.rel (0) target = $region93
  $region92: #{factor_vae_forward.1} parent=0 // pred_region
    _
  $region93: #{factor_vae_forward.1} parent=0 // pred_fallthru
    _
  // Predicated region
  $region94: #{factor_vae_forward.1} parent=0 // pred_check
    _
  $region95: #{factor_vae_forward.1} parent=0 // pred_check_branch
    %134 = sbr.rel (0) target = $region97
  $region96: #{factor_vae_forward.1} parent=0 // pred_region
    _
  $region97: #{factor_vae_forward.1} parent=0 // pred_fallthru
    _
  // Predicated region
  $region98: #{factor_vae_forward.1} parent=0 // pred_check
    _
  $region99: #{factor_vae_forward.1} parent=0 // pred_check_branch
    %136 = sbr.rel (0) target = $region101
  $region100: #{factor_vae_forward.1} parent=0 // pred_region
    _
  $region101: #{factor_vae_forward.1} parent=0 // pred_fallthru
    _
  // Predicated region
  $region102: #{factor_vae_forward.1} parent=0 // pred_check
    _
  $region103: #{factor_vae_forward.1} parent=0 // pred_check_branch
    %138 = sbr.rel (0) target = $region105
  $region104: #{factor_vae_forward.1} parent=0 // pred_region
    _
  $region105: #{factor_vae_forward.1} parent=0 // pred_fallthru
    _
  // Predicated region
  $region106: #{factor_vae_forward.1} parent=0 // pred_check
    _
  $region107: #{factor_vae_forward.1} parent=0 // pred_check_branch
    %140 = sbr.rel (0) target = $region109
  $region108: #{factor_vae_forward.1} parent=0 // pred_region
    _
  $region109: #{factor_vae_forward.1} parent=0 // pred_fallthru
    _
  // Predicated region
  $region110: #{factor_vae_forward.1} parent=0 // pred_check
    _
  $region111: #{factor_vae_forward.1} parent=0 // pred_check_branch
    %142 = sbr.rel (0) target = $region113
  $region112: #{factor_vae_forward.1} parent=0 // pred_region
    _
  $region113: #{factor_vae_forward.1} parent=0 // pred_fallthru
    _
  // Predicated region
  $region114: #{factor_vae_forward.1} parent=0 // pred_check
    _
  $region115: #{factor_vae_forward.1} parent=0 // pred_check_branch
    %144 = sbr.rel (0) target = $region117
  $region116: #{factor_vae_forward.1} parent=0 // pred_region
    _
  $region117: #{factor_vae_forward.1} parent=0 // pred_fallthru
    _
  // Predicated region
  $region118: #{factor_vae_forward.1} parent=0 // pred_check
    _
  $region119: #{factor_vae_forward.1} parent=0 // pred_check_branch
    %146 = sbr.rel (0) target = $region121
  $region120: #{factor_vae_forward.1} parent=0 // pred_region
    _
  $region121: #{factor_vae_forward.1} parent=0 // pred_fallthru
    _
  // Predicated region
  $region122: #{factor_vae_forward.1} parent=0 // pred_check
    _
  $region123: #{factor_vae_forward.1} parent=0 // pred_check_branch
    %148 = sbr.rel (0) target = $region125
  $region124: #{factor_vae_forward.1} parent=0 // pred_region
    _
  $region125: #{factor_vae_forward.1} parent=0 // pred_fallthru
    _
  // Predicated region
  $region126: #{factor_vae_forward.1} parent=0 // pred_check
    _
  $region127: #{factor_vae_forward.1} parent=0 // pred_check_branch
    %150 = sbr.rel (0) target = $region129
  $region128: #{factor_vae_forward.1} parent=0 // pred_region
    _
  $region129: #{factor_vae_forward.1} parent=0 // pred_fallthru
    _
  // Predicated region
  $region130: #{factor_vae_forward.1} parent=0 // pred_check
    _
  $region131: #{factor_vae_forward.1} parent=0 // pred_check_branch
    %152 = sbr.rel (0) target = $region133
  $region132: #{factor_vae_forward.1} parent=0 // pred_region
    _
  $region133: #{factor_vae_forward.1} parent=0 // pred_fallthru
    _
  // Predicated region
  $region134: #{factor_vae_forward.1} parent=0 // pred_check
    _
  $region135: #{factor_vae_forward.1} parent=0 // pred_check_branch
    %154 = sbr.rel (0) target = $region137
  $region136: #{factor_vae_forward.1} parent=0 // pred_region
    _
  $region137: #{factor_vae_forward.1} parent=0 // pred_fallthru
    _
  // Predicated region
  $region138: #{factor_vae_forward.1} parent=0 // pred_check
    _
  $region139: #{factor_vae_forward.1} parent=0 // pred_check_branch
    %156 = sbr.rel (0) target = $region141
  $region140: #{factor_vae_forward.1} parent=0 // pred_region
    _
  $region141: #{factor_vae_forward.1} parent=0 // pred_fallthru
    _
  // Predicated region
  $region142: #{factor_vae_forward.1} parent=0 // pred_check
    _
  $region143: #{factor_vae_forward.1} parent=0 // pred_check_branch
    %158 = sbr.rel (0) target = $region145
  $region144: #{factor_vae_forward.1} parent=0 // pred_region
    _
  $region145: #{factor_vae_forward.1} parent=0 // pred_fallthru
    _
  // Predicated region
  $region146: #{factor_vae_forward.1} parent=0 // pred_check
    _
  $region147: #{factor_vae_forward.1} parent=0 // pred_check_branch
    %160 = sbr.rel (0) target = $region149
  $region148: #{factor_vae_forward.1} parent=0 // pred_region
    _
  $region149: #{factor_vae_forward.1} parent=0 // pred_fallthru
    _
  %v161 = vld [vmem:[%s1] sm:$0xff]
  %v162 = vld [vmem:[%s1 + $0x8] sm:$0xff]
  %v163 = vld [vmem:[%s1 + $0x10] sm:$0xff]
  %v164 = vld [vmem:[%s1 + $0x18] sm:$0xff]
  %v165 = vld [vmem:[%s1 + $0x20] sm:$0xff]
  %v166 = vld [vmem:[%s1 + $0x28] sm:$0xff]
  %v167 = vld [vmem:[%s1 + $0x30] sm:$0xff]
  %v168 = vld [vmem:[%s1 + $0x38] sm:$0xff]
  %v169 = vld [vmem:[%s3] sm:$0xff]
  %v170 = vld [vmem:[%s3 + $0x8] sm:$0xff]
  %v171 = vld [vmem:[%s5] sm:$0x1]
  %v172 = vld [vmem:[%s7] sm:$0xff]
  %v173 = vld [vmem:[%s7 + $0x8] sm:$0xff]
  %v174 = vld [vmem:[%s9] sm:$0x1]
  %v175 = vld [vmem:[%s11] sm:$0xff]
  %v176 = vld [vmem:[%s11 + $0x8] sm:$0xff]
  %v177 = vld [vmem:[%s11 + $0x10] sm:$0xff]
  %v178 = vld [vmem:[%s11 + $0x18] sm:$0xff]
  %v179 = vld [vmem:[%s13] sm:$0x1]
  %v180 = vld [vmem:[%s15] sm:$0xff]
  %v181 = vld [vmem:[%s15 + $0x8] sm:$0xff]
  %v182 = vld [vmem:[%s15 + $0x10] sm:$0xff]
  %v183 = vld [vmem:[%s15 + $0x18] sm:$0xff]
  %v184 = vld [vmem:[%s17] sm:$0x1]
  %v185 = vld [vmem:[%s19] sm:$0xff]
  %v186 = vld [vmem:[%s19 + $0x8] sm:$0xff]
  %v187 = vld [vmem:[%s19 + $0x10] sm:$0xff]
  %v188 = vld [vmem:[%s19 + $0x18] sm:$0xff]
  %v189 = vld [vmem:[%s21] sm:$0x1]
  %v190 = vld [vmem:[%s23] sm:$0xff]
  %v191 = vld [vmem:[%s25] sm:$0xff]
  %v192 = vld [vmem:[%s25 + $0x8] sm:$0xff]
  %v193 = vld [vmem:[%s25 + $0x10] sm:$0xff]
  %v194 = vld [vmem:[%s25 + $0x18] sm:$0xff]
  %v195 = vld [vmem:[%s27] sm:$0x1]
  %v196 = vld [vmem:[%s29] sm:$0xff]
  %v197 = vld [vmem:[%s29 + $0x8] sm:$0xff]
  %v198 = vld [vmem:[%s29 + $0x10] sm:$0xff]
  %v199 = vld [vmem:[%s29 + $0x18] sm:$0xff]
  %v200 = vld [vmem:[%s31] sm:$0x1]
  %v201 = vld [vmem:[%s33] sm:$0xff]
  %v202 = vld [vmem:[%s35] sm:$0xff]
  %v203 = vld [vmem:[%s35 + $0x8] sm:$0xff]
  %v204 = vld [vmem:[%s35 + $0x10] sm:$0xff]
  %v205 = vld [vmem:[%s35 + $0x18] sm:$0xff]
  %v206 = vld [vmem:[%s37] sm:$0xf]
  %v207 = vld [vmem:[%s39] sm:$0xff]
  %v208 = vld [vmem:[%s39 + $0x8] sm:$0xff]
  %v209 = vld [vmem:[%s39 + $0x10] sm:$0xff]
  %v210 = vld [vmem:[%s39 + $0x18] sm:$0xff]
  %v211 = vld [vmem:[%s41] sm:$0x1]
  %v212 = vld [vmem:[%s43] sm:$0xff]
  %v213 = vld [vmem:[%s43 + $0x8] sm:$0xff]
  %v214 = vld [vmem:[%s43 + $0x10] sm:$0xff]
  %v215 = vld [vmem:[%s43 + $0x18] sm:$0xff]
  %v216 = vld [vmem:[%s45] sm:$0x1]
  %v217 = vld [vmem:[%s47] sm:$0xff]
  %v218 = vld [vmem:[%s47 + $0x8] sm:$0xff]
  %v219 = vld [vmem:[%s47 + $0x10] sm:$0xff]
  %v220 = vld [vmem:[%s47 + $0x18] sm:$0xff]
  %v221 = vld [vmem:[%s49] sm:$0x1]
  %v222 = vld [vmem:[%s51] sm:$0xff]
  %v223 = vld [vmem:[%s53] sm:$0x1]
  %v224 = vld [vmem:[%s55] sm:$0xff]
  %v225 = vld [vmem:[%s57] sm:$0x1]
  %v226 = vld [vmem:[%s59] sm:$0xff]
  %v227 = vld [vmem:[%s59 + $0x8] sm:$0xff]
  %v228 = vld [vmem:[%s59 + $0x10] sm:$0xff]
  %v229 = vld [vmem:[%s59 + $0x18] sm:$0xff]
  %v230 = vld [vmem:[%s61] sm:$0x1]
  %v231 = vld [vmem:[%s63] sm:$0xff]
  %v232 = vld [vmem:[%s63 + $0x8] sm:$0xff]
  %v233 = vld [vmem:[%s63 + $0x10] sm:$0xff]
  %v234 = vld [vmem:[%s63 + $0x18] sm:$0xff]
  %v235 = vld [vmem:[%s65] sm:$0x1]
  %v236 = vld [vmem:[%s67] sm:$0xff]
  %v237 = vld [vmem:[%s67 + $0x8] sm:$0xff]
  %v238 = vld [vmem:[%s67 + $0x10] sm:$0xff]
  %v239 = vld [vmem:[%s67 + $0x18] sm:$0xff]
  %v240 = vld [vmem:[#allocation2] sm:$0x1]
  %v241 = vld [vmem:[%s71] sm:$0xff]
  %v242 = vld [vmem:[%s71 + $0x8] sm:$0xff]
  %v243 = vld [vmem:[%s71 + $0x10] sm:$0xff]
  %v244 = vld [vmem:[%s71 + $0x18] sm:$0xff]
  %v245 = vld [vmem:[#allocation3] sm:$0x1]
  %v247 = vperm.slane %v171, 0
  %vm249 = vcmask 130048
  %v251 = vsel %vm249, %v161, 0
  %v254 = vsel %vm249, %v162, 0
  %v257 = vsel %vm249, %v163, 0
  %v260 = vsel %vm249, %v164, 0
  %v263 = vsel %vm249, %v165, 0
  %v266 = vsel %vm249, %v166, 0
  %v269 = vsel %vm249, %v167, 0
  %v272 = vsel %vm249, %v168, 0
  %274 = vmatpush.msra.mxu0 0.0
  %275 = vmatpush.msra.mxu0 0.0
  %276 = vmatpush.msra.mxu0 0.0
  %277 = vmatpush.msra.mxu0 0.0
  %278 = vmatpush.msra.mxu0 0.0
  %279 = vmatpush.msra.mxu0 0.0
  %280 = vmatpush.msra.mxu0 0.0
  %281 = vmatpush.msra.mxu0 0.0
  %282 = vmatpush.msra.mxu0 0.0
  %283 = vmatpush.msra.mxu0 0.0
  %284 = vmatpush.msra.mxu0 0.0
  %285 = vmatpush.msra.mxu0 0.0
  %286 = vmatpush.msra.mxu0 0.0
  %287 = vmatpush.msra.mxu0 0.0
  %288 = vmatpush.msra.mxu0 %v170
  %289 = vmatpush.msra.mxu0 %v169
  %290 = vmatmul.f32.gmra.mxu0 %v251
  %v291 = vpop.f32.mrf.mxu0
  %v292 = vadd.f32 %v247, %v291
  %293 = vmatmul.f32.gmra.mxu0 %v254
  %v294 = vpop.f32.mrf.mxu0
  %v295 = vadd.f32 %v247, %v294
  %296 = vmatmul.f32.gmra.mxu0 %v257
  %v297 = vpop.f32.mrf.mxu0
  %v298 = vadd.f32 %v247, %v297
  %299 = vmatmul.f32.gmra.mxu0 %v260
  %v300 = vpop.f32.mrf.mxu0
  %v301 = vadd.f32 %v247, %v300
  %302 = vmatmul.f32.gmra.mxu0 %v263
  %v303 = vpop.f32.mrf.mxu0
  %v304 = vadd.f32 %v247, %v303
  %305 = vmatmul.f32.gmra.mxu0 %v266
  %v306 = vpop.f32.mrf.mxu0
  %v307 = vadd.f32 %v247, %v306
  %308 = vmatmul.f32.gmra.mxu0 %v269
  %v309 = vpop.f32.mrf.mxu0
  %v310 = vadd.f32 %v247, %v309
  %311 = vmatmul.f32.gmra.mxu0 %v272
  %v312 = vpop.f32.mrf.mxu0
  %v313 = vadd.f32 %v247, %v312
  %314 = vdwg.mxu0
  %vm315 = vcmp.ge.f32.partialorder %v292, 0.0
  %vm316 = vcmp.ge.f32.partialorder %v295, 0.0
  %vm317 = vcmp.ge.f32.partialorder %v298, 0.0
  %vm318 = vcmp.ge.f32.partialorder %v301, 0.0
  %vm319 = vcmp.ge.f32.partialorder %v304, 0.0
  %vm320 = vcmp.ge.f32.partialorder %v307, 0.0
  %vm321 = vcmp.ge.f32.partialorder %v310, 0.0
  %vm322 = vcmp.ge.f32.partialorder %v313, 0.0
  %v323 = vmul.f32 %v292, 0.01
  %v324 = vmul.f32 %v295, 0.01
  %v325 = vmul.f32 %v298, 0.01
  %v326 = vmul.f32 %v301, 0.01
  %v327 = vmul.f32 %v304, 0.01
  %v328 = vmul.f32 %v307, 0.01
  %v329 = vmul.f32 %v310, 0.01
  %v330 = vmul.f32 %v313, 0.01
  %v331 = vsel %vm315, %v292, %v323
  %v332 = vsel %vm316, %v295, %v324
  %v333 = vsel %vm317, %v298, %v325
  %v334 = vsel %vm318, %v301, %v326
  %v335 = vsel %vm319, %v304, %v327
  %v336 = vsel %vm320, %v307, %v328
  %v337 = vsel %vm321, %v310, %v329
  %v338 = vsel %vm322, %v313, %v330
  %v340 = vperm.slane %v174, 0
  %v343 = vsel %vm249, %v331, 0
  %v346 = vsel %vm249, %v332, 0
  %v349 = vsel %vm249, %v333, 0
  %v352 = vsel %vm249, %v334, 0
  %v355 = vsel %vm249, %v335, 0
  %v358 = vsel %vm249, %v336, 0
  %v361 = vsel %vm249, %v337, 0
  %v364 = vsel %vm249, %v338, 0
  %366 = vmatpush.msra.mxu0 0.0
  %367 = vmatpush.msra.mxu0 0.0
  %368 = vmatpush.msra.mxu0 0.0
  %369 = vmatpush.msra.mxu0 0.0
  %370 = vmatpush.msra.mxu0 0.0
  %371 = vmatpush.msra.mxu0 0.0
  %372 = vmatpush.msra.mxu0 0.0
  %373 = vmatpush.msra.mxu0 0.0
  %374 = vmatpush.msra.mxu0 0.0
  %375 = vmatpush.msra.mxu0 0.0
  %376 = vmatpush.msra.mxu0 0.0
  %377 = vmatpush.msra.mxu0 0.0
  %378 = vmatpush.msra.mxu0 0.0
  %379 = vmatpush.msra.mxu0 0.0
  %380 = vmatpush.msra.mxu0 %v173
  %381 = vmatpush.msra.mxu0 %v172
  %382 = vmatmul.f32.gmra.mxu0 %v343
  %v383 = vpop.f32.mrf.mxu0
  %v384 = vadd.f32 %v340, %v383
  %385 = vmatmul.f32.gmra.mxu0 %v346
  %v386 = vpop.f32.mrf.mxu0
  %v387 = vadd.f32 %v340, %v386
  %388 = vmatmul.f32.gmra.mxu0 %v349
  %v389 = vpop.f32.mrf.mxu0
  %v390 = vadd.f32 %v340, %v389
  %391 = vmatmul.f32.gmra.mxu0 %v352
  %v392 = vpop.f32.mrf.mxu0
  %v393 = vadd.f32 %v340, %v392
  %394 = vmatmul.f32.gmra.mxu0 %v355
  %v395 = vpop.f32.mrf.mxu0
  %v396 = vadd.f32 %v340, %v395
  %397 = vmatmul.f32.gmra.mxu0 %v358
  %v398 = vpop.f32.mrf.mxu0
  %v399 = vadd.f32 %v340, %v398
  %400 = vmatmul.f32.gmra.mxu0 %v361
  %v401 = vpop.f32.mrf.mxu0
  %v402 = vadd.f32 %v340, %v401
  %403 = vmatmul.f32.gmra.mxu0 %v364
  %v404 = vpop.f32.mrf.mxu0
  %v405 = vadd.f32 %v340, %v404
  %406 = vdwg.mxu0
  %v408 = vperm.slane %v179, 0
  %vm410 = vcmask 261120
  %v412 = vsel %vm410, 0.0, 0
  %414 = vmatpush.msra.mxu0 0.0
  %415 = vmatpush.msra.mxu0 0.0
  %416 = vmatpush.msra.mxu0 0.0
  %417 = vmatpush.msra.mxu0 0.0
  %418 = vmatpush.msra.mxu0 0.0
  %419 = vmatpush.msra.mxu0 0.0
  %420 = vmatpush.msra.mxu0 0.0
  %421 = vmatpush.msra.mxu0 0.0
  %422 = vmatpush.msra.mxu0 0.0
  %423 = vmatpush.msra.mxu0 0.0
  %424 = vmatpush.msra.mxu0 0.0
  %425 = vmatpush.msra.mxu0 0.0
  %426 = vmatpush.msra.mxu0 %v178
  %427 = vmatpush.msra.mxu0 %v177
  %428 = vmatpush.msra.mxu0 %v176
  %429 = vmatpush.msra.mxu0 %v175
  %430 = vmatmul.f32.gmra.mxu0 %v412
  %v431 = vpop.f32.mrf.mxu0
  %v432 = vadd.f32 %v408, %v431
  %433 = vdwg.mxu0
  %v434 = vadd.f32 %v384, %v432
  %v435 = vxor.u32 %v434, 2147483648
  %v436 = vmul.f32 %v435, 1.442695
  %v437 = vpow.pop %v436
  %v438 = vadd.f32 %v437, 1.0
  %v439 = vrcp.pop %v438
  %v440 = vmul.f32 %v438, %v439
  %v441 = vsub.f32 1.0, %v440
  %v442 = vmul.f32 %v439, %v441
  %v443 = vadd.f32 %v439, %v442
  %vm444 = vweird.f32 %v438
  %vm445 = vweird.f32 %v439
  %vm446 = vmor %vm444, %vm445
  %v447 = vsel %vm446, %v439, %v443
  %v448 = vand.u32 2147483647, %v438
  %vm449 = vcmp.eq.f32.partialorder %v448, 8.507059e+37
  %v450 = vand.u32 %v438, 2147483648
  %v451 = vor.u32 1.1754944e-38, %v450
  %v452 = vsel %vm449, %v451, %v447
  %v453 = vmul.f32 1.0, %v452
  %455 = vrot.lane.b32.xlu0 %v432, 64
  %v456 = vpop.permute.xlu0 %455
  %v458 = vmul.f32 %v453, %v456
  %460 = vrot.lane.b32.xlu0 %v458, 64
  %v461 = vpop.permute.xlu0 %460
  %v463 = vadd.f32 %v384, %v461
  %v464 = vtanh.pop %v463
  %v465 = vsub.f32 1.0, %v453
  %467 = vrot.lane.b32.xlu0 %v464, 96
  %v468 = vpop.permute.xlu0 %467
  %v470 = vmul.f32 %v465, %v468
  %v471 = vmul.f32 %v453, 0.0
  %v472 = vadd.f32 %v470, %v471
  %474 = vrot.lane.b32.xlu0 %v472, 96
  %v475 = vpop.permute.xlu0 %474
  %v476 = vsel %vm410, %v475, 0
  %478 = vmatpush.msra.mxu0 0.0
  %479 = vmatpush.msra.mxu0 0.0
  %480 = vmatpush.msra.mxu0 0.0
  %481 = vmatpush.msra.mxu0 0.0
  %482 = vmatpush.msra.mxu0 0.0
  %483 = vmatpush.msra.mxu0 0.0
  %484 = vmatpush.msra.mxu0 0.0
  %485 = vmatpush.msra.mxu0 0.0
  %486 = vmatpush.msra.mxu0 0.0
  %487 = vmatpush.msra.mxu0 0.0
  %488 = vmatpush.msra.mxu0 0.0
  %489 = vmatpush.msra.mxu0 0.0
  %490 = vmatpush.msra.mxu0 %v178
  %491 = vmatpush.msra.mxu0 %v177
  %492 = vmatpush.msra.mxu0 %v176
  %493 = vmatpush.msra.mxu0 %v175
  %494 = vmatmul.f32.gmra.mxu0 %v476
  %v495 = vpop.f32.mrf.mxu0
  %v496 = vadd.f32 %v408, %v495
  %497 = vdwg.mxu0
  %v498 = vadd.f32 %v387, %v496
  %v499 = vxor.u32 %v498, 2147483648
  %v500 = vmul.f32 %v499, 1.442695
  %v501 = vpow.pop %v500
  %v502 = vadd.f32 %v501, 1.0
  %v503 = vrcp.pop %v502
  %v504 = vmul.f32 %v502, %v503
  %v505 = vsub.f32 1.0, %v504
  %v506 = vmul.f32 %v503, %v505
  %v507 = vadd.f32 %v503, %v506
  %vm508 = vweird.f32 %v502
  %vm509 = vweird.f32 %v503
  %vm510 = vmor %vm508, %vm509
  %v511 = vsel %vm510, %v503, %v507
  %v512 = vand.u32 2147483647, %v502
  %vm513 = vcmp.eq.f32.partialorder %v512, 8.507059e+37
  %v514 = vand.u32 %v502, 2147483648
  %v515 = vor.u32 1.1754944e-38, %v514
  %v516 = vsel %vm513, %v515, %v511
  %v517 = vmul.f32 1.0, %v516
  %519 = vrot.lane.b32.xlu0 %v496, 64
  %v520 = vpop.permute.xlu0 %519
  %v522 = vmul.f32 %v517, %v520
  %524 = vrot.lane.b32.xlu0 %v522, 64
  %v525 = vpop.permute.xlu0 %524
  %v527 = vadd.f32 %v387, %v525
  %v528 = vtanh.pop %v527
  %v529 = vsub.f32 1.0, %v517
  %531 = vrot.lane.b32.xlu0 %v528, 96
  %v532 = vpop.permute.xlu0 %531
  %v534 = vmul.f32 %v529, %v532
  %v535 = vmul.f32 %v517, %v472
  %v536 = vadd.f32 %v534, %v535
  %538 = vrot.lane.b32.xlu0 %v536, 96
  %v539 = vpop.permute.xlu0 %538
  %v540 = vsel %vm410, %v539, 0
  %542 = vmatpush.msra.mxu0 0.0
  %543 = vmatpush.msra.mxu0 0.0
  %544 = vmatpush.msra.mxu0 0.0
  %545 = vmatpush.msra.mxu0 0.0
  %546 = vmatpush.msra.mxu0 0.0
  %547 = vmatpush.msra.mxu0 0.0
  %548 = vmatpush.msra.mxu0 0.0
  %549 = vmatpush.msra.mxu0 0.0
  %550 = vmatpush.msra.mxu0 0.0
  %551 = vmatpush.msra.mxu0 0.0
  %552 = vmatpush.msra.mxu0 0.0
  %553 = vmatpush.msra.mxu0 0.0
  %554 = vmatpush.msra.mxu0 %v178
  %555 = vmatpush.msra.mxu0 %v177
  %556 = vmatpush.msra.mxu0 %v176
  %557 = vmatpush.msra.mxu0 %v175
  %558 = vmatmul.f32.gmra.mxu0 %v540
  %v559 = vpop.f32.mrf.mxu0
  %v560 = vadd.f32 %v408, %v559
  %561 = vdwg.mxu0
  %v562 = vadd.f32 %v390, %v560
  %v563 = vxor.u32 %v562, 2147483648
  %v564 = vmul.f32 %v563, 1.442695
  %v565 = vpow.pop %v564
  %v566 = vadd.f32 %v565, 1.0
  %v567 = vrcp.pop %v566
  %v568 = vmul.f32 %v566, %v567
  %v569 = vsub.f32 1.0, %v568
  %v570 = vmul.f32 %v567, %v569
  %v571 = vadd.f32 %v567, %v570
  %vm572 = vweird.f32 %v566
  %vm573 = vweird.f32 %v567
  %vm574 = vmor %vm572, %vm573
  %v575 = vsel %vm574, %v567, %v571
  %v576 = vand.u32 2147483647, %v566
  %vm577 = vcmp.eq.f32.partialorder %v576, 8.507059e+37
  %v578 = vand.u32 %v566, 2147483648
  %v579 = vor.u32 1.1754944e-38, %v578
  %v580 = vsel %vm577, %v579, %v575
  %v581 = vmul.f32 1.0, %v580
  %583 = vrot.lane.b32.xlu0 %v560, 64
  %v584 = vpop.permute.xlu0 %583
  %v586 = vmul.f32 %v581, %v584
  %588 = vrot.lane.b32.xlu0 %v586, 64
  %v589 = vpop.permute.xlu0 %588
  %v591 = vadd.f32 %v390, %v589
  %v592 = vtanh.pop %v591
  %v593 = vsub.f32 1.0, %v581
  %595 = vrot.lane.b32.xlu0 %v592, 96
  %v596 = vpop.permute.xlu0 %595
  %v598 = vmul.f32 %v593, %v596
  %v599 = vmul.f32 %v581, %v536
  %v600 = vadd.f32 %v598, %v599
  %602 = vrot.lane.b32.xlu0 %v600, 96
  %v603 = vpop.permute.xlu0 %602
  %v604 = vsel %vm410, %v603, 0
  %606 = vmatpush.msra.mxu0 0.0
  %607 = vmatpush.msra.mxu0 0.0
  %608 = vmatpush.msra.mxu0 0.0
  %609 = vmatpush.msra.mxu0 0.0
  %610 = vmatpush.msra.mxu0 0.0
  %611 = vmatpush.msra.mxu0 0.0
  %612 = vmatpush.msra.mxu0 0.0
  %613 = vmatpush.msra.mxu0 0.0
  %614 = vmatpush.msra.mxu0 0.0
  %615 = vmatpush.msra.mxu0 0.0
  %616 = vmatpush.msra.mxu0 0.0
  %617 = vmatpush.msra.mxu0 0.0
  %618 = vmatpush.msra.mxu0 %v178
  %619 = vmatpush.msra.mxu0 %v177
  %620 = vmatpush.msra.mxu0 %v176
  %621 = vmatpush.msra.mxu0 %v175
  %622 = vmatmul.f32.gmra.mxu0 %v604
  %v623 = vpop.f32.mrf.mxu0
  %v624 = vadd.f32 %v408, %v623
  %625 = vdwg.mxu0
  %v626 = vadd.f32 %v393, %v624
  %v627 = vxor.u32 %v626, 2147483648
  %v628 = vmul.f32 %v627, 1.442695
  %v629 = vpow.pop %v628
  %v630 = vadd.f32 %v629, 1.0
  %v631 = vrcp.pop %v630
  %v632 = vmul.f32 %v630, %v631
  %v633 = vsub.f32 1.0, %v632
  %v634 = vmul.f32 %v631, %v633
  %v635 = vadd.f32 %v631, %v634
  %vm636 = vweird.f32 %v630
  %vm637 = vweird.f32 %v631
  %vm638 = vmor %vm636, %vm637
  %v639 = vsel %vm638, %v631, %v635
  %v640 = vand.u32 2147483647, %v630
  %vm641 = vcmp.eq.f32.partialorder %v640, 8.507059e+37
  %v642 = vand.u32 %v630, 2147483648
  %v643 = vor.u32 1.1754944e-38, %v642
  %v644 = vsel %vm641, %v643, %v639
  %v645 = vmul.f32 1.0, %v644
  %647 = vrot.lane.b32.xlu0 %v624, 64
  %v648 = vpop.permute.xlu0 %647
  %v650 = vmul.f32 %v645, %v648
  %652 = vrot.lane.b32.xlu0 %v650, 64
  %v653 = vpop.permute.xlu0 %652
  %v655 = vadd.f32 %v393, %v653
  %v656 = vtanh.pop %v655
  %v657 = vsub.f32 1.0, %v645
  %659 = vrot.lane.b32.xlu0 %v656, 96
  %v660 = vpop.permute.xlu0 %659
  %v662 = vmul.f32 %v657, %v660
  %v663 = vmul.f32 %v645, %v600
  %v664 = vadd.f32 %v662, %v663
  %666 = vrot.lane.b32.xlu0 %v664, 96
  %v667 = vpop.permute.xlu0 %666
  %v668 = vsel %vm410, %v667, 0
  %670 = vmatpush.msra.mxu0 0.0
  %671 = vmatpush.msra.mxu0 0.0
  %672 = vmatpush.msra.mxu0 0.0
  %673 = vmatpush.msra.mxu0 0.0
  %674 = vmatpush.msra.mxu0 0.0
  %675 = vmatpush.msra.mxu0 0.0
  %676 = vmatpush.msra.mxu0 0.0
  %677 = vmatpush.msra.mxu0 0.0
  %678 = vmatpush.msra.mxu0 0.0
  %679 = vmatpush.msra.mxu0 0.0
  %680 = vmatpush.msra.mxu0 0.0
  %681 = vmatpush.msra.mxu0 0.0
  %682 = vmatpush.msra.mxu0 %v178
  %683 = vmatpush.msra.mxu0 %v177
  %684 = vmatpush.msra.mxu0 %v176
  %685 = vmatpush.msra.mxu0 %v175
  %686 = vmatmul.f32.gmra.mxu0 %v668
  %v687 = vpop.f32.mrf.mxu0
  %v688 = vadd.f32 %v408, %v687
  %689 = vdwg.mxu0
  %v690 = vadd.f32 %v396, %v688
  %v691 = vxor.u32 %v690, 2147483648
  %v692 = vmul.f32 %v691, 1.442695
  %v693 = vpow.pop %v692
  %v694 = vadd.f32 %v693, 1.0
  %v695 = vrcp.pop %v694
  %v696 = vmul.f32 %v694, %v695
  %v697 = vsub.f32 1.0, %v696
  %v698 = vmul.f32 %v695, %v697
  %v699 = vadd.f32 %v695, %v698
  %vm700 = vweird.f32 %v694
  %vm701 = vweird.f32 %v695
  %vm702 = vmor %vm700, %vm701
  %v703 = vsel %vm702, %v695, %v699
  %v704 = vand.u32 2147483647, %v694
  %vm705 = vcmp.eq.f32.partialorder %v704, 8.507059e+37
  %v706 = vand.u32 %v694, 2147483648
  %v707 = vor.u32 1.1754944e-38, %v706
  %v708 = vsel %vm705, %v707, %v703
  %v709 = vmul.f32 1.0, %v708
  %711 = vrot.lane.b32.xlu0 %v688, 64
  %v712 = vpop.permute.xlu0 %711
  %v714 = vmul.f32 %v709, %v712
  %716 = vrot.lane.b32.xlu0 %v714, 64
  %v717 = vpop.permute.xlu0 %716
  %v719 = vadd.f32 %v396, %v717
  %v720 = vtanh.pop %v719
  %v721 = vsub.f32 1.0, %v709
  %723 = vrot.lane.b32.xlu0 %v720, 96
  %v724 = vpop.permute.xlu0 %723
  %v726 = vmul.f32 %v721, %v724
  %v727 = vmul.f32 %v709, %v664
  %v728 = vadd.f32 %v726, %v727
  %730 = vrot.lane.b32.xlu0 %v728, 96
  %v731 = vpop.permute.xlu0 %730
  %v732 = vsel %vm410, %v731, 0
  %734 = vmatpush.msra.mxu0 0.0
  %735 = vmatpush.msra.mxu0 0.0
  %736 = vmatpush.msra.mxu0 0.0
  %737 = vmatpush.msra.mxu0 0.0
  %738 = vmatpush.msra.mxu0 0.0
  %739 = vmatpush.msra.mxu0 0.0
  %740 = vmatpush.msra.mxu0 0.0
  %741 = vmatpush.msra.mxu0 0.0
  %742 = vmatpush.msra.mxu0 0.0
  %743 = vmatpush.msra.mxu0 0.0
  %744 = vmatpush.msra.mxu0 0.0
  %745 = vmatpush.msra.mxu0 0.0
  %746 = vmatpush.msra.mxu0 %v178
  %747 = vmatpush.msra.mxu0 %v177
  %748 = vmatpush.msra.mxu0 %v176
  %749 = vmatpush.msra.mxu0 %v175
  %750 = vmatmul.f32.gmra.mxu0 %v732
  %v751 = vpop.f32.mrf.mxu0
  %v752 = vadd.f32 %v408, %v751
  %753 = vdwg.mxu0
  %v754 = vadd.f32 %v399, %v752
  %v755 = vxor.u32 %v754, 2147483648
  %v756 = vmul.f32 %v755, 1.442695
  %v757 = vpow.pop %v756
  %v758 = vadd.f32 %v757, 1.0
  %v759 = vrcp.pop %v758
  %v760 = vmul.f32 %v758, %v759
  %v761 = vsub.f32 1.0, %v760
  %v762 = vmul.f32 %v759, %v761
  %v763 = vadd.f32 %v759, %v762
  %vm764 = vweird.f32 %v758
  %vm765 = vweird.f32 %v759
  %vm766 = vmor %vm764, %vm765
  %v767 = vsel %vm766, %v759, %v763
  %v768 = vand.u32 2147483647, %v758
  %vm769 = vcmp.eq.f32.partialorder %v768, 8.507059e+37
  %v770 = vand.u32 %v758, 2147483648
  %v771 = vor.u32 1.1754944e-38, %v770
  %v772 = vsel %vm769, %v771, %v767
  %v773 = vmul.f32 1.0, %v772
  %775 = vrot.lane.b32.xlu0 %v752, 64
  %v776 = vpop.permute.xlu0 %775
  %v778 = vmul.f32 %v773, %v776
  %780 = vrot.lane.b32.xlu0 %v778, 64
  %v781 = vpop.permute.xlu0 %780
  %v783 = vadd.f32 %v399, %v781
  %v784 = vtanh.pop %v783
  %v785 = vsub.f32 1.0, %v773
  %787 = vrot.lane.b32.xlu0 %v784, 96
  %v788 = vpop.permute.xlu0 %787
  %v790 = vmul.f32 %v785, %v788
  %v791 = vmul.f32 %v773, %v728
  %v792 = vadd.f32 %v790, %v791
  %794 = vrot.lane.b32.xlu0 %v792, 96
  %v795 = vpop.permute.xlu0 %794
  %v796 = vsel %vm410, %v795, 0
  %798 = vmatpush.msra.mxu0 0.0
  %799 = vmatpush.msra.mxu0 0.0
  %800 = vmatpush.msra.mxu0 0.0
  %801 = vmatpush.msra.mxu0 0.0
  %802 = vmatpush.msra.mxu0 0.0
  %803 = vmatpush.msra.mxu0 0.0
  %804 = vmatpush.msra.mxu0 0.0
  %805 = vmatpush.msra.mxu0 0.0
  %806 = vmatpush.msra.mxu0 0.0
  %807 = vmatpush.msra.mxu0 0.0
  %808 = vmatpush.msra.mxu0 0.0
  %809 = vmatpush.msra.mxu0 0.0
  %810 = vmatpush.msra.mxu0 %v178
  %811 = vmatpush.msra.mxu0 %v177
  %812 = vmatpush.msra.mxu0 %v176
  %813 = vmatpush.msra.mxu0 %v175
  %814 = vmatmul.f32.gmra.mxu0 %v796
  %v815 = vpop.f32.mrf.mxu0
  %v816 = vadd.f32 %v408, %v815
  %817 = vdwg.mxu0
  %v818 = vadd.f32 %v402, %v816
  %v819 = vxor.u32 %v818, 2147483648
  %v820 = vmul.f32 %v819, 1.442695
  %v821 = vpow.pop %v820
  %v822 = vadd.f32 %v821, 1.0
  %v823 = vrcp.pop %v822
  %v824 = vmul.f32 %v822, %v823
  %v825 = vsub.f32 1.0, %v824
  %v826 = vmul.f32 %v823, %v825
  %v827 = vadd.f32 %v823, %v826
  %vm828 = vweird.f32 %v822
  %vm829 = vweird.f32 %v823
  %vm830 = vmor %vm828, %vm829
  %v831 = vsel %vm830, %v823, %v827
  %v832 = vand.u32 2147483647, %v822
  %vm833 = vcmp.eq.f32.partialorder %v832, 8.507059e+37
  %v834 = vand.u32 %v822, 2147483648
  %v835 = vor.u32 1.1754944e-38, %v834
  %v836 = vsel %vm833, %v835, %v831
  %v837 = vmul.f32 1.0, %v836
  %839 = vrot.lane.b32.xlu0 %v816, 64
  %v840 = vpop.permute.xlu0 %839
  %v842 = vmul.f32 %v837, %v840
  %844 = vrot.lane.b32.xlu0 %v842, 64
  %v845 = vpop.permute.xlu0 %844
  %v847 = vadd.f32 %v402, %v845
  %v848 = vtanh.pop %v847
  %v849 = vsub.f32 1.0, %v837
  %851 = vrot.lane.b32.xlu0 %v848, 96
  %v852 = vpop.permute.xlu0 %851
  %v854 = vmul.f32 %v849, %v852
  %v855 = vmul.f32 %v837, %v792
  %v856 = vadd.f32 %v854, %v855
  %858 = vrot.lane.b32.xlu0 %v856, 96
  %v859 = vpop.permute.xlu0 %858
  %v860 = vsel %vm410, %v859, 0
  %862 = vmatpush.msra.mxu0 0.0
  %863 = vmatpush.msra.mxu0 0.0
  %864 = vmatpush.msra.mxu0 0.0
  %865 = vmatpush.msra.mxu0 0.0
  %866 = vmatpush.msra.mxu0 0.0
  %867 = vmatpush.msra.mxu0 0.0
  %868 = vmatpush.msra.mxu0 0.0
  %869 = vmatpush.msra.mxu0 0.0
  %870 = vmatpush.msra.mxu0 0.0
  %871 = vmatpush.msra.mxu0 0.0
  %872 = vmatpush.msra.mxu0 0.0
  %873 = vmatpush.msra.mxu0 0.0
  %874 = vmatpush.msra.mxu0 %v178
  %875 = vmatpush.msra.mxu0 %v177
  %876 = vmatpush.msra.mxu0 %v176
  %877 = vmatpush.msra.mxu0 %v175
  %878 = vmatmul.f32.gmra.mxu0 %v860
  %v879 = vpop.f32.mrf.mxu0
  %v880 = vadd.f32 %v408, %v879
  %881 = vdwg.mxu0
  %v882 = vadd.f32 %v405, %v880
  %v883 = vxor.u32 %v882, 2147483648
  %v884 = vmul.f32 %v883, 1.442695
  %v885 = vpow.pop %v884
  %v886 = vadd.f32 %v885, 1.0
  %v887 = vrcp.pop %v886
  %v888 = vmul.f32 %v886, %v887
  %v889 = vsub.f32 1.0, %v888
  %v890 = vmul.f32 %v887, %v889
  %v891 = vadd.f32 %v887, %v890
  %vm892 = vweird.f32 %v886
  %vm893 = vweird.f32 %v887
  %vm894 = vmor %vm892, %vm893
  %v895 = vsel %vm894, %v887, %v891
  %v896 = vand.u32 2147483647, %v886
  %vm897 = vcmp.eq.f32.partialorder %v896, 8.507059e+37
  %v898 = vand.u32 %v886, 2147483648
  %v899 = vor.u32 1.1754944e-38, %v898
  %v900 = vsel %vm897, %v899, %v895
  %v901 = vmul.f32 1.0, %v900
  %903 = vrot.lane.b32.xlu0 %v880, 64
  %v904 = vpop.permute.xlu0 %903
  %v906 = vmul.f32 %v901, %v904
  %908 = vrot.lane.b32.xlu0 %v906, 64
  %v909 = vpop.permute.xlu0 %908
  %v911 = vadd.f32 %v405, %v909
  %v912 = vtanh.pop %v911
  %v913 = vsub.f32 1.0, %v901
  %915 = vrot.lane.b32.xlu0 %v912, 96
  %v916 = vpop.permute.xlu0 %915
  %v918 = vmul.f32 %v913, %v916
  %v919 = vmul.f32 %v901, %v856
  %v920 = vadd.f32 %v918, %v919
  %v922 = vperm.slane %v184, 0
  %925 = vrot.lane.b32.xlu0 %v920, 96
  %v926 = vpop.permute.xlu0 %925
  %v927 = vsel %vm410, %v926, 0
  %929 = vmatpush.msra.mxu0 0.0
  %930 = vmatpush.msra.mxu0 0.0
  %931 = vmatpush.msra.mxu0 0.0
  %932 = vmatpush.msra.mxu0 0.0
  %933 = vmatpush.msra.mxu0 0.0
  %934 = vmatpush.msra.mxu0 0.0
  %935 = vmatpush.msra.mxu0 0.0
  %936 = vmatpush.msra.mxu0 0.0
  %937 = vmatpush.msra.mxu0 0.0
  %938 = vmatpush.msra.mxu0 0.0
  %939 = vmatpush.msra.mxu0 0.0
  %940 = vmatpush.msra.mxu0 0.0
  %941 = vmatpush.msra.mxu0 %v183
  %942 = vmatpush.msra.mxu0 %v182
  %943 = vmatpush.msra.mxu0 %v181
  %944 = vmatpush.msra.mxu0 %v180
  %945 = vmatmul.f32.gmra.mxu0 %v476
  %v946 = vpop.f32.mrf.mxu0
  %v947 = vadd.f32 %v922, %v946
  %948 = vmatmul.f32.gmra.mxu0 %v540
  %v949 = vpop.f32.mrf.mxu0
  %v950 = vadd.f32 %v922, %v949
  %951 = vmatmul.f32.gmra.mxu0 %v604
  %v952 = vpop.f32.mrf.mxu0
  %v953 = vadd.f32 %v922, %v952
  %954 = vmatmul.f32.gmra.mxu0 %v668
  %v955 = vpop.f32.mrf.mxu0
  %v956 = vadd.f32 %v922, %v955
  %957 = vmatmul.f32.gmra.mxu0 %v732
  %v958 = vpop.f32.mrf.mxu0
  %v959 = vadd.f32 %v922, %v958
  %960 = vmatmul.f32.gmra.mxu0 %v796
  %v961 = vpop.f32.mrf.mxu0
  %v962 = vadd.f32 %v922, %v961
  %963 = vmatmul.f32.gmra.mxu0 %v860
  %v964 = vpop.f32.mrf.mxu0
  %v965 = vadd.f32 %v922, %v964
  %966 = vmatmul.f32.gmra.mxu0 %v927
  %v967 = vpop.f32.mrf.mxu0
  %v968 = vadd.f32 %v922, %v967
  %969 = vdwg.mxu0
  %v971 = vperm.slane %v189, 0
  %973 = vmatpush.msra.mxu0 0.0
  %974 = vmatpush.msra.mxu0 0.0
  %975 = vmatpush.msra.mxu0 0.0
  %976 = vmatpush.msra.mxu0 0.0
  %977 = vmatpush.msra.mxu0 0.0
  %978 = vmatpush.msra.mxu0 0.0
  %979 = vmatpush.msra.mxu0 0.0
  %980 = vmatpush.msra.mxu0 0.0
  %981 = vmatpush.msra.mxu0 0.0
  %982 = vmatpush.msra.mxu0 0.0
  %983 = vmatpush.msra.mxu0 0.0
  %984 = vmatpush.msra.mxu0 0.0
  %985 = vmatpush.msra.mxu0 %v188
  %986 = vmatpush.msra.mxu0 %v187
  %987 = vmatpush.msra.mxu0 %v186
  %988 = vmatpush.msra.mxu0 %v185
  %989 = vmatmul.f32.gmra.mxu0 %v412
  %v990 = vpop.f32.mrf.mxu0
  %v991 = vadd.f32 %v971, %v990
  %992 = vdwg.mxu0
  %v993 = vadd.f32 %v947, %v991
  %v994 = vxor.u32 %v993, 2147483648
  %v995 = vmul.f32 %v994, 1.442695
  %v996 = vpow.pop %v995
  %v997 = vadd.f32 %v996, 1.0
  %v998 = vrcp.pop %v997
  %v999 = vmul.f32 %v997, %v998
  %v1000 = vsub.f32 1.0, %v999
  %v1001 = vmul.f32 %v998, %v1000
  %v1002 = vadd.f32 %v998, %v1001
  %vm1003 = vweird.f32 %v997
  %vm1004 = vweird.f32 %v998
  %vm1005 = vmor %vm1003, %vm1004
  %v1006 = vsel %vm1005, %v998, %v1002
  %v1007 = vand.u32 2147483647, %v997
  %vm1008 = vcmp.eq.f32.partialorder %v1007, 8.507059e+37
  %v1009 = vand.u32 %v997, 2147483648
  %v1010 = vor.u32 1.1754944e-38, %v1009
  %v1011 = vsel %vm1008, %v1010, %v1006
  %v1012 = vmul.f32 1.0, %v1011
  %1014 = vrot.lane.b32.xlu0 %v991, 64
  %v1015 = vpop.permute.xlu0 %1014
  %v1017 = vmul.f32 %v1012, %v1015
  %1019 = vrot.lane.b32.xlu0 %v1017, 64
  %v1020 = vpop.permute.xlu0 %1019
  %v1022 = vadd.f32 %v947, %v1020
  %v1023 = vtanh.pop %v1022
  %v1024 = vsub.f32 1.0, %v1012
  %1026 = vrot.lane.b32.xlu0 %v1023, 96
  %v1027 = vpop.permute.xlu0 %1026
  %v1029 = vmul.f32 %v1024, %v1027
  %v1030 = vmul.f32 %v1012, 0.0
  %v1031 = vadd.f32 %v1029, %v1030
  %1033 = vrot.lane.b32.xlu0 %v1031, 96
  %v1034 = vpop.permute.xlu0 %1033
  %v1035 = vsel %vm410, %v1034, 0
  %1037 = vmatpush.msra.mxu0 0.0
  %1038 = vmatpush.msra.mxu0 0.0
  %1039 = vmatpush.msra.mxu0 0.0
  %1040 = vmatpush.msra.mxu0 0.0
  %1041 = vmatpush.msra.mxu0 0.0
  %1042 = vmatpush.msra.mxu0 0.0
  %1043 = vmatpush.msra.mxu0 0.0
  %1044 = vmatpush.msra.mxu0 0.0
  %1045 = vmatpush.msra.mxu0 0.0
  %1046 = vmatpush.msra.mxu0 0.0
  %1047 = vmatpush.msra.mxu0 0.0
  %1048 = vmatpush.msra.mxu0 0.0
  %1049 = vmatpush.msra.mxu0 %v188
  %1050 = vmatpush.msra.mxu0 %v187
  %1051 = vmatpush.msra.mxu0 %v186
  %1052 = vmatpush.msra.mxu0 %v185
  %1053 = vmatmul.f32.gmra.mxu0 %v1035
  %v1054 = vpop.f32.mrf.mxu0
  %v1055 = vadd.f32 %v971, %v1054
  %1056 = vdwg.mxu0
  %v1057 = vadd.f32 %v950, %v1055
  %v1058 = vxor.u32 %v1057, 2147483648
  %v1059 = vmul.f32 %v1058, 1.442695
  %v1060 = vpow.pop %v1059
  %v1061 = vadd.f32 %v1060, 1.0
  %v1062 = vrcp.pop %v1061
  %v1063 = vmul.f32 %v1061, %v1062
  %v1064 = vsub.f32 1.0, %v1063
  %v1065 = vmul.f32 %v1062, %v1064
  %v1066 = vadd.f32 %v1062, %v1065
  %vm1067 = vweird.f32 %v1061
  %vm1068 = vweird.f32 %v1062
  %vm1069 = vmor %vm1067, %vm1068
  %v1070 = vsel %vm1069, %v1062, %v1066
  %v1071 = vand.u32 2147483647, %v1061
  %vm1072 = vcmp.eq.f32.partialorder %v1071, 8.507059e+37
  %v1073 = vand.u32 %v1061, 2147483648
  %v1074 = vor.u32 1.1754944e-38, %v1073
  %v1075 = vsel %vm1072, %v1074, %v1070
  %v1076 = vmul.f32 1.0, %v1075
  %1078 = vrot.lane.b32.xlu0 %v1055, 64
  %v1079 = vpop.permute.xlu0 %1078
  %v1081 = vmul.f32 %v1076, %v1079
  %1083 = vrot.lane.b32.xlu0 %v1081, 64
  %v1084 = vpop.permute.xlu0 %1083
  %v1086 = vadd.f32 %v950, %v1084
  %v1087 = vtanh.pop %v1086
  %v1088 = vsub.f32 1.0, %v1076
  %1090 = vrot.lane.b32.xlu0 %v1087, 96
  %v1091 = vpop.permute.xlu0 %1090
  %v1093 = vmul.f32 %v1088, %v1091
  %v1094 = vmul.f32 %v1076, %v1031
  %v1095 = vadd.f32 %v1093, %v1094
  %1097 = vrot.lane.b32.xlu0 %v1095, 96
  %v1098 = vpop.permute.xlu0 %1097
  %v1099 = vsel %vm410, %v1098, 0
  %1101 = vmatpush.msra.mxu0 0.0
  %1102 = vmatpush.msra.mxu0 0.0
  %1103 = vmatpush.msra.mxu0 0.0
  %1104 = vmatpush.msra.mxu0 0.0
  %1105 = vmatpush.msra.mxu0 0.0
  %1106 = vmatpush.msra.mxu0 0.0
  %1107 = vmatpush.msra.mxu0 0.0
  %1108 = vmatpush.msra.mxu0 0.0
  %1109 = vmatpush.msra.mxu0 0.0
  %1110 = vmatpush.msra.mxu0 0.0
  %1111 = vmatpush.msra.mxu0 0.0
  %1112 = vmatpush.msra.mxu0 0.0
  %1113 = vmatpush.msra.mxu0 %v188
  %1114 = vmatpush.msra.mxu0 %v187
  %1115 = vmatpush.msra.mxu0 %v186
  %1116 = vmatpush.msra.mxu0 %v185
  %1117 = vmatmul.f32.gmra.mxu0 %v1099
  %v1118 = vpop.f32.mrf.mxu0
  %v1119 = vadd.f32 %v971, %v1118
  %1120 = vdwg.mxu0
  %v1121 = vadd.f32 %v953, %v1119
  %v1122 = vxor.u32 %v1121, 2147483648
  %v1123 = vmul.f32 %v1122, 1.442695
  %v1124 = vpow.pop %v1123
  %v1125 = vadd.f32 %v1124, 1.0
  %v1126 = vrcp.pop %v1125
  %v1127 = vmul.f32 %v1125, %v1126
  %v1128 = vsub.f32 1.0, %v1127
  %v1129 = vmul.f32 %v1126, %v1128
  %v1130 = vadd.f32 %v1126, %v1129
  %vm1131 = vweird.f32 %v1125
  %vm1132 = vweird.f32 %v1126
  %vm1133 = vmor %vm1131, %vm1132
  %v1134 = vsel %vm1133, %v1126, %v1130
  %v1135 = vand.u32 2147483647, %v1125
  %vm1136 = vcmp.eq.f32.partialorder %v1135, 8.507059e+37
  %v1137 = vand.u32 %v1125, 2147483648
  %v1138 = vor.u32 1.1754944e-38, %v1137
  %v1139 = vsel %vm1136, %v1138, %v1134
  %v1140 = vmul.f32 1.0, %v1139
  %1142 = vrot.lane.b32.xlu0 %v1119, 64
  %v1143 = vpop.permute.xlu0 %1142
  %v1145 = vmul.f32 %v1140, %v1143
  %1147 = vrot.lane.b32.xlu0 %v1145, 64
  %v1148 = vpop.permute.xlu0 %1147
  %v1150 = vadd.f32 %v953, %v1148
  %v1151 = vtanh.pop %v1150
  %v1152 = vsub.f32 1.0, %v1140
  %1154 = vrot.lane.b32.xlu0 %v1151, 96
  %v1155 = vpop.permute.xlu0 %1154
  %v1157 = vmul.f32 %v1152, %v1155
  %v1158 = vmul.f32 %v1140, %v1095
  %v1159 = vadd.f32 %v1157, %v1158
  %1161 = vrot.lane.b32.xlu0 %v1159, 96
  %v1162 = vpop.permute.xlu0 %1161
  %v1163 = vsel %vm410, %v1162, 0
  %1165 = vmatpush.msra.mxu0 0.0
  %1166 = vmatpush.msra.mxu0 0.0
  %1167 = vmatpush.msra.mxu0 0.0
  %1168 = vmatpush.msra.mxu0 0.0
  %1169 = vmatpush.msra.mxu0 0.0
  %1170 = vmatpush.msra.mxu0 0.0
  %1171 = vmatpush.msra.mxu0 0.0
  %1172 = vmatpush.msra.mxu0 0.0
  %1173 = vmatpush.msra.mxu0 0.0
  %1174 = vmatpush.msra.mxu0 0.0
  %1175 = vmatpush.msra.mxu0 0.0
  %1176 = vmatpush.msra.mxu0 0.0
  %1177 = vmatpush.msra.mxu0 %v188
  %1178 = vmatpush.msra.mxu0 %v187
  %1179 = vmatpush.msra.mxu0 %v186
  %1180 = vmatpush.msra.mxu0 %v185
  %1181 = vmatmul.f32.gmra.mxu0 %v1163
  %v1182 = vpop.f32.mrf.mxu0
  %v1183 = vadd.f32 %v971, %v1182
  %1184 = vdwg.mxu0
  %v1185 = vadd.f32 %v956, %v1183
  %v1186 = vxor.u32 %v1185, 2147483648
  %v1187 = vmul.f32 %v1186, 1.442695
  %v1188 = vpow.pop %v1187
  %v1189 = vadd.f32 %v1188, 1.0
  %v1190 = vrcp.pop %v1189
  %v1191 = vmul.f32 %v1189, %v1190
  %v1192 = vsub.f32 1.0, %v1191
  %v1193 = vmul.f32 %v1190, %v1192
  %v1194 = vadd.f32 %v1190, %v1193
  %vm1195 = vweird.f32 %v1189
  %vm1196 = vweird.f32 %v1190
  %vm1197 = vmor %vm1195, %vm1196
  %v1198 = vsel %vm1197, %v1190, %v1194
  %v1199 = vand.u32 2147483647, %v1189
  %vm1200 = vcmp.eq.f32.partialorder %v1199, 8.507059e+37
  %v1201 = vand.u32 %v1189, 2147483648
  %v1202 = vor.u32 1.1754944e-38, %v1201
  %v1203 = vsel %vm1200, %v1202, %v1198
  %v1204 = vmul.f32 1.0, %v1203
  %1206 = vrot.lane.b32.xlu0 %v1183, 64
  %v1207 = vpop.permute.xlu0 %1206
  %v1209 = vmul.f32 %v1204, %v1207
  %1211 = vrot.lane.b32.xlu0 %v1209, 64
  %v1212 = vpop.permute.xlu0 %1211
  %v1214 = vadd.f32 %v956, %v1212
  %v1215 = vtanh.pop %v1214
  %v1216 = vsub.f32 1.0, %v1204
  %1218 = vrot.lane.b32.xlu0 %v1215, 96
  %v1219 = vpop.permute.xlu0 %1218
  %v1221 = vmul.f32 %v1216, %v1219
  %v1222 = vmul.f32 %v1204, %v1159
  %v1223 = vadd.f32 %v1221, %v1222
  %1225 = vrot.lane.b32.xlu0 %v1223, 96
  %v1226 = vpop.permute.xlu0 %1225
  %v1227 = vsel %vm410, %v1226, 0
  %1229 = vmatpush.msra.mxu0 0.0
  %1230 = vmatpush.msra.mxu0 0.0
  %1231 = vmatpush.msra.mxu0 0.0
  %1232 = vmatpush.msra.mxu0 0.0
  %1233 = vmatpush.msra.mxu0 0.0
  %1234 = vmatpush.msra.mxu0 0.0
  %1235 = vmatpush.msra.mxu0 0.0
  %1236 = vmatpush.msra.mxu0 0.0
  %1237 = vmatpush.msra.mxu0 0.0
  %1238 = vmatpush.msra.mxu0 0.0
  %1239 = vmatpush.msra.mxu0 0.0
  %1240 = vmatpush.msra.mxu0 0.0
  %1241 = vmatpush.msra.mxu0 %v188
  %1242 = vmatpush.msra.mxu0 %v187
  %1243 = vmatpush.msra.mxu0 %v186
  %1244 = vmatpush.msra.mxu0 %v185
  %1245 = vmatmul.f32.gmra.mxu0 %v1227
  %v1246 = vpop.f32.mrf.mxu0
  %v1247 = vadd.f32 %v971, %v1246
  %1248 = vdwg.mxu0
  %v1249 = vadd.f32 %v959, %v1247
  %v1250 = vxor.u32 %v1249, 2147483648
  %v1251 = vmul.f32 %v1250, 1.442695
  %v1252 = vpow.pop %v1251
  %v1253 = vadd.f32 %v1252, 1.0
  %v1254 = vrcp.pop %v1253
  %v1255 = vmul.f32 %v1253, %v1254
  %v1256 = vsub.f32 1.0, %v1255
  %v1257 = vmul.f32 %v1254, %v1256
  %v1258 = vadd.f32 %v1254, %v1257
  %vm1259 = vweird.f32 %v1253
  %vm1260 = vweird.f32 %v1254
  %vm1261 = vmor %vm1259, %vm1260
  %v1262 = vsel %vm1261, %v1254, %v1258
  %v1263 = vand.u32 2147483647, %v1253
  %vm1264 = vcmp.eq.f32.partialorder %v1263, 8.507059e+37
  %v1265 = vand.u32 %v1253, 2147483648
  %v1266 = vor.u32 1.1754944e-38, %v1265
  %v1267 = vsel %vm1264, %v1266, %v1262
  %v1268 = vmul.f32 1.0, %v1267
  %1270 = vrot.lane.b32.xlu0 %v1247, 64
  %v1271 = vpop.permute.xlu0 %1270
  %v1273 = vmul.f32 %v1268, %v1271
  %1275 = vrot.lane.b32.xlu0 %v1273, 64
  %v1276 = vpop.permute.xlu0 %1275
  %v1278 = vadd.f32 %v959, %v1276
  %v1279 = vtanh.pop %v1278
  %v1280 = vsub.f32 1.0, %v1268
  %1282 = vrot.lane.b32.xlu0 %v1279, 96
  %v1283 = vpop.permute.xlu0 %1282
  %v1285 = vmul.f32 %v1280, %v1283
  %v1286 = vmul.f32 %v1268, %v1223
  %v1287 = vadd.f32 %v1285, %v1286
  %1289 = vrot.lane.b32.xlu0 %v1287, 96
  %v1290 = vpop.permute.xlu0 %1289
  %v1291 = vsel %vm410, %v1290, 0
  %1293 = vmatpush.msra.mxu0 0.0
  %1294 = vmatpush.msra.mxu0 0.0
  %1295 = vmatpush.msra.mxu0 0.0
  %1296 = vmatpush.msra.mxu0 0.0
  %1297 = vmatpush.msra.mxu0 0.0
  %1298 = vmatpush.msra.mxu0 0.0
  %1299 = vmatpush.msra.mxu0 0.0
  %1300 = vmatpush.msra.mxu0 0.0
  %1301 = vmatpush.msra.mxu0 0.0
  %1302 = vmatpush.msra.mxu0 0.0
  %1303 = vmatpush.msra.mxu0 0.0
  %1304 = vmatpush.msra.mxu0 0.0
  %1305 = vmatpush.msra.mxu0 %v188
  %1306 = vmatpush.msra.mxu0 %v187
  %1307 = vmatpush.msra.mxu0 %v186
  %1308 = vmatpush.msra.mxu0 %v185
  %1309 = vmatmul.f32.gmra.mxu0 %v1291
  %v1310 = vpop.f32.mrf.mxu0
  %v1311 = vadd.f32 %v971, %v1310
  %1312 = vdwg.mxu0
  %v1313 = vadd.f32 %v962, %v1311
  %v1314 = vxor.u32 %v1313, 2147483648
  %v1315 = vmul.f32 %v1314, 1.442695
  %v1316 = vpow.pop %v1315
  %v1317 = vadd.f32 %v1316, 1.0
  %v1318 = vrcp.pop %v1317
  %v1319 = vmul.f32 %v1317, %v1318
  %v1320 = vsub.f32 1.0, %v1319
  %v1321 = vmul.f32 %v1318, %v1320
  %v1322 = vadd.f32 %v1318, %v1321
  %vm1323 = vweird.f32 %v1317
  %vm1324 = vweird.f32 %v1318
  %vm1325 = vmor %vm1323, %vm1324
  %v1326 = vsel %vm1325, %v1318, %v1322
  %v1327 = vand.u32 2147483647, %v1317
  %vm1328 = vcmp.eq.f32.partialorder %v1327, 8.507059e+37
  %v1329 = vand.u32 %v1317, 2147483648
  %v1330 = vor.u32 1.1754944e-38, %v1329
  %v1331 = vsel %vm1328, %v1330, %v1326
  %v1332 = vmul.f32 1.0, %v1331
  %1334 = vrot.lane.b32.xlu0 %v1311, 64
  %v1335 = vpop.permute.xlu0 %1334
  %v1337 = vmul.f32 %v1332, %v1335
  %1339 = vrot.lane.b32.xlu0 %v1337, 64
  %v1340 = vpop.permute.xlu0 %1339
  %v1342 = vadd.f32 %v962, %v1340
  %v1343 = vtanh.pop %v1342
  %v1344 = vsub.f32 1.0, %v1332
  %1346 = vrot.lane.b32.xlu0 %v1343, 96
  %v1347 = vpop.permute.xlu0 %1346
  %v1349 = vmul.f32 %v1344, %v1347
  %v1350 = vmul.f32 %v1332, %v1287
  %v1351 = vadd.f32 %v1349, %v1350
  %1353 = vrot.lane.b32.xlu0 %v1351, 96
  %v1354 = vpop.permute.xlu0 %1353
  %v1355 = vsel %vm410, %v1354, 0
  %1357 = vmatpush.msra.mxu0 0.0
  %1358 = vmatpush.msra.mxu0 0.0
  %1359 = vmatpush.msra.mxu0 0.0
  %1360 = vmatpush.msra.mxu0 0.0
  %1361 = vmatpush.msra.mxu0 0.0
  %1362 = vmatpush.msra.mxu0 0.0
  %1363 = vmatpush.msra.mxu0 0.0
  %1364 = vmatpush.msra.mxu0 0.0
  %1365 = vmatpush.msra.mxu0 0.0
  %1366 = vmatpush.msra.mxu0 0.0
  %1367 = vmatpush.msra.mxu0 0.0
  %1368 = vmatpush.msra.mxu0 0.0
  %1369 = vmatpush.msra.mxu0 %v188
  %1370 = vmatpush.msra.mxu0 %v187
  %1371 = vmatpush.msra.mxu0 %v186
  %1372 = vmatpush.msra.mxu0 %v185
  %1373 = vmatmul.f32.gmra.mxu0 %v1355
  %v1374 = vpop.f32.mrf.mxu0
  %v1375 = vadd.f32 %v971, %v1374
  %1376 = vdwg.mxu0
  %v1377 = vadd.f32 %v965, %v1375
  %v1378 = vxor.u32 %v1377, 2147483648
  %v1379 = vmul.f32 %v1378, 1.442695
  %v1380 = vpow.pop %v1379
  %v1381 = vadd.f32 %v1380, 1.0
  %v1382 = vrcp.pop %v1381
  %v1383 = vmul.f32 %v1381, %v1382
  %v1384 = vsub.f32 1.0, %v1383
  %v1385 = vmul.f32 %v1382, %v1384
  %v1386 = vadd.f32 %v1382, %v1385
  %vm1387 = vweird.f32 %v1381
  %vm1388 = vweird.f32 %v1382
  %vm1389 = vmor %vm1387, %vm1388
  %v1390 = vsel %vm1389, %v1382, %v1386
  %v1391 = vand.u32 2147483647, %v1381
  %vm1392 = vcmp.eq.f32.partialorder %v1391, 8.507059e+37
  %v1393 = vand.u32 %v1381, 2147483648
  %v1394 = vor.u32 1.1754944e-38, %v1393
  %v1395 = vsel %vm1392, %v1394, %v1390
  %v1396 = vmul.f32 1.0, %v1395
  %1398 = vrot.lane.b32.xlu0 %v1375, 64
  %v1399 = vpop.permute.xlu0 %1398
  %v1401 = vmul.f32 %v1396, %v1399
  %1403 = vrot.lane.b32.xlu0 %v1401, 64
  %v1404 = vpop.permute.xlu0 %1403
  %v1406 = vadd.f32 %v965, %v1404
  %v1407 = vtanh.pop %v1406
  %v1408 = vsub.f32 1.0, %v1396
  %1410 = vrot.lane.b32.xlu0 %v1407, 96
  %v1411 = vpop.permute.xlu0 %1410
  %v1413 = vmul.f32 %v1408, %v1411
  %v1414 = vmul.f32 %v1396, %v1351
  %v1415 = vadd.f32 %v1413, %v1414
  %1417 = vrot.lane.b32.xlu0 %v1415, 96
  %v1418 = vpop.permute.xlu0 %1417
  %v1419 = vsel %vm410, %v1418, 0
  %1421 = vmatpush.msra.mxu0 0.0
  %1422 = vmatpush.msra.mxu0 0.0
  %1423 = vmatpush.msra.mxu0 0.0
  %1424 = vmatpush.msra.mxu0 0.0
  %1425 = vmatpush.msra.mxu0 0.0
  %1426 = vmatpush.msra.mxu0 0.0
  %1427 = vmatpush.msra.mxu0 0.0
  %1428 = vmatpush.msra.mxu0 0.0
  %1429 = vmatpush.msra.mxu0 0.0
  %1430 = vmatpush.msra.mxu0 0.0
  %1431 = vmatpush.msra.mxu0 0.0
  %1432 = vmatpush.msra.mxu0 0.0
  %1433 = vmatpush.msra.mxu0 %v188
  %1434 = vmatpush.msra.mxu0 %v187
  %1435 = vmatpush.msra.mxu0 %v186
  %1436 = vmatpush.msra.mxu0 %v185
  %1437 = vmatmul.f32.gmra.mxu0 %v1419
  %v1438 = vpop.f32.mrf.mxu0
  %v1439 = vadd.f32 %v971, %v1438
  %1440 = vdwg.mxu0
  %v1441 = vadd.f32 %v968, %v1439
  %v1442 = vxor.u32 %v1441, 2147483648
  %v1443 = vmul.f32 %v1442, 1.442695
  %v1444 = vpow.pop %v1443
  %v1445 = vadd.f32 %v1444, 1.0
  %v1446 = vrcp.pop %v1445
  %v1447 = vmul.f32 %v1445, %v1446
  %v1448 = vsub.f32 1.0, %v1447
  %v1449 = vmul.f32 %v1446, %v1448
  %v1450 = vadd.f32 %v1446, %v1449
  %vm1451 = vweird.f32 %v1445
  %vm1452 = vweird.f32 %v1446
  %vm1453 = vmor %vm1451, %vm1452
  %v1454 = vsel %vm1453, %v1446, %v1450
  %v1455 = vand.u32 2147483647, %v1445
  %vm1456 = vcmp.eq.f32.partialorder %v1455, 8.507059e+37
  %v1457 = vand.u32 %v1445, 2147483648
  %v1458 = vor.u32 1.1754944e-38, %v1457
  %v1459 = vsel %vm1456, %v1458, %v1454
  %v1460 = vmul.f32 1.0, %v1459
  %1462 = vrot.lane.b32.xlu0 %v1439, 64
  %v1463 = vpop.permute.xlu0 %1462
  %v1465 = vmul.f32 %v1460, %v1463
  %1467 = vrot.lane.b32.xlu0 %v1465, 64
  %v1468 = vpop.permute.xlu0 %1467
  %v1470 = vadd.f32 %v968, %v1468
  %v1471 = vtanh.pop %v1470
  %v1472 = vsub.f32 1.0, %v1460
  %1474 = vrot.lane.b32.xlu0 %v1471, 96
  %v1475 = vpop.permute.xlu0 %1474
  %v1477 = vmul.f32 %v1472, %v1475
  %v1478 = vmul.f32 %v1460, %v1415
  %v1479 = vadd.f32 %v1477, %v1478
  %v1481 = vperm.slane %v195, 0
  %1484 = vrot.lane.b32.xlu0 %v1479, 96
  %v1485 = vpop.permute.xlu0 %1484
  %v1486 = vsel %vm410, %v1485, 0
  %1488 = vmatpush.msra.mxu0 0.0
  %1489 = vmatpush.msra.mxu0 0.0
  %1490 = vmatpush.msra.mxu0 0.0
  %1491 = vmatpush.msra.mxu0 0.0
  %1492 = vmatpush.msra.mxu0 0.0
  %1493 = vmatpush.msra.mxu0 0.0
  %1494 = vmatpush.msra.mxu0 0.0
  %1495 = vmatpush.msra.mxu0 0.0
  %1496 = vmatpush.msra.mxu0 0.0
  %1497 = vmatpush.msra.mxu0 0.0
  %1498 = vmatpush.msra.mxu0 0.0
  %1499 = vmatpush.msra.mxu0 0.0
  %1500 = vmatpush.msra.mxu0 %v194
  %1501 = vmatpush.msra.mxu0 %v193
  %1502 = vmatpush.msra.mxu0 %v192
  %1503 = vmatpush.msra.mxu0 %v191
  %1504 = vmatmul.f32.gmra.mxu0 %v1486
  %v1505 = vpop.f32.mrf.mxu0
  %v1506 = vadd.f32 %v1481, %v1505
  %1507 = vdwg.mxu0
  %v1509 = vperm.slane %v200, 0
  %1511 = vmatpush.msra.mxu0 0.0
  %1512 = vmatpush.msra.mxu0 0.0
  %1513 = vmatpush.msra.mxu0 0.0
  %1514 = vmatpush.msra.mxu0 0.0
  %1515 = vmatpush.msra.mxu0 0.0
  %1516 = vmatpush.msra.mxu0 0.0
  %1517 = vmatpush.msra.mxu0 0.0
  %1518 = vmatpush.msra.mxu0 0.0
  %1519 = vmatpush.msra.mxu0 0.0
  %1520 = vmatpush.msra.mxu0 0.0
  %1521 = vmatpush.msra.mxu0 0.0
  %1522 = vmatpush.msra.mxu0 0.0
  %1523 = vmatpush.msra.mxu0 %v199
  %1524 = vmatpush.msra.mxu0 %v198
  %1525 = vmatpush.msra.mxu0 %v197
  %1526 = vmatpush.msra.mxu0 %v196
  %1527 = vmatmul.f32.gmra.mxu0 %v1486
  %v1528 = vpop.f32.mrf.mxu0
  %v1529 = vadd.f32 %v1509, %v1528
  %1530 = vdwg.mxu0
  %vm1531 = vcmask 31744
  %v1532 = vsel %vm1531, %v201, 0.0
  %v1533 = vrot.slane %v1532, 4
  %v1534 = vadd.f32 %v1532, %v1533
  %v1535 = vrot.slane %v1534, 2
  %v1536 = vadd.f32 %v1534, %v1535
  %v1537 = vrot.slane %v1536, 1
  %v1538 = vadd.f32 %v1536, %v1537
  %v1539 = vmul.f32 %v201, %v201
  %v1540 = vsel %vm1531, %v1539, 0.0
  %v1541 = vrot.slane %v1540, 4
  %v1542 = vadd.f32 %v1540, %v1541
  %v1543 = vrot.slane %v1542, 2
  %v1544 = vadd.f32 %v1542, %v1543
  %v1545 = vrot.slane %v1544, 1
  %v1546 = vadd.f32 %v1544, %v1545
  %v1548 = vsel %vm410, %v1506, 0
  %1550 = vmatpush.msra.mxu0 0.0
  %1551 = vmatpush.msra.mxu0 0.0
  %1552 = vmatpush.msra.mxu0 0.0
  %1553 = vmatpush.msra.mxu0 0.0
  %1554 = vmatpush.msra.mxu0 0.0
  %1555 = vmatpush.msra.mxu0 0.0
  %1556 = vmatpush.msra.mxu0 0.0
  %1557 = vmatpush.msra.mxu0 0.0
  %1558 = vmatpush.msra.mxu0 0.0
  %1559 = vmatpush.msra.mxu0 0.0
  %1560 = vmatpush.msra.mxu0 0.0
  %1561 = vmatpush.msra.mxu0 0.0
  %1562 = vmatpush.msra.mxu0 %v205
  %1563 = vmatpush.msra.mxu0 %v204
  %1564 = vmatpush.msra.mxu0 %v203
  %1565 = vmatpush.msra.mxu0 %v202
  %1566 = vmatmul.f32.gmra.mxu0 %v1548
  %v1567 = vpop.f32.mrf.mxu0
  %v1568 = vadd.f32 0.0, %v1567
  %1569 = vdwg.mxu0
  %v1570 = vmul.f32 %v1506, %v1506
  %v1572 = vsel %vm410, %v1570, 0
  %1574 = vmatpush.msra.mxu0 0.0
  %1575 = vmatpush.msra.mxu0 0.0
  %1576 = vmatpush.msra.mxu0 0.0
  %1577 = vmatpush.msra.mxu0 0.0
  %1578 = vmatpush.msra.mxu0 0.0
  %1579 = vmatpush.msra.mxu0 0.0
  %1580 = vmatpush.msra.mxu0 0.0
  %1581 = vmatpush.msra.mxu0 0.0
  %1582 = vmatpush.msra.mxu0 0.0
  %1583 = vmatpush.msra.mxu0 0.0
  %1584 = vmatpush.msra.mxu0 0.0
  %1585 = vmatpush.msra.mxu0 0.0
  %1586 = vmatpush.msra.mxu0 %v205
  %1587 = vmatpush.msra.mxu0 %v204
  %1588 = vmatpush.msra.mxu0 %v203
  %1589 = vmatpush.msra.mxu0 %v202
  %1590 = vmatmul.f32.gmra.mxu0 %v1572
  %v1591 = vpop.f32.mrf.mxu0
  %v1592 = vadd.f32 0.0, %v1591
  %1593 = vdwg.mxu0
  %v1594 = vrsqrt.pop %v1592
  %v1595 = vmul.f32 %v1594, %v1592
  %v1596 = vmul.f32 %v1595, %v1594
  %v1597 = vmul.f32 0.5, %v1596
  %v1598 = vsub.f32 1.5, %v1597
  %v1599 = vmul.f32 %v1594, %v1598
  %v1600 = vmul.f32 %v1592, %v1599
  %vm1601 = vcmp.eq.f32.partialorder %v1592, inf
  %v1602 = vsel %vm1601, %v1592, %v1600
  %vm1603 = vcmp.eq.f32.partialorder %v1592, 0.0
  %v1604 = vand.u32 %v1592, 2147483648
  %v1605 = vsel %vm1603, %v1604, %v1602
  %v1606 = vmul.f32 %v1568, %v1538
  %v1607 = vmax.f32 %v1606, 1e-06
  %v1608 = vmul.f32 %v1605, %v1546
  %v1609 = vmax.f32 %v1608, 1e-06
  %v1610 = vrcp.pop %v1609
  %v1611 = vmul.f32 %v1609, %v1610
  %v1612 = vsub.f32 1.0, %v1611
  %v1613 = vmul.f32 %v1610, %v1612
  %v1614 = vadd.f32 %v1610, %v1613
  %vm1615 = vweird.f32 %v1609
  %vm1616 = vweird.f32 %v1610
  %vm1617 = vmor %vm1615, %vm1616
  %v1618 = vsel %vm1617, %v1610, %v1614
  %v1619 = vand.u32 2147483647, %v1609
  %vm1620 = vcmp.eq.f32.partialorder %v1619, 8.507059e+37
  %v1621 = vand.u32 %v1609, 2147483648
  %v1622 = vor.u32 1.1754944e-38, %v1621
  %v1623 = vsel %vm1620, %v1622, %v1618
  %v1624 = vmul.f32 %v1607, %v1623
  %v1626 = vsel %vm1531, %v1624, 0
  %vm1628 = vcmask 1043456
  %v1630 = vsel %vm1628, %v206, 0
  %1632 = vmatpush.msra.mxu0 0.0
  %1633 = vmatpush.msra.mxu0 0.0
  %1634 = vmatpush.msra.mxu0 0.0
  %1635 = vmatpush.msra.mxu0 0.0
  %1636 = vmatpush.msra.mxu0 0.0
  %1637 = vmatpush.msra.mxu0 0.0
  %1638 = vmatpush.msra.mxu0 0.0
  %1639 = vmatpush.msra.mxu0 0.0
  %1640 = vmatpush.msra.mxu0 0.0
  %1641 = vmatpush.msra.mxu0 0.0
  %1642 = vmatpush.msra.mxu0 0.0
  %1643 = vmatpush.msra.mxu0 0.0
  %1644 = vmatpush.msra.mxu0 0.0
  %1645 = vmatpush.msra.mxu0 0.0
  %1646 = vmatpush.msra.mxu0 0.0
  %1647 = vmatpush.msra.mxu0 %v1630
  %1648 = vmatmul.f32.gmra.mxu0 %v1626
  %v1649 = vpop.f32.mrf.mxu0
  %v1650 = vadd.f32 0.0, %v1649
  %1651 = vdwg.mxu0
  %v1652 = vmul.f32 %v1650, %v1529
  %v1653 = vsel %vm410, %v1652, 0.0
  %v1654 = vrot.slane %v1653, 4
  %v1655 = vadd.f32 %v1653, %v1654
  %v1656 = vrot.slane %v1655, 2
  %v1657 = vadd.f32 %v1655, %v1656
  %v1658 = vrot.slane %v1657, 1
  %v1659 = vadd.f32 %v1657, %v1658
  %v1661 = vsel %vm410, %v1659, 0
  %1663 = vmatpush.msra.mxu0 0.0
  %1664 = vmatpush.msra.mxu0 0.0
  %1665 = vmatpush.msra.mxu0 0.0
  %1666 = vmatpush.msra.mxu0 0.0
  %1667 = vmatpush.msra.mxu0 0.0
  %1668 = vmatpush.msra.mxu0 0.0
  %1669 = vmatpush.msra.mxu0 0.0
  %1670 = vmatpush.msra.mxu0 0.0
  %1671 = vmatpush.msra.mxu0 0.0
  %1672 = vmatpush.msra.mxu0 0.0
  %1673 = vmatpush.msra.mxu0 0.0
  %1674 = vmatpush.msra.mxu0 0.0
  %1675 = vmatpush.msra.mxu0 %v210
  %1676 = vmatpush.msra.mxu0 %v209
  %1677 = vmatpush.msra.mxu0 %v208
  %1678 = vmatpush.msra.mxu0 %v207
  %1679 = vmatmul.f32.gmra.mxu0 %v1661
  %v1680 = vpop.f32.mrf.mxu0
  %v1681 = vadd.f32 %v211, %v1680
  %1682 = vdwg.mxu0
  %1683 = vmatpush.msra.mxu0 0.0
  %1684 = vmatpush.msra.mxu0 0.0
  %1685 = vmatpush.msra.mxu0 0.0
  %1686 = vmatpush.msra.mxu0 0.0
  %1687 = vmatpush.msra.mxu0 0.0
  %1688 = vmatpush.msra.mxu0 0.0
  %1689 = vmatpush.msra.mxu0 0.0
  %1690 = vmatpush.msra.mxu0 0.0
  %1691 = vmatpush.msra.mxu0 0.0
  %1692 = vmatpush.msra.mxu0 0.0
  %1693 = vmatpush.msra.mxu0 0.0
  %1694 = vmatpush.msra.mxu0 0.0
  %1695 = vmatpush.msra.mxu0 %v215
  %1696 = vmatpush.msra.mxu0 %v214
  %1697 = vmatpush.msra.mxu0 %v213
  %1698 = vmatpush.msra.mxu0 %v212
  %1699 = vmatmul.f32.gmra.mxu0 %v1661
  %v1700 = vpop.f32.mrf.mxu0
  %v1701 = vadd.f32 %v216, %v1700
  %1702 = vdwg.mxu0
  %v1703 = vand.u32 2147483647, %v1701
  %v1704 = vsub.f32 0.0, %v1703
  %v1705 = vmul.f32 %v1704, 1.442695
  %v1706 = vpow.pop %v1705
  %v1707 = vadd.f32 %v1706, 1.0
  %v1708 = vlog2.pop %v1707
  %v1709 = vmul.f32 %v1708, 0.6931472
  %v1710 = vadd.f32 %v1703, %v1709
  %v1712 = vperm.slane %v221, 0
  %1714 = vmatpush.msra.mxu0 0.0
  %1715 = vmatpush.msra.mxu0 0.0
  %1716 = vmatpush.msra.mxu0 0.0
  %1717 = vmatpush.msra.mxu0 0.0
  %1718 = vmatpush.msra.mxu0 0.0
  %1719 = vmatpush.msra.mxu0 0.0
  %1720 = vmatpush.msra.mxu0 0.0
  %1721 = vmatpush.msra.mxu0 0.0
  %1722 = vmatpush.msra.mxu0 0.0
  %1723 = vmatpush.msra.mxu0 0.0
  %1724 = vmatpush.msra.mxu0 0.0
  %1725 = vmatpush.msra.mxu0 0.0
  %1726 = vmatpush.msra.mxu0 %v220
  %1727 = vmatpush.msra.mxu0 %v219
  %1728 = vmatpush.msra.mxu0 %v218
  %1729 = vmatpush.msra.mxu0 %v217
  %1730 = vmatmul.f32.gmra.mxu0 %v1486
  %v1731 = vpop.f32.mrf.mxu0
  %v1732 = vadd.f32 %v1712, %v1731
  %1733 = vdwg.mxu0
  %vm1734 = vcmask 64512
  %v1735 = vsel %vm1734, %v1732, -inf
  %v1736 = vrot.slane %v1735, 4
  %v1737 = vmax.f32 %v1735, %v1736
  %v1738 = vrot.slane %v1737, 2
  %v1739 = vmax.f32 %v1737, %v1738
  %v1740 = vrot.slane %v1739, 1
  %v1741 = vmax.f32 %v1739, %v1740
  %v1742 = vsub.f32 %v1732, %v1741
  %v1743 = vmul.f32 %v1742, 1.442695
  %v1744 = vpow.pop %v1743
  %v1745 = vsel %vm1734, %v1744, 0.0
  %v1746 = vrot.slane %v1745, 4
  %v1747 = vadd.f32 %v1745, %v1746
  %v1748 = vrot.slane %v1747, 2
  %v1749 = vadd.f32 %v1747, %v1748
  %v1750 = vrot.slane %v1749, 1
  %v1751 = vadd.f32 %v1749, %v1750
  %v1752 = vrcp.pop %v1751
  %v1753 = vmul.f32 %v1751, %v1752
  %v1754 = vsub.f32 1.0, %v1753
  %v1755 = vmul.f32 %v1752, %v1754
  %v1756 = vadd.f32 %v1752, %v1755
  %vm1757 = vweird.f32 %v1751
  %vm1758 = vweird.f32 %v1752
  %vm1759 = vmor %vm1757, %vm1758
  %v1760 = vsel %vm1759, %v1752, %v1756
  %v1761 = vand.u32 2147483647, %v1751
  %vm1762 = vcmp.eq.f32.partialorder %v1761, 8.507059e+37
  %v1763 = vand.u32 %v1751, 2147483648
  %v1764 = vor.u32 1.1754944e-38, %v1763
  %v1765 = vsel %vm1762, %v1764, %v1760
  %v1766 = vmul.f32 %v1744, %v1765
  %1768 = vset.pattern.permute.xlu0 0
  %1769 = vperm.xlu0 %1768, %v190
  %v1770 = vpop.permute.xlu0 %1769
  %v1772 = vmul.f32 %v1766, %v1770
  %v1773 = vsel %vm1734, %v1772, 0.0
  %v1774 = vrot.slane %v1773, 4
  %v1775 = vadd.f32 %v1773, %v1774
  %v1776 = vrot.slane %v1775, 2
  %v1777 = vadd.f32 %v1775, %v1776
  %v1778 = vrot.slane %v1777, 1
  %v1779 = vadd.f32 %v1777, %v1778
  %v1781 = vsel %vm1734, %v1779, 0
  %1783 = vmatpush.msra.mxu0 0.0
  %1784 = vmatpush.msra.mxu0 0.0
  %1785 = vmatpush.msra.mxu0 0.0
  %1786 = vmatpush.msra.mxu0 0.0
  %1787 = vmatpush.msra.mxu0 0.0
  %1788 = vmatpush.msra.mxu0 0.0
  %1789 = vmatpush.msra.mxu0 0.0
  %1790 = vmatpush.msra.mxu0 0.0
  %1791 = vmatpush.msra.mxu0 0.0
  %1792 = vmatpush.msra.mxu0 0.0
  %1793 = vmatpush.msra.mxu0 0.0
  %1794 = vmatpush.msra.mxu0 0.0
  %1795 = vmatpush.msra.mxu0 0.0
  %1796 = vmatpush.msra.mxu0 0.0
  %1797 = vmatpush.msra.mxu0 0.0
  %1798 = vmatpush.msra.mxu0 %v222
  %1799 = vmatmul.f32.gmra.mxu0 %v1781
  %v1800 = vpop.f32.mrf.mxu0
  %v1801 = vadd.f32 %v223, %v1800
  %1802 = vdwg.mxu0
  %1803 = vmatpush.msra.mxu0 0.0
  %1804 = vmatpush.msra.mxu0 0.0
  %1805 = vmatpush.msra.mxu0 0.0
  %1806 = vmatpush.msra.mxu0 0.0
  %1807 = vmatpush.msra.mxu0 0.0
  %1808 = vmatpush.msra.mxu0 0.0
  %1809 = vmatpush.msra.mxu0 0.0
  %1810 = vmatpush.msra.mxu0 0.0
  %1811 = vmatpush.msra.mxu0 0.0
  %1812 = vmatpush.msra.mxu0 0.0
  %1813 = vmatpush.msra.mxu0 0.0
  %1814 = vmatpush.msra.mxu0 0.0
  %1815 = vmatpush.msra.mxu0 0.0
  %1816 = vmatpush.msra.mxu0 0.0
  %1817 = vmatpush.msra.mxu0 0.0
  %1818 = vmatpush.msra.mxu0 %v224
  %1819 = vmatmul.f32.gmra.mxu0 %v1781
  %v1820 = vpop.f32.mrf.mxu0
  %v1821 = vadd.f32 %v225, %v1820
  %1822 = vdwg.mxu0
  %v1823 = vand.u32 2147483647, %v1821
  %v1824 = vsub.f32 0.0, %v1823
  %v1825 = vmul.f32 %v1824, 1.442695
  %v1826 = vpow.pop %v1825
  %v1827 = vadd.f32 %v1826, 1.0
  %v1828 = vlog2.pop %v1827
  %v1829 = vmul.f32 %v1828, 0.6931472
  %v1830 = vadd.f32 %v1823, %v1829
  %v1832 = vperm.slane %v230, 0
  %1834 = vmatpush.msra.mxu0 0.0
  %1835 = vmatpush.msra.mxu0 0.0
  %1836 = vmatpush.msra.mxu0 0.0
  %1837 = vmatpush.msra.mxu0 0.0
  %1838 = vmatpush.msra.mxu0 0.0
  %1839 = vmatpush.msra.mxu0 0.0
  %1840 = vmatpush.msra.mxu0 0.0
  %1841 = vmatpush.msra.mxu0 0.0
  %1842 = vmatpush.msra.mxu0 0.0
  %1843 = vmatpush.msra.mxu0 0.0
  %1844 = vmatpush.msra.mxu0 0.0
  %1845 = vmatpush.msra.mxu0 0.0
  %1846 = vmatpush.msra.mxu0 %v229
  %1847 = vmatpush.msra.mxu0 %v228
  %1848 = vmatpush.msra.mxu0 %v227
  %1849 = vmatpush.msra.mxu0 %v226
  %1850 = vmatmul.f32.gmra.mxu0 %v1486
  %v1851 = vpop.f32.mrf.mxu0
  %v1852 = vadd.f32 %v1832, %v1851
  %1853 = vdwg.mxu0
  %v1855 = vperm.slane %v235, 0
  %1857 = vmatpush.msra.mxu0 0.0
  %1858 = vmatpush.msra.mxu0 0.0
  %1859 = vmatpush.msra.mxu0 0.0
  %1860 = vmatpush.msra.mxu0 0.0
  %1861 = vmatpush.msra.mxu0 0.0
  %1862 = vmatpush.msra.mxu0 0.0
  %1863 = vmatpush.msra.mxu0 0.0
  %1864 = vmatpush.msra.mxu0 0.0
  %1865 = vmatpush.msra.mxu0 0.0
  %1866 = vmatpush.msra.mxu0 0.0
  %1867 = vmatpush.msra.mxu0 0.0
  %1868 = vmatpush.msra.mxu0 0.0
  %1869 = vmatpush.msra.mxu0 %v234
  %1870 = vmatpush.msra.mxu0 %v233
  %1871 = vmatpush.msra.mxu0 %v232
  %1872 = vmatpush.msra.mxu0 %v231
  %1873 = vmatmul.f32.gmra.mxu0 %v1486
  %v1874 = vpop.f32.mrf.mxu0
  %v1875 = vadd.f32 %v1855, %v1874
  %1876 = vdwg.mxu0
  %vm1877 = vcmp.ge.f32.partialorder %v1875, 0.0
  %v1878 = vmul.f32 %v1875, 0.01
  %v1879 = vsel %vm1877, %v1875, %v1878
  %v1881 = vperm.slane %v240, 0
  %v1884 = vsel %vm410, %v1879, 0
  %1886 = vmatpush.msra.mxu0 0.0
  %1887 = vmatpush.msra.mxu0 0.0
  %1888 = vmatpush.msra.mxu0 0.0
  %1889 = vmatpush.msra.mxu0 0.0
  %1890 = vmatpush.msra.mxu0 0.0
  %1891 = vmatpush.msra.mxu0 0.0
  %1892 = vmatpush.msra.mxu0 0.0
  %1893 = vmatpush.msra.mxu0 0.0
  %1894 = vmatpush.msra.mxu0 0.0
  %1895 = vmatpush.msra.mxu0 0.0
  %1896 = vmatpush.msra.mxu0 0.0
  %1897 = vmatpush.msra.mxu0 0.0
  %1898 = vmatpush.msra.mxu0 %v239
  %1899 = vmatpush.msra.mxu0 %v238
  %1900 = vmatpush.msra.mxu0 %v237
  %1901 = vmatpush.msra.mxu0 %v236
  %1902 = vmatmul.f32.gmra.mxu0 %v1884
  %v1903 = vpop.f32.mrf.mxu0
  %v1904 = vadd.f32 %v1881, %v1903
  %1905 = vdwg.mxu0
  %v1907 = vperm.slane %v245, 0
  %1909 = vmatpush.msra.mxu0 0.0
  %1910 = vmatpush.msra.mxu0 0.0
  %1911 = vmatpush.msra.mxu0 0.0
  %1912 = vmatpush.msra.mxu0 0.0
  %1913 = vmatpush.msra.mxu0 0.0
  %1914 = vmatpush.msra.mxu0 0.0
  %1915 = vmatpush.msra.mxu0 0.0
  %1916 = vmatpush.msra.mxu0 0.0
  %1917 = vmatpush.msra.mxu0 0.0
  %1918 = vmatpush.msra.mxu0 0.0
  %1919 = vmatpush.msra.mxu0 0.0
  %1920 = vmatpush.msra.mxu0 0.0
  %1921 = vmatpush.msra.mxu0 %v244
  %1922 = vmatpush.msra.mxu0 %v243
  %1923 = vmatpush.msra.mxu0 %v242
  %1924 = vmatpush.msra.mxu0 %v241
  %1925 = vmatmul.f32.gmra.mxu0 %v1884
  %v1926 = vpop.f32.mrf.mxu0
  %v1927 = vadd.f32 %v1907, %v1926
  %1928 = vdwg.mxu0
  %v1929 = vand.u32 2147483647, %v1927
  %v1930 = vsub.f32 0.0, %v1929
  %v1931 = vmul.f32 %v1930, 1.442695
  %v1932 = vpow.pop %v1931
  %v1933 = vadd.f32 %v1932, 1.0
  %v1934 = vlog2.pop %v1933
  %v1935 = vmul.f32 %v1934, 0.6931472
  %v1936 = vadd.f32 %v1929, %v1935
  %v1937 = vperm.slane %v1681, 0
  %v1938 = vmul.f32 %v1852, %v1937
  %v1939 = vsel %vm1531, %v1938, 0.0
  %1940 = vadd.xlane.f32.xlu0 %v1939
  %v1941 = vpop.xlane.xlu0 %1940
  %v1942 = vadd.f32 %v1904, %v1941
  %v1943 = vperm.slane %v1801, 0
  %v1944 = vmul.f32 %v1852, %v1943
  %v1945 = vsel %vm1531, %v1944, 0.0
  %1946 = vadd.xlane.f32.xlu0 %v1945
  %v1947 = vpop.xlane.xlu0 %1946
  %v1948 = vadd.f32 %v1904, %v1947
  %v1949 = vperm.slane %v1830, 0
  %v1950 = vmul.f32 %v1852, %v1949
  %v1951 = vsel %vm1531, %v1950, 0.0
  %1952 = vadd.xlane.f32.xlu0 %v1951
  %v1953 = vpop.xlane.xlu0 %1952
  %v1954 = vmul.f32 %v1936, %v1936
  %v1955 = vmul.f32 %v1953, %v1953
  %v1956 = vadd.f32 %v1954, %v1955
  %v1957 = vrsqrt.pop %v1956
  %v1958 = vmul.f32 %v1957, %v1956
  %v1959 = vmul.f32 %v1958, %v1957
  %v1960 = vmul.f32 0.5, %v1959
  %v1961 = vsub.f32 1.5, %v1960
  %v1962 = vmul.f32 %v1957, %v1961
  %v1963 = vmul.f32 %v1956, %v1962
  %vm1964 = vcmp.eq.f32.partialorder %v1956, inf
  %v1965 = vsel %vm1964, %v1956, %v1963
  %vm1966 = vcmp.eq.f32.partialorder %v1956, 0.0
  %v1967 = vand.u32 %v1956, 2147483648
  %v1968 = vsel %vm1966, %v1967, %v1965
  %v1969 = vlaneseq
  %v1970 = vshrl.u32 %v1969, 7
  %vm1971 = vcmp.eq.s32.totalorder %v1970, 0
  %vm1972 = vcmp.eq.s32.totalorder %v1970, 1
  %vm1973 = vcmp.eq.s32.totalorder %v1970, 2
  %v1974 = vperm.slane %v1710, 0
  %v1975 = vsel %vm1973, %v1937, %v1974
  %v1976 = vsel %vm1972, %v1949, %v1975
  %v1977 = vsel %vm1971, %v1943, %v1976
  %vm1978 = vcmask 27648
  %1979 = vst.msk [vmem:[%s75] sm:$0xf] %vm1978, %v1977
  %v1980 = vlaneseq
  %v1981 = vand.u32 %v1980, 127
  %vm1982 = vcmp.eq.s32.totalorder %v1981, 0
  %vm1983 = vcmp.eq.s32.totalorder %v1981, 1
  %1985 = vset.pattern.permute.xlu0 0
  %1986 = vperm.xlu0 %1985, %v1948
  %v1987 = vpop.permute.xlu0 %1986
  %1990 = vset.pattern.permute.xlu0 0
  %1991 = vperm.xlu0 %1990, %v1968
  %v1992 = vpop.permute.xlu0 %1991
  %v1994 = vsel %vm1983, %v1987, %v1992
  %1996 = vset.pattern.permute.xlu0 0
  %1997 = vperm.xlu0 %1996, %v1942
  %v1998 = vpop.permute.xlu0 %1997
  %v2000 = vsel %vm1982, %v1998, %v1994
  %vm2001 = vcmask 23552
  %2002 = vst.msk [vmem:[%s77] sm:$0xff] %vm2001, %v2000
  // Predicated region
  $region150: #{factor_vae_forward.1} parent=0 // pred_check
    _
  $region151: #{factor_vae_forward.1} parent=0 // pred_check_branch
    %2004 = sbr.rel (0) target = $region153
  $region152: #{factor_vae_forward.1} parent=0 // pred_region
    _
  $region153: #{factor_vae_forward.1} parent=0 // pred_fallthru
    _
  // Predicated region
  $region154: #{factor_vae_forward.1} parent=0 // pred_check
    _
  $region155: #{factor_vae_forward.1} parent=0 // pred_check_branch
    %2006 = sbr.rel (0) target = $region157
  $region156: #{factor_vae_forward.1} parent=0 // pred_region
    _
  $region157: #{factor_vae_forward.1} parent=0 // pred_fallthru
    _
  // Predicated region
  $region158: #{factor_vae_forward.1} parent=0 // pred_check
    _
  $region159: #{factor_vae_forward.1} parent=0 // pred_check_branch
    %2008 = sbr.rel (0) target = $region161
  $region160: #{factor_vae_forward.1} parent=0 // pred_region
    _
  $region161: #{factor_vae_forward.1} parent=0 // pred_fallthru
    _
  // Predicated region
  $region162: #{factor_vae_forward.1} parent=0 // pred_check
    _
  $region163: #{factor_vae_forward.1} parent=0 // pred_check_branch
    %2010 = sbr.rel (0) target = $region165
  $region164: #{factor_vae_forward.1} parent=0 // pred_region
    _
  $region165: #{factor_vae_forward.1} parent=0 // pred_fallthru
    _

</llo_original>
